<compile_context>
chip_gen: v7x
topology: tpu7x:2x2x1
jax: 0.10.0
libtpu: 0.0.40
codegen_flags: <defaults>
</compile_context>

<pallas_src>
import math

import jax
import jax.numpy as jnp
from jax.experimental import pallas as pl
from jax.experimental.pallas import tpu as pltpu

# Small synthetic hyperparameters consistent with GestureTransformer.__init__
BATCH = 8          # independent gesture sequences per call (grid axis)
SEQ = 8            # tokens per sequence (PyTorch "S" axis)
D_MODEL = 64       # input_dim / d_model (63 in the script, rounded to head-divisible)
NUM_HEADS = 4
HEAD_DIM = D_MODEL // NUM_HEADS
NUM_LAYERS = 2
DIM_FF = 128       # dim_feedforward (small; torch default would be 2048)
NUM_CLASSES = 8
OUT_PAD = 128      # class dim padded to a full 128-lane tile (unmasked stores)
LN_EPS = 1e-5

# Packed-slab geometry
W_A_COLS = 3 * D_MODEL + D_MODEL + DIM_FF    # [Wqkv^T | Wo^T | W1^T] -> 384
BIAS_ROWS = 8                                # bqkv, bo, b1, b2, n1w, n1b, n2w, n2b
BIAS_COLS = 3 * D_MODEL                      # widest bias row (in_proj) -> 192


def _layer_norm(x, w, b):
    # PyTorch nn.LayerNorm semantics (biased variance, eps inside rsqrt). f32.
    mean = jnp.mean(x, axis=-1, keepdims=True)
    centered = x - mean
    var = jnp.mean(centered * centered, axis=-1, keepdims=True)
    return centered * jax.lax.rsqrt(var + LN_EPS) * w + b


def _softmax(x):
    m = jnp.max(x, axis=-1, keepdims=True)
    e = jnp.exp(x - m)
    # EUP approximate reciprocal instead of a full VPU divide.
    return e * pl.reciprocal(jnp.sum(e, axis=-1, keepdims=True), approx=True)


def _gesture_transformer_kernel(x_ref, wa_ref, wb_ref, bias_ref,
                                fcw_ref, fcb_ref, out_ref):
    x = x_ref[0]                                   # (SEQ, D_MODEL) f32
    scale = 1.0 / math.sqrt(HEAD_DIM)

    for layer in range(NUM_LAYERS):                # static unroll over layers
        wa = wa_ref[layer]                         # (64, 384) bf16
        w2 = wb_ref[layer]                         # (128, 64) bf16
        bs = bias_ref[layer]                       # (8, 192) f32

        wqkv = wa[:, 0:3 * D_MODEL]                # (64, 192)
        wo = wa[:, 3 * D_MODEL:4 * D_MODEL]        # (64, 64)
        w1 = wa[:, 4 * D_MODEL:4 * D_MODEL + DIM_FF]   # (64, 128)

        bqkv = bs[0:1, :]                          # (1, 192)
        bo = bs[1:2, 0:D_MODEL]
        b1 = bs[2:3, 0:DIM_FF]
        b2 = bs[3:4, 0:D_MODEL]
        n1w = bs[4:5, 0:D_MODEL]
        n1b = bs[5:6, 0:D_MODEL]
        n2w = bs[6:7, 0:D_MODEL]
        n2b = bs[7:8, 0:D_MODEL]

        # ---- self-attention (fused QKV projection: one matmul) ----
        qkv = jnp.dot(x.astype(jnp.bfloat16), wqkv,
                      preferred_element_type=jnp.float32) + bqkv   # (8, 192) f32

        head_outs = []
        for h in range(NUM_HEADS):                 # static unroll over heads
            qh = qkv[:, h * HEAD_DIM:(h + 1) * HEAD_DIM]
            kh = qkv[:, D_MODEL + h * HEAD_DIM:D_MODEL + (h + 1) * HEAD_DIM]
            vh = qkv[:, 2 * D_MODEL + h * HEAD_DIM:2 * D_MODEL + (h + 1) * HEAD_DIM]
            scores = jnp.dot(qh, kh.T, preferred_element_type=jnp.float32) * scale
            probs = _softmax(scores)
            head_outs.append(jnp.dot(probs, vh, preferred_element_type=jnp.float32))

        attn_cat = jnp.concatenate(head_outs, axis=-1)             # (8, 64)
        attn = jnp.dot(attn_cat.astype(jnp.bfloat16), wo,
                       preferred_element_type=jnp.float32) + bo    # single out_proj dot

        # residual + post-norm (torch default norm_first=False); dropout = identity
        x = _layer_norm(x + attn, n1w, n1b)

        # ---- feed-forward (relu) + residual + post-norm ----
        h1 = jnp.maximum(jnp.dot(x.astype(jnp.bfloat16), w1,
                                 preferred_element_type=jnp.float32) + b1, 0.0)
        ff = jnp.dot(h1.astype(jnp.bfloat16), w2,
                     preferred_element_type=jnp.float32) + b2
        x = _layer_norm(x + ff, n2w, n2b)

    # x.mean(dim=1) over the size-1 batch axis is the identity -> final Linear.
    logits = jnp.dot(x.astype(jnp.bfloat16), fcw_ref[...],
                     preferred_element_type=jnp.float32) + fcb_ref[...]   # (8, 128)
    out_ref[0] = logits.astype(out_ref.dtype)


def gesture_transformer_forward(x, params):
    """x: (B, SEQ, D_MODEL) f32. Returns (B, SEQ, NUM_CLASSES) f32 logits."""
    w_a, w_b, bias, fc_w, fc_b = params
    batch = x.shape[0]

    out = pl.pallas_call(
        _gesture_transformer_kernel,
        out_shape=jax.ShapeDtypeStruct((batch, SEQ, OUT_PAD), jnp.float32),
        grid_spec=pltpu.PrefetchScalarGridSpec(
            num_scalar_prefetch=0,
            grid=(batch,),
            in_specs=[
                # per-sequence activation block
                pl.BlockSpec((1, SEQ, D_MODEL), lambda b: (b, 0, 0)),
                # weight / bias slabs: constant index_map -> VMEM-resident
                pl.BlockSpec((NUM_LAYERS, D_MODEL, W_A_COLS), lambda b: (0, 0, 0)),
                pl.BlockSpec((NUM_LAYERS, DIM_FF, D_MODEL), lambda b: (0, 0, 0)),
                pl.BlockSpec((NUM_LAYERS, BIAS_ROWS, BIAS_COLS), lambda b: (0, 0, 0)),
                pl.BlockSpec((D_MODEL, OUT_PAD), lambda b: (0, 0)),
                pl.BlockSpec((1, OUT_PAD), lambda b: (0, 0)),
            ],
            out_specs=pl.BlockSpec((1, SEQ, OUT_PAD), lambda b: (b, 0, 0)),
        ),
        compiler_params=pltpu.CompilerParams(
            dimension_semantics=("parallel",)),   # shard batch across TCs on v7x
    )(x, w_a, w_b, bias, fc_w, fc_b)

    return out[..., :NUM_CLASSES]


def init_params(key):
    """Deterministic synthetic parameters, packed into lane-dense slabs.

    Weights are pre-transposed for `x @ W` (== x @ W_torch.T) and stored bf16;
    biases / LayerNorm params are packed into an f32 (BIAS_ROWS, BIAS_COLS)
    slab per layer.
    """
    def dense(k, shape, scale=0.05):
        return scale * jax.random.normal(k, shape, dtype=jnp.float32)

    def pad_row(v, width=BIAS_COLS):
        return jnp.pad(v, (0, width - v.shape[0]))

    keys = iter(jax.random.split(key, NUM_LAYERS * 8 + 2))

    w_a_layers, w_b_layers, bias_layers = [], [], []
    for _ in range(NUM_LAYERS):
        wqkv = dense(next(keys), (D_MODEL, 3 * D_MODEL))   # [Wq^T | Wk^T | Wv^T]
        bqkv = dense(next(keys), (3 * D_MODEL,))           # in_proj bias
        wo = dense(next(keys), (D_MODEL, D_MODEL))         # out_proj.weight^T
        bo = dense(next(keys), (D_MODEL,))
        w1 = dense(next(keys), (D_MODEL, DIM_FF))          # linear1.weight^T
        b1 = dense(next(keys), (DIM_FF,))
        w2 = dense(next(keys), (DIM_FF, D_MODEL))          # linear2.weight^T
        b2 = dense(next(keys), (D_MODEL,))
        n1w = jnp.ones((D_MODEL,), jnp.float32)
        n1b = jnp.zeros((D_MODEL,), jnp.float32)
        n2w = jnp.ones((D_MODEL,), jnp.float32)
        n2b = jnp.zeros((D_MODEL,), jnp.float32)

        w_a_layers.append(jnp.concatenate([wqkv, wo, w1], axis=1))   # (64, 384)
        w_b_layers.append(w2)                                        # (128, 64)
        bias_layers.append(jnp.stack([
            bqkv, pad_row(bo), pad_row(b1), pad_row(b2),
            pad_row(n1w), pad_row(n1b), pad_row(n2w), pad_row(n2b),
        ]))                                                          # (8, 192)

    fc_w = dense(next(keys), (D_MODEL, NUM_CLASSES))                 # fc.weight^T
    fc_b = dense(next(keys), (NUM_CLASSES,))                         # fc.bias
    fc_w_pad = jnp.zeros((D_MODEL, OUT_PAD), jnp.float32).at[:, :NUM_CLASSES].set(fc_w)
    fc_b_pad = jnp.zeros((1, OUT_PAD), jnp.float32).at[:, :NUM_CLASSES].set(fc_b)

    return (
        jnp.stack(w_a_layers).astype(jnp.bfloat16),   # (L, 64, 384)
        jnp.stack(w_b_layers).astype(jnp.bfloat16),   # (L, 128, 64)
        jnp.stack(bias_layers),                       # (L, 8, 192) f32
        fc_w_pad.astype(jnp.bfloat16),                # (64, 128)
        fc_b_pad,                                     # (1, 128) f32
    )


if __name__ == "__main__":
    key = jax.random.PRNGKey(0)
    pkey, xkey = jax.random.split(key)
    params = init_params(pkey)
    x = jax.random.normal(xkey, (BATCH, SEQ, D_MODEL), dtype=jnp.float32)

    out = gesture_transformer_forward(x, params)
    out = jax.block_until_ready(out)
    assert out.shape == (BATCH, SEQ, NUM_CLASSES), out.shape
    assert jnp.all(jnp.isfinite(out))
    print("KERNEL_OK")
</pallas_src>

<mosaic_0001>
module attributes {stable_mosaic.version = 11 : i64} {
  func.func @_gesture_transformer_kernel(%arg0: i32, %arg1: memref<1x8x64xf32, #tpu.memory_space<vmem>>, %arg2: memref<2x64x384xbf16, #tpu.memory_space<vmem>>, %arg3: memref<2x128x64xbf16, #tpu.memory_space<vmem>>, %arg4: memref<2x8x192xf32, #tpu.memory_space<vmem>>, %arg5: memref<64x128xbf16, #tpu.memory_space<vmem>>, %arg6: memref<1x128xf32, #tpu.memory_space<vmem>>, %arg7: memref<1x8x128xf32, #tpu.memory_space<vmem>>) attributes {dimension_semantics = [#tpu.dimension_semantics<parallel>], iteration_bounds = array<i64: 8>, scalar_prefetch = 0 : i64, scratch_operands = 0 : i64, tpu.core_type = #tpu.core_type<tc>, window_params = [{transform_indices = @transform_0, window_bounds = array<i64: 1, 8, 64>}, {pipeline_mode = #tpu.pipeline_mode<synchronous>, transform_indices = @transform_1, window_bounds = array<i64: 2, 64, 384>}, {pipeline_mode = #tpu.pipeline_mode<synchronous>, transform_indices = @transform_2, window_bounds = array<i64: 2, 128, 64>}, {pipeline_mode = #tpu.pipeline_mode<synchronous>, transform_indices = @transform_3, window_bounds = array<i64: 2, 8, 192>}, {pipeline_mode = #tpu.pipeline_mode<synchronous>, transform_indices = @transform_4, window_bounds = array<i64: 64, 128>}, {pipeline_mode = #tpu.pipeline_mode<synchronous>, transform_indices = @transform_5, window_bounds = array<i64: 1, 128>}, {transform_indices = @transform_6, window_bounds = array<i64: 1, 8, 128>}]} {
    %c0 = arith.constant 0 : index
    %c0_0 = arith.constant 0 : index
    %c0_1 = arith.constant 0 : index
    %0 = vector.load %arg1[%c0, %c0_0, %c0_1] : memref<1x8x64xf32, #tpu.memory_space<vmem>>, vector<1x8x64xf32>
    %1 = vector.shape_cast %0 : vector<1x8x64xf32> to vector<8x64xf32>
    %c0_2 = arith.constant 0 : index
    %c0_3 = arith.constant 0 : index
    %c0_4 = arith.constant 0 : index
    %2 = vector.load %arg2[%c0_2, %c0_3, %c0_4] : memref<2x64x384xbf16, #tpu.memory_space<vmem>>, vector<1x64x384xbf16>
    %3 = vector.shape_cast %2 : vector<1x64x384xbf16> to vector<64x384xbf16>
    %c0_5 = arith.constant 0 : index
    %c0_6 = arith.constant 0 : index
    %c0_7 = arith.constant 0 : index
    %4 = vector.load %arg3[%c0_5, %c0_6, %c0_7] : memref<2x128x64xbf16, #tpu.memory_space<vmem>>, vector<1x128x64xbf16>
    %5 = vector.shape_cast %4 : vector<1x128x64xbf16> to vector<128x64xbf16>
    %c0_8 = arith.constant 0 : index
    %c0_9 = arith.constant 0 : index
    %c0_10 = arith.constant 0 : index
    %6 = vector.load %arg4[%c0_8, %c0_9, %c0_10] : memref<2x8x192xf32, #tpu.memory_space<vmem>>, vector<1x8x192xf32>
    %7 = vector.shape_cast %6 : vector<1x8x192xf32> to vector<8x192xf32>
    %8 = vector.extract_strided_slice %3 {offsets = [0, 0], sizes = [64, 192], strides = [1, 1]} : vector<64x384xbf16> to vector<64x192xbf16>
    %9 = vector.extract_strided_slice %3 {offsets = [0, 192], sizes = [64, 64], strides = [1, 1]} : vector<64x384xbf16> to vector<64x64xbf16>
    %10 = vector.extract_strided_slice %3 {offsets = [0, 256], sizes = [64, 128], strides = [1, 1]} : vector<64x384xbf16> to vector<64x128xbf16>
    %11 = vector.extract_strided_slice %7 {offsets = [0, 0], sizes = [1, 192], strides = [1, 1]} : vector<8x192xf32> to vector<1x192xf32>
    %12 = vector.extract_strided_slice %7 {offsets = [1, 0], sizes = [1, 64], strides = [1, 1]} : vector<8x192xf32> to vector<1x64xf32>
    %13 = vector.extract_strided_slice %7 {offsets = [2, 0], sizes = [1, 128], strides = [1, 1]} : vector<8x192xf32> to vector<1x128xf32>
    %14 = vector.extract_strided_slice %7 {offsets = [3, 0], sizes = [1, 64], strides = [1, 1]} : vector<8x192xf32> to vector<1x64xf32>
    %15 = vector.extract_strided_slice %7 {offsets = [4, 0], sizes = [1, 64], strides = [1, 1]} : vector<8x192xf32> to vector<1x64xf32>
    %16 = vector.extract_strided_slice %7 {offsets = [5, 0], sizes = [1, 64], strides = [1, 1]} : vector<8x192xf32> to vector<1x64xf32>
    %17 = vector.extract_strided_slice %7 {offsets = [6, 0], sizes = [1, 64], strides = [1, 1]} : vector<8x192xf32> to vector<1x64xf32>
    %18 = vector.extract_strided_slice %7 {offsets = [7, 0], sizes = [1, 64], strides = [1, 1]} : vector<8x192xf32> to vector<1x64xf32>
    %19 = arith.truncf %1 : vector<8x64xf32> to vector<8x64xbf16>
    %cst = arith.constant dense<0.000000e+00> : vector<8x192xf32>
    %20 = tpu.matmul %19, %8, %cst {dimension_numbers = #tpu.dot_dimension_numbers<[1], [0], [0], [1], [0, 0, 1, 1], [], []>} : vector<8x64xbf16>, vector<64x192xbf16>, vector<8x192xf32> -> vector<8x192xf32>
    %21 = vector.broadcast %11 : vector<1x192xf32> to vector<8x192xf32>
    %22 = arith.addf %20, %21 : vector<8x192xf32>
    %23 = vector.extract_strided_slice %22 {offsets = [0, 0], sizes = [8, 16], strides = [1, 1]} : vector<8x192xf32> to vector<8x16xf32>
    %24 = vector.extract_strided_slice %22 {offsets = [0, 64], sizes = [8, 16], strides = [1, 1]} : vector<8x192xf32> to vector<8x16xf32>
    %25 = vector.extract_strided_slice %22 {offsets = [0, 128], sizes = [8, 16], strides = [1, 1]} : vector<8x192xf32> to vector<8x16xf32>
    %26 = tpu.transpose %24, [1, 0] : vector<8x16xf32> -> vector<16x8xf32>
    %cst_11 = arith.constant dense<0.000000e+00> : vector<8x8xf32>
    %27 = tpu.matmul %23, %26, %cst_11 {dimension_numbers = #tpu.dot_dimension_numbers<[1], [0], [0], [1], [0, 0, 1, 1], [], []>} : vector<8x16xf32>, vector<16x8xf32>, vector<8x8xf32> -> vector<8x8xf32>
    %cst_12 = arith.constant 2.500000e-01 : f32
    %28 = vector.broadcast %cst_12 : f32 to vector<8x8xf32>
    %29 = arith.mulf %27, %28 : vector<8x8xf32>
    %cst_13 = arith.constant dense<0xFF800000> : vector<8xf32>
    %30 = vector.multi_reduction <maximumf>, %29, %cst_13 [1] : vector<8x8xf32> to vector<8xf32>
    %31 = vector.shape_cast %30 : vector<8xf32> to vector<8x1xf32>
    %32 = vector.broadcast %31 : vector<8x1xf32> to vector<8x8xf32>
    %33 = arith.subf %29, %32 : vector<8x8xf32>
    %34 = math.exp %33 : vector<8x8xf32>
    %cst_14 = arith.constant dense<0.000000e+00> : vector<8xf32>
    %35 = vector.multi_reduction <add>, %34, %cst_14 [1] : vector<8x8xf32> to vector<8xf32>
    %36 = vector.shape_cast %35 : vector<8xf32> to vector<8x1xf32>
    %37 = tpu.reciprocal %36 {approx = true} : vector<8x1xf32> -> vector<8x1xf32>
    %38 = vector.broadcast %37 : vector<8x1xf32> to vector<8x8xf32>
    %39 = arith.mulf %34, %38 : vector<8x8xf32>
    %cst_15 = arith.constant dense<0.000000e+00> : vector<8x16xf32>
    %40 = tpu.matmul %39, %25, %cst_15 {dimension_numbers = #tpu.dot_dimension_numbers<[1], [0], [0], [1], [0, 0, 1, 1], [], []>} : vector<8x8xf32>, vector<8x16xf32>, vector<8x16xf32> -> vector<8x16xf32>
    %41 = vector.extract_strided_slice %22 {offsets = [0, 16], sizes = [8, 16], strides = [1, 1]} : vector<8x192xf32> to vector<8x16xf32>
    %42 = vector.extract_strided_slice %22 {offsets = [0, 80], sizes = [8, 16], strides = [1, 1]} : vector<8x192xf32> to vector<8x16xf32>
    %43 = vector.extract_strided_slice %22 {offsets = [0, 144], sizes = [8, 16], strides = [1, 1]} : vector<8x192xf32> to vector<8x16xf32>
    %44 = tpu.transpose %42, [1, 0] : vector<8x16xf32> -> vector<16x8xf32>
    %cst_16 = arith.constant dense<0.000000e+00> : vector<8x8xf32>
    %45 = tpu.matmul %41, %44, %cst_16 {dimension_numbers = #tpu.dot_dimension_numbers<[1], [0], [0], [1], [0, 0, 1, 1], [], []>} : vector<8x16xf32>, vector<16x8xf32>, vector<8x8xf32> -> vector<8x8xf32>
    %cst_17 = arith.constant 2.500000e-01 : f32
    %46 = vector.broadcast %cst_17 : f32 to vector<8x8xf32>
    %47 = arith.mulf %45, %46 : vector<8x8xf32>
    %cst_18 = arith.constant dense<0xFF800000> : vector<8xf32>
    %48 = vector.multi_reduction <maximumf>, %47, %cst_18 [1] : vector<8x8xf32> to vector<8xf32>
    %49 = vector.shape_cast %48 : vector<8xf32> to vector<8x1xf32>
    %50 = vector.broadcast %49 : vector<8x1xf32> to vector<8x8xf32>
    %51 = arith.subf %47, %50 : vector<8x8xf32>
    %52 = math.exp %51 : vector<8x8xf32>
    %cst_19 = arith.constant dense<0.000000e+00> : vector<8xf32>
    %53 = vector.multi_reduction <add>, %52, %cst_19 [1] : vector<8x8xf32> to vector<8xf32>
    %54 = vector.shape_cast %53 : vector<8xf32> to vector<8x1xf32>
    %55 = tpu.reciprocal %54 {approx = true} : vector<8x1xf32> -> vector<8x1xf32>
    %56 = vector.broadcast %55 : vector<8x1xf32> to vector<8x8xf32>
    %57 = arith.mulf %52, %56 : vector<8x8xf32>
    %cst_20 = arith.constant dense<0.000000e+00> : vector<8x16xf32>
    %58 = tpu.matmul %57, %43, %cst_20 {dimension_numbers = #tpu.dot_dimension_numbers<[1], [0], [0], [1], [0, 0, 1, 1], [], []>} : vector<8x8xf32>, vector<8x16xf32>, vector<8x16xf32> -> vector<8x16xf32>
    %59 = vector.extract_strided_slice %22 {offsets = [0, 32], sizes = [8, 16], strides = [1, 1]} : vector<8x192xf32> to vector<8x16xf32>
    %60 = vector.extract_strided_slice %22 {offsets = [0, 96], sizes = [8, 16], strides = [1, 1]} : vector<8x192xf32> to vector<8x16xf32>
    %61 = vector.extract_strided_slice %22 {offsets = [0, 160], sizes = [8, 16], strides = [1, 1]} : vector<8x192xf32> to vector<8x16xf32>
    %62 = tpu.transpose %60, [1, 0] : vector<8x16xf32> -> vector<16x8xf32>
    %cst_21 = arith.constant dense<0.000000e+00> : vector<8x8xf32>
    %63 = tpu.matmul %59, %62, %cst_21 {dimension_numbers = #tpu.dot_dimension_numbers<[1], [0], [0], [1], [0, 0, 1, 1], [], []>} : vector<8x16xf32>, vector<16x8xf32>, vector<8x8xf32> -> vector<8x8xf32>
    %cst_22 = arith.constant 2.500000e-01 : f32
    %64 = vector.broadcast %cst_22 : f32 to vector<8x8xf32>
    %65 = arith.mulf %63, %64 : vector<8x8xf32>
    %cst_23 = arith.constant dense<0xFF800000> : vector<8xf32>
    %66 = vector.multi_reduction <maximumf>, %65, %cst_23 [1] : vector<8x8xf32> to vector<8xf32>
    %67 = vector.shape_cast %66 : vector<8xf32> to vector<8x1xf32>
    %68 = vector.broadcast %67 : vector<8x1xf32> to vector<8x8xf32>
    %69 = arith.subf %65, %68 : vector<8x8xf32>
    %70 = math.exp %69 : vector<8x8xf32>
    %cst_24 = arith.constant dense<0.000000e+00> : vector<8xf32>
    %71 = vector.multi_reduction <add>, %70, %cst_24 [1] : vector<8x8xf32> to vector<8xf32>
    %72 = vector.shape_cast %71 : vector<8xf32> to vector<8x1xf32>
    %73 = tpu.reciprocal %72 {approx = true} : vector<8x1xf32> -> vector<8x1xf32>
    %74 = vector.broadcast %73 : vector<8x1xf32> to vector<8x8xf32>
    %75 = arith.mulf %70, %74 : vector<8x8xf32>
    %cst_25 = arith.constant dense<0.000000e+00> : vector<8x16xf32>
    %76 = tpu.matmul %75, %61, %cst_25 {dimension_numbers = #tpu.dot_dimension_numbers<[1], [0], [0], [1], [0, 0, 1, 1], [], []>} : vector<8x8xf32>, vector<8x16xf32>, vector<8x16xf32> -> vector<8x16xf32>
    %77 = vector.extract_strided_slice %22 {offsets = [0, 48], sizes = [8, 16], strides = [1, 1]} : vector<8x192xf32> to vector<8x16xf32>
    %78 = vector.extract_strided_slice %22 {offsets = [0, 112], sizes = [8, 16], strides = [1, 1]} : vector<8x192xf32> to vector<8x16xf32>
    %79 = vector.extract_strided_slice %22 {offsets = [0, 176], sizes = [8, 16], strides = [1, 1]} : vector<8x192xf32> to vector<8x16xf32>
    %80 = tpu.transpose %78, [1, 0] : vector<8x16xf32> -> vector<16x8xf32>
    %cst_26 = arith.constant dense<0.000000e+00> : vector<8x8xf32>
    %81 = tpu.matmul %77, %80, %cst_26 {dimension_numbers = #tpu.dot_dimension_numbers<[1], [0], [0], [1], [0, 0, 1, 1], [], []>} : vector<8x16xf32>, vector<16x8xf32>, vector<8x8xf32> -> vector<8x8xf32>
    %cst_27 = arith.constant 2.500000e-01 : f32
    %82 = vector.broadcast %cst_27 : f32 to vector<8x8xf32>
    %83 = arith.mulf %81, %82 : vector<8x8xf32>
    %cst_28 = arith.constant dense<0xFF800000> : vector<8xf32>
    %84 = vector.multi_reduction <maximumf>, %83, %cst_28 [1] : vector<8x8xf32> to vector<8xf32>
    %85 = vector.shape_cast %84 : vector<8xf32> to vector<8x1xf32>
    %86 = vector.broadcast %85 : vector<8x1xf32> to vector<8x8xf32>
    %87 = arith.subf %83, %86 : vector<8x8xf32>
    %88 = math.exp %87 : vector<8x8xf32>
    %cst_29 = arith.constant dense<0.000000e+00> : vector<8xf32>
    %89 = vector.multi_reduction <add>, %88, %cst_29 [1] : vector<8x8xf32> to vector<8xf32>
    %90 = vector.shape_cast %89 : vector<8xf32> to vector<8x1xf32>
    %91 = tpu.reciprocal %90 {approx = true} : vector<8x1xf32> -> vector<8x1xf32>
    %92 = vector.broadcast %91 : vector<8x1xf32> to vector<8x8xf32>
    %93 = arith.mulf %88, %92 : vector<8x8xf32>
    %cst_30 = arith.constant dense<0.000000e+00> : vector<8x16xf32>
    %94 = tpu.matmul %93, %79, %cst_30 {dimension_numbers = #tpu.dot_dimension_numbers<[1], [0], [0], [1], [0, 0, 1, 1], [], []>} : vector<8x8xf32>, vector<8x16xf32>, vector<8x16xf32> -> vector<8x16xf32>
    %95 = tpu.concatenate %40, %58, %76, %94 in 1 : vector<8x16xf32>, vector<8x16xf32>, vector<8x16xf32>, vector<8x16xf32> -> vector<8x64xf32>
    %96 = arith.truncf %95 : vector<8x64xf32> to vector<8x64xbf16>
    %cst_31 = arith.constant dense<0.000000e+00> : vector<8x64xf32>
    %97 = tpu.matmul %96, %9, %cst_31 {dimension_numbers = #tpu.dot_dimension_numbers<[1], [0], [0], [1], [0, 0, 1, 1], [], []>} : vector<8x64xbf16>, vector<64x64xbf16>, vector<8x64xf32> -> vector<8x64xf32>
    %98 = vector.broadcast %12 : vector<1x64xf32> to vector<8x64xf32>
    %99 = arith.addf %97, %98 : vector<8x64xf32>
    %100 = arith.addf %1, %99 : vector<8x64xf32>
    %cst_32 = arith.constant dense<0.000000e+00> : vector<8xf32>
    %101 = vector.multi_reduction <add>, %100, %cst_32 [1] : vector<8x64xf32> to vector<8xf32>
    %102 = vector.shape_cast %101 : vector<8xf32> to vector<8x1xf32>
    %cst_33 = arith.constant 6.400000e+01 : f32
    %103 = vector.broadcast %cst_33 : f32 to vector<8x1xf32>
    %104 = arith.divf %102, %103 : vector<8x1xf32>
    %105 = vector.broadcast %104 : vector<8x1xf32> to vector<8x64xf32>
    %106 = arith.subf %100, %105 : vector<8x64xf32>
    %107 = arith.mulf %106, %106 : vector<8x64xf32>
    %cst_34 = arith.constant dense<0.000000e+00> : vector<8xf32>
    %108 = vector.multi_reduction <add>, %107, %cst_34 [1] : vector<8x64xf32> to vector<8xf32>
    %109 = vector.shape_cast %108 : vector<8xf32> to vector<8x1xf32>
    %cst_35 = arith.constant 6.400000e+01 : f32
    %110 = vector.broadcast %cst_35 : f32 to vector<8x1xf32>
    %111 = arith.divf %109, %110 : vector<8x1xf32>
    %cst_36 = arith.constant 9.99999974E-6 : f32
    %112 = vector.broadcast %cst_36 : f32 to vector<8x1xf32>
    %113 = arith.addf %111, %112 : vector<8x1xf32>
    %114 = math.rsqrt %113 : vector<8x1xf32>
    %115 = vector.broadcast %114 : vector<8x1xf32> to vector<8x64xf32>
    %116 = arith.mulf %106, %115 : vector<8x64xf32>
    %117 = vector.broadcast %15 : vector<1x64xf32> to vector<8x64xf32>
    %118 = arith.mulf %116, %117 : vector<8x64xf32>
    %119 = vector.broadcast %16 : vector<1x64xf32> to vector<8x64xf32>
    %120 = arith.addf %118, %119 : vector<8x64xf32>
    %121 = arith.truncf %120 : vector<8x64xf32> to vector<8x64xbf16>
    %cst_37 = arith.constant dense<0.000000e+00> : vector<8x128xf32>
    %122 = tpu.matmul %121, %10, %cst_37 {dimension_numbers = #tpu.dot_dimension_numbers<[1], [0], [0], [1], [0, 0, 1, 1], [], []>} : vector<8x64xbf16>, vector<64x128xbf16>, vector<8x128xf32> -> vector<8x128xf32>
    %123 = vector.broadcast %13 : vector<1x128xf32> to vector<8x128xf32>
    %124 = arith.addf %122, %123 : vector<8x128xf32>
    %cst_38 = arith.constant 0.000000e+00 : f32
    %125 = vector.broadcast %cst_38 : f32 to vector<8x128xf32>
    %126 = arith.maximumf %124, %125 : vector<8x128xf32>
    %127 = arith.truncf %126 : vector<8x128xf32> to vector<8x128xbf16>
    %cst_39 = arith.constant dense<0.000000e+00> : vector<8x64xf32>
    %128 = tpu.matmul %127, %5, %cst_39 {dimension_numbers = #tpu.dot_dimension_numbers<[1], [0], [0], [1], [0, 0, 1, 1], [], []>} : vector<8x128xbf16>, vector<128x64xbf16>, vector<8x64xf32> -> vector<8x64xf32>
    %129 = vector.broadcast %14 : vector<1x64xf32> to vector<8x64xf32>
    %130 = arith.addf %128, %129 : vector<8x64xf32>
    %131 = arith.addf %120, %130 : vector<8x64xf32>
    %cst_40 = arith.constant dense<0.000000e+00> : vector<8xf32>
    %132 = vector.multi_reduction <add>, %131, %cst_40 [1] : vector<8x64xf32> to vector<8xf32>
    %133 = vector.shape_cast %132 : vector<8xf32> to vector<8x1xf32>
    %cst_41 = arith.constant 6.400000e+01 : f32
    %134 = vector.broadcast %cst_41 : f32 to vector<8x1xf32>
    %135 = arith.divf %133, %134 : vector<8x1xf32>
    %136 = vector.broadcast %135 : vector<8x1xf32> to vector<8x64xf32>
    %137 = arith.subf %131, %136 : vector<8x64xf32>
    %138 = arith.mulf %137, %137 : vector<8x64xf32>
    %cst_42 = arith.constant dense<0.000000e+00> : vector<8xf32>
    %139 = vector.multi_reduction <add>, %138, %cst_42 [1] : vector<8x64xf32> to vector<8xf32>
    %140 = vector.shape_cast %139 : vector<8xf32> to vector<8x1xf32>
    %cst_43 = arith.constant 6.400000e+01 : f32
    %141 = vector.broadcast %cst_43 : f32 to vector<8x1xf32>
    %142 = arith.divf %140, %141 : vector<8x1xf32>
    %cst_44 = arith.constant 9.99999974E-6 : f32
    %143 = vector.broadcast %cst_44 : f32 to vector<8x1xf32>
    %144 = arith.addf %142, %143 : vector<8x1xf32>
    %145 = math.rsqrt %144 : vector<8x1xf32>
    %146 = vector.broadcast %145 : vector<8x1xf32> to vector<8x64xf32>
    %147 = arith.mulf %137, %146 : vector<8x64xf32>
    %148 = vector.broadcast %17 : vector<1x64xf32> to vector<8x64xf32>
    %149 = arith.mulf %147, %148 : vector<8x64xf32>
    %150 = vector.broadcast %18 : vector<1x64xf32> to vector<8x64xf32>
    %151 = arith.addf %149, %150 : vector<8x64xf32>
    %c1 = arith.constant 1 : index
    %c0_45 = arith.constant 0 : index
    %c0_46 = arith.constant 0 : index
    %152 = vector.load %arg2[%c1, %c0_45, %c0_46] : memref<2x64x384xbf16, #tpu.memory_space<vmem>>, vector<1x64x384xbf16>
    %153 = vector.shape_cast %152 : vector<1x64x384xbf16> to vector<64x384xbf16>
    %c1_47 = arith.constant 1 : index
    %c0_48 = arith.constant 0 : index
    %c0_49 = arith.constant 0 : index
    %154 = vector.load %arg3[%c1_47, %c0_48, %c0_49] : memref<2x128x64xbf16, #tpu.memory_space<vmem>>, vector<1x128x64xbf16>
    %155 = vector.shape_cast %154 : vector<1x128x64xbf16> to vector<128x64xbf16>
    %c1_50 = arith.constant 1 : index
    %c0_51 = arith.constant 0 : index
    %c0_52 = arith.constant 0 : index
    %156 = vector.load %arg4[%c1_50, %c0_51, %c0_52] : memref<2x8x192xf32, #tpu.memory_space<vmem>>, vector<1x8x192xf32>
    %157 = vector.shape_cast %156 : vector<1x8x192xf32> to vector<8x192xf32>
    %158 = vector.extract_strided_slice %153 {offsets = [0, 0], sizes = [64, 192], strides = [1, 1]} : vector<64x384xbf16> to vector<64x192xbf16>
    %159 = vector.extract_strided_slice %153 {offsets = [0, 192], sizes = [64, 64], strides = [1, 1]} : vector<64x384xbf16> to vector<64x64xbf16>
    %160 = vector.extract_strided_slice %153 {offsets = [0, 256], sizes = [64, 128], strides = [1, 1]} : vector<64x384xbf16> to vector<64x128xbf16>
    %161 = vector.extract_strided_slice %157 {offsets = [0, 0], sizes = [1, 192], strides = [1, 1]} : vector<8x192xf32> to vector<1x192xf32>
    %162 = vector.extract_strided_slice %157 {offsets = [1, 0], sizes = [1, 64], strides = [1, 1]} : vector<8x192xf32> to vector<1x64xf32>
    %163 = vector.extract_strided_slice %157 {offsets = [2, 0], sizes = [1, 128], strides = [1, 1]} : vector<8x192xf32> to vector<1x128xf32>
    %164 = vector.extract_strided_slice %157 {offsets = [3, 0], sizes = [1, 64], strides = [1, 1]} : vector<8x192xf32> to vector<1x64xf32>
    %165 = vector.extract_strided_slice %157 {offsets = [4, 0], sizes = [1, 64], strides = [1, 1]} : vector<8x192xf32> to vector<1x64xf32>
    %166 = vector.extract_strided_slice %157 {offsets = [5, 0], sizes = [1, 64], strides = [1, 1]} : vector<8x192xf32> to vector<1x64xf32>
    %167 = vector.extract_strided_slice %157 {offsets = [6, 0], sizes = [1, 64], strides = [1, 1]} : vector<8x192xf32> to vector<1x64xf32>
    %168 = vector.extract_strided_slice %157 {offsets = [7, 0], sizes = [1, 64], strides = [1, 1]} : vector<8x192xf32> to vector<1x64xf32>
    %169 = arith.truncf %151 : vector<8x64xf32> to vector<8x64xbf16>
    %cst_53 = arith.constant dense<0.000000e+00> : vector<8x192xf32>
    %170 = tpu.matmul %169, %158, %cst_53 {dimension_numbers = #tpu.dot_dimension_numbers<[1], [0], [0], [1], [0, 0, 1, 1], [], []>} : vector<8x64xbf16>, vector<64x192xbf16>, vector<8x192xf32> -> vector<8x192xf32>
    %171 = vector.broadcast %161 : vector<1x192xf32> to vector<8x192xf32>
    %172 = arith.addf %170, %171 : vector<8x192xf32>
    %173 = vector.extract_strided_slice %172 {offsets = [0, 0], sizes = [8, 16], strides = [1, 1]} : vector<8x192xf32> to vector<8x16xf32>
    %174 = vector.extract_strided_slice %172 {offsets = [0, 64], sizes = [8, 16], strides = [1, 1]} : vector<8x192xf32> to vector<8x16xf32>
    %175 = vector.extract_strided_slice %172 {offsets = [0, 128], sizes = [8, 16], strides = [1, 1]} : vector<8x192xf32> to vector<8x16xf32>
    %176 = tpu.transpose %174, [1, 0] : vector<8x16xf32> -> vector<16x8xf32>
    %cst_54 = arith.constant dense<0.000000e+00> : vector<8x8xf32>
    %177 = tpu.matmul %173, %176, %cst_54 {dimension_numbers = #tpu.dot_dimension_numbers<[1], [0], [0], [1], [0, 0, 1, 1], [], []>} : vector<8x16xf32>, vector<16x8xf32>, vector<8x8xf32> -> vector<8x8xf32>
    %cst_55 = arith.constant 2.500000e-01 : f32
    %178 = vector.broadcast %cst_55 : f32 to vector<8x8xf32>
    %179 = arith.mulf %177, %178 : vector<8x8xf32>
    %cst_56 = arith.constant dense<0xFF800000> : vector<8xf32>
    %180 = vector.multi_reduction <maximumf>, %179, %cst_56 [1] : vector<8x8xf32> to vector<8xf32>
    %181 = vector.shape_cast %180 : vector<8xf32> to vector<8x1xf32>
    %182 = vector.broadcast %181 : vector<8x1xf32> to vector<8x8xf32>
    %183 = arith.subf %179, %182 : vector<8x8xf32>
    %184 = math.exp %183 : vector<8x8xf32>
    %cst_57 = arith.constant dense<0.000000e+00> : vector<8xf32>
    %185 = vector.multi_reduction <add>, %184, %cst_57 [1] : vector<8x8xf32> to vector<8xf32>
    %186 = vector.shape_cast %185 : vector<8xf32> to vector<8x1xf32>
    %187 = tpu.reciprocal %186 {approx = true} : vector<8x1xf32> -> vector<8x1xf32>
    %188 = vector.broadcast %187 : vector<8x1xf32> to vector<8x8xf32>
    %189 = arith.mulf %184, %188 : vector<8x8xf32>
    %cst_58 = arith.constant dense<0.000000e+00> : vector<8x16xf32>
    %190 = tpu.matmul %189, %175, %cst_58 {dimension_numbers = #tpu.dot_dimension_numbers<[1], [0], [0], [1], [0, 0, 1, 1], [], []>} : vector<8x8xf32>, vector<8x16xf32>, vector<8x16xf32> -> vector<8x16xf32>
    %191 = vector.extract_strided_slice %172 {offsets = [0, 16], sizes = [8, 16], strides = [1, 1]} : vector<8x192xf32> to vector<8x16xf32>
    %192 = vector.extract_strided_slice %172 {offsets = [0, 80], sizes = [8, 16], strides = [1, 1]} : vector<8x192xf32> to vector<8x16xf32>
    %193 = vector.extract_strided_slice %172 {offsets = [0, 144], sizes = [8, 16], strides = [1, 1]} : vector<8x192xf32> to vector<8x16xf32>
    %194 = tpu.transpose %192, [1, 0] : vector<8x16xf32> -> vector<16x8xf32>
    %cst_59 = arith.constant dense<0.000000e+00> : vector<8x8xf32>
    %195 = tpu.matmul %191, %194, %cst_59 {dimension_numbers = #tpu.dot_dimension_numbers<[1], [0], [0], [1], [0, 0, 1, 1], [], []>} : vector<8x16xf32>, vector<16x8xf32>, vector<8x8xf32> -> vector<8x8xf32>
    %cst_60 = arith.constant 2.500000e-01 : f32
    %196 = vector.broadcast %cst_60 : f32 to vector<8x8xf32>
    %197 = arith.mulf %195, %196 : vector<8x8xf32>
    %cst_61 = arith.constant dense<0xFF800000> : vector<8xf32>
    %198 = vector.multi_reduction <maximumf>, %197, %cst_61 [1] : vector<8x8xf32> to vector<8xf32>
    %199 = vector.shape_cast %198 : vector<8xf32> to vector<8x1xf32>
    %200 = vector.broadcast %199 : vector<8x1xf32> to vector<8x8xf32>
    %201 = arith.subf %197, %200 : vector<8x8xf32>
    %202 = math.exp %201 : vector<8x8xf32>
    %cst_62 = arith.constant dense<0.000000e+00> : vector<8xf32>
    %203 = vector.multi_reduction <add>, %202, %cst_62 [1] : vector<8x8xf32> to vector<8xf32>
    %204 = vector.shape_cast %203 : vector<8xf32> to vector<8x1xf32>
    %205 = tpu.reciprocal %204 {approx = true} : vector<8x1xf32> -> vector<8x1xf32>
    %206 = vector.broadcast %205 : vector<8x1xf32> to vector<8x8xf32>
    %207 = arith.mulf %202, %206 : vector<8x8xf32>
    %cst_63 = arith.constant dense<0.000000e+00> : vector<8x16xf32>
    %208 = tpu.matmul %207, %193, %cst_63 {dimension_numbers = #tpu.dot_dimension_numbers<[1], [0], [0], [1], [0, 0, 1, 1], [], []>} : vector<8x8xf32>, vector<8x16xf32>, vector<8x16xf32> -> vector<8x16xf32>
    %209 = vector.extract_strided_slice %172 {offsets = [0, 32], sizes = [8, 16], strides = [1, 1]} : vector<8x192xf32> to vector<8x16xf32>
    %210 = vector.extract_strided_slice %172 {offsets = [0, 96], sizes = [8, 16], strides = [1, 1]} : vector<8x192xf32> to vector<8x16xf32>
    %211 = vector.extract_strided_slice %172 {offsets = [0, 160], sizes = [8, 16], strides = [1, 1]} : vector<8x192xf32> to vector<8x16xf32>
    %212 = tpu.transpose %210, [1, 0] : vector<8x16xf32> -> vector<16x8xf32>
    %cst_64 = arith.constant dense<0.000000e+00> : vector<8x8xf32>
    %213 = tpu.matmul %209, %212, %cst_64 {dimension_numbers = #tpu.dot_dimension_numbers<[1], [0], [0], [1], [0, 0, 1, 1], [], []>} : vector<8x16xf32>, vector<16x8xf32>, vector<8x8xf32> -> vector<8x8xf32>
    %cst_65 = arith.constant 2.500000e-01 : f32
    %214 = vector.broadcast %cst_65 : f32 to vector<8x8xf32>
    %215 = arith.mulf %213, %214 : vector<8x8xf32>
    %cst_66 = arith.constant dense<0xFF800000> : vector<8xf32>
    %216 = vector.multi_reduction <maximumf>, %215, %cst_66 [1] : vector<8x8xf32> to vector<8xf32>
    %217 = vector.shape_cast %216 : vector<8xf32> to vector<8x1xf32>
    %218 = vector.broadcast %217 : vector<8x1xf32> to vector<8x8xf32>
    %219 = arith.subf %215, %218 : vector<8x8xf32>
    %220 = math.exp %219 : vector<8x8xf32>
    %cst_67 = arith.constant dense<0.000000e+00> : vector<8xf32>
    %221 = vector.multi_reduction <add>, %220, %cst_67 [1] : vector<8x8xf32> to vector<8xf32>
    %222 = vector.shape_cast %221 : vector<8xf32> to vector<8x1xf32>
    %223 = tpu.reciprocal %222 {approx = true} : vector<8x1xf32> -> vector<8x1xf32>
    %224 = vector.broadcast %223 : vector<8x1xf32> to vector<8x8xf32>
    %225 = arith.mulf %220, %224 : vector<8x8xf32>
    %cst_68 = arith.constant dense<0.000000e+00> : vector<8x16xf32>
    %226 = tpu.matmul %225, %211, %cst_68 {dimension_numbers = #tpu.dot_dimension_numbers<[1], [0], [0], [1], [0, 0, 1, 1], [], []>} : vector<8x8xf32>, vector<8x16xf32>, vector<8x16xf32> -> vector<8x16xf32>
    %227 = vector.extract_strided_slice %172 {offsets = [0, 48], sizes = [8, 16], strides = [1, 1]} : vector<8x192xf32> to vector<8x16xf32>
    %228 = vector.extract_strided_slice %172 {offsets = [0, 112], sizes = [8, 16], strides = [1, 1]} : vector<8x192xf32> to vector<8x16xf32>
    %229 = vector.extract_strided_slice %172 {offsets = [0, 176], sizes = [8, 16], strides = [1, 1]} : vector<8x192xf32> to vector<8x16xf32>
    %230 = tpu.transpose %228, [1, 0] : vector<8x16xf32> -> vector<16x8xf32>
    %cst_69 = arith.constant dense<0.000000e+00> : vector<8x8xf32>
    %231 = tpu.matmul %227, %230, %cst_69 {dimension_numbers = #tpu.dot_dimension_numbers<[1], [0], [0], [1], [0, 0, 1, 1], [], []>} : vector<8x16xf32>, vector<16x8xf32>, vector<8x8xf32> -> vector<8x8xf32>
    %cst_70 = arith.constant 2.500000e-01 : f32
    %232 = vector.broadcast %cst_70 : f32 to vector<8x8xf32>
    %233 = arith.mulf %231, %232 : vector<8x8xf32>
    %cst_71 = arith.constant dense<0xFF800000> : vector<8xf32>
    %234 = vector.multi_reduction <maximumf>, %233, %cst_71 [1] : vector<8x8xf32> to vector<8xf32>
    %235 = vector.shape_cast %234 : vector<8xf32> to vector<8x1xf32>
    %236 = vector.broadcast %235 : vector<8x1xf32> to vector<8x8xf32>
    %237 = arith.subf %233, %236 : vector<8x8xf32>
    %238 = math.exp %237 : vector<8x8xf32>
    %cst_72 = arith.constant dense<0.000000e+00> : vector<8xf32>
    %239 = vector.multi_reduction <add>, %238, %cst_72 [1] : vector<8x8xf32> to vector<8xf32>
    %240 = vector.shape_cast %239 : vector<8xf32> to vector<8x1xf32>
    %241 = tpu.reciprocal %240 {approx = true} : vector<8x1xf32> -> vector<8x1xf32>
    %242 = vector.broadcast %241 : vector<8x1xf32> to vector<8x8xf32>
    %243 = arith.mulf %238, %242 : vector<8x8xf32>
    %cst_73 = arith.constant dense<0.000000e+00> : vector<8x16xf32>
    %244 = tpu.matmul %243, %229, %cst_73 {dimension_numbers = #tpu.dot_dimension_numbers<[1], [0], [0], [1], [0, 0, 1, 1], [], []>} : vector<8x8xf32>, vector<8x16xf32>, vector<8x16xf32> -> vector<8x16xf32>
    %245 = tpu.concatenate %190, %208, %226, %244 in 1 : vector<8x16xf32>, vector<8x16xf32>, vector<8x16xf32>, vector<8x16xf32> -> vector<8x64xf32>
    %246 = arith.truncf %245 : vector<8x64xf32> to vector<8x64xbf16>
    %cst_74 = arith.constant dense<0.000000e+00> : vector<8x64xf32>
    %247 = tpu.matmul %246, %159, %cst_74 {dimension_numbers = #tpu.dot_dimension_numbers<[1], [0], [0], [1], [0, 0, 1, 1], [], []>} : vector<8x64xbf16>, vector<64x64xbf16>, vector<8x64xf32> -> vector<8x64xf32>
    %248 = vector.broadcast %162 : vector<1x64xf32> to vector<8x64xf32>
    %249 = arith.addf %247, %248 : vector<8x64xf32>
    %250 = arith.addf %151, %249 : vector<8x64xf32>
    %cst_75 = arith.constant dense<0.000000e+00> : vector<8xf32>
    %251 = vector.multi_reduction <add>, %250, %cst_75 [1] : vector<8x64xf32> to vector<8xf32>
    %252 = vector.shape_cast %251 : vector<8xf32> to vector<8x1xf32>
    %cst_76 = arith.constant 6.400000e+01 : f32
    %253 = vector.broadcast %cst_76 : f32 to vector<8x1xf32>
    %254 = arith.divf %252, %253 : vector<8x1xf32>
    %255 = vector.broadcast %254 : vector<8x1xf32> to vector<8x64xf32>
    %256 = arith.subf %250, %255 : vector<8x64xf32>
    %257 = arith.mulf %256, %256 : vector<8x64xf32>
    %cst_77 = arith.constant dense<0.000000e+00> : vector<8xf32>
    %258 = vector.multi_reduction <add>, %257, %cst_77 [1] : vector<8x64xf32> to vector<8xf32>
    %259 = vector.shape_cast %258 : vector<8xf32> to vector<8x1xf32>
    %cst_78 = arith.constant 6.400000e+01 : f32
    %260 = vector.broadcast %cst_78 : f32 to vector<8x1xf32>
    %261 = arith.divf %259, %260 : vector<8x1xf32>
    %cst_79 = arith.constant 9.99999974E-6 : f32
    %262 = vector.broadcast %cst_79 : f32 to vector<8x1xf32>
    %263 = arith.addf %261, %262 : vector<8x1xf32>
    %264 = math.rsqrt %263 : vector<8x1xf32>
    %265 = vector.broadcast %264 : vector<8x1xf32> to vector<8x64xf32>
    %266 = arith.mulf %256, %265 : vector<8x64xf32>
    %267 = vector.broadcast %165 : vector<1x64xf32> to vector<8x64xf32>
    %268 = arith.mulf %266, %267 : vector<8x64xf32>
    %269 = vector.broadcast %166 : vector<1x64xf32> to vector<8x64xf32>
    %270 = arith.addf %268, %269 : vector<8x64xf32>
    %271 = arith.truncf %270 : vector<8x64xf32> to vector<8x64xbf16>
    %cst_80 = arith.constant dense<0.000000e+00> : vector<8x128xf32>
    %272 = tpu.matmul %271, %160, %cst_80 {dimension_numbers = #tpu.dot_dimension_numbers<[1], [0], [0], [1], [0, 0, 1, 1], [], []>} : vector<8x64xbf16>, vector<64x128xbf16>, vector<8x128xf32> -> vector<8x128xf32>
    %273 = vector.broadcast %163 : vector<1x128xf32> to vector<8x128xf32>
    %274 = arith.addf %272, %273 : vector<8x128xf32>
    %cst_81 = arith.constant 0.000000e+00 : f32
    %275 = vector.broadcast %cst_81 : f32 to vector<8x128xf32>
    %276 = arith.maximumf %274, %275 : vector<8x128xf32>
    %277 = arith.truncf %276 : vector<8x128xf32> to vector<8x128xbf16>
    %cst_82 = arith.constant dense<0.000000e+00> : vector<8x64xf32>
    %278 = tpu.matmul %277, %155, %cst_82 {dimension_numbers = #tpu.dot_dimension_numbers<[1], [0], [0], [1], [0, 0, 1, 1], [], []>} : vector<8x128xbf16>, vector<128x64xbf16>, vector<8x64xf32> -> vector<8x64xf32>
    %279 = vector.broadcast %164 : vector<1x64xf32> to vector<8x64xf32>
    %280 = arith.addf %278, %279 : vector<8x64xf32>
    %281 = arith.addf %270, %280 : vector<8x64xf32>
    %cst_83 = arith.constant dense<0.000000e+00> : vector<8xf32>
    %282 = vector.multi_reduction <add>, %281, %cst_83 [1] : vector<8x64xf32> to vector<8xf32>
    %283 = vector.shape_cast %282 : vector<8xf32> to vector<8x1xf32>
    %cst_84 = arith.constant 6.400000e+01 : f32
    %284 = vector.broadcast %cst_84 : f32 to vector<8x1xf32>
    %285 = arith.divf %283, %284 : vector<8x1xf32>
    %286 = vector.broadcast %285 : vector<8x1xf32> to vector<8x64xf32>
    %287 = arith.subf %281, %286 : vector<8x64xf32>
    %288 = arith.mulf %287, %287 : vector<8x64xf32>
    %cst_85 = arith.constant dense<0.000000e+00> : vector<8xf32>
    %289 = vector.multi_reduction <add>, %288, %cst_85 [1] : vector<8x64xf32> to vector<8xf32>
    %290 = vector.shape_cast %289 : vector<8xf32> to vector<8x1xf32>
    %cst_86 = arith.constant 6.400000e+01 : f32
    %291 = vector.broadcast %cst_86 : f32 to vector<8x1xf32>
    %292 = arith.divf %290, %291 : vector<8x1xf32>
    %cst_87 = arith.constant 9.99999974E-6 : f32
    %293 = vector.broadcast %cst_87 : f32 to vector<8x1xf32>
    %294 = arith.addf %292, %293 : vector<8x1xf32>
    %295 = math.rsqrt %294 : vector<8x1xf32>
    %296 = vector.broadcast %295 : vector<8x1xf32> to vector<8x64xf32>
    %297 = arith.mulf %287, %296 : vector<8x64xf32>
    %298 = vector.broadcast %167 : vector<1x64xf32> to vector<8x64xf32>
    %299 = arith.mulf %297, %298 : vector<8x64xf32>
    %300 = vector.broadcast %168 : vector<1x64xf32> to vector<8x64xf32>
    %301 = arith.addf %299, %300 : vector<8x64xf32>
    %302 = arith.truncf %301 : vector<8x64xf32> to vector<8x64xbf16>
    %c0_88 = arith.constant 0 : index
    %c0_89 = arith.constant 0 : index
    %303 = vector.load %arg5[%c0_88, %c0_89] : memref<64x128xbf16, #tpu.memory_space<vmem>>, vector<64x128xbf16>
    %cst_90 = arith.constant dense<0.000000e+00> : vector<8x128xf32>
    %304 = tpu.matmul %302, %303, %cst_90 {dimension_numbers = #tpu.dot_dimension_numbers<[1], [0], [0], [1], [0, 0, 1, 1], [], []>} : vector<8x64xbf16>, vector<64x128xbf16>, vector<8x128xf32> -> vector<8x128xf32>
    %c0_91 = arith.constant 0 : index
    %c0_92 = arith.constant 0 : index
    %305 = vector.load %arg6[%c0_91, %c0_92] : memref<1x128xf32, #tpu.memory_space<vmem>>, vector<1x128xf32>
    %306 = vector.broadcast %305 : vector<1x128xf32> to vector<8x128xf32>
    %307 = arith.addf %304, %306 : vector<8x128xf32>
    %c0_93 = arith.constant 0 : index
    %c0_94 = arith.constant 0 : index
    %c0_95 = arith.constant 0 : index
    %308 = vector.load %arg7[%c0_93, %c0_94, %c0_95] : memref<1x8x128xf32, #tpu.memory_space<vmem>>, vector<1x8x128xf32>
    %309 = vector.shape_cast %308 : vector<1x8x128xf32> to vector<8x128xf32>
    %310 = vector.shape_cast %307 : vector<8x128xf32> to vector<1x8x128xf32>
    tpu.vector_store %arg7[%c0_93, %c0_94, %c0_95], %310 {strides = array<i32>} : memref<1x8x128xf32, #tpu.memory_space<vmem>>, vector<1x8x128xf32>,
    return
  }
  func.func @transform_0(%arg0: i32) -> (i32, i32, i32) {
    %c0_i32 = arith.constant 0 : i32
    %c0_i32_0 = arith.constant 0 : i32
    %c0_i32_1 = arith.constant 0 : i32
    return %arg0, %c0_i32, %c0_i32_0 : i32, i32, i32
  }
  func.func @transform_1(%arg0: i32) -> (i32, i32, i32) {
    %c0_i32 = arith.constant 0 : i32
    %c0_i32_0 = arith.constant 0 : i32
    %c0_i32_1 = arith.constant 0 : i32
    %c0_i32_2 = arith.constant 0 : i32
    return %c0_i32, %c0_i32_0, %c0_i32_1 : i32, i32, i32
  }
  func.func @transform_2(%arg0: i32) -> (i32, i32, i32) {
    %c0_i32 = arith.constant 0 : i32
    %c0_i32_0 = arith.constant 0 : i32
    %c0_i32_1 = arith.constant 0 : i32
    %c0_i32_2 = arith.constant 0 : i32
    return %c0_i32, %c0_i32_0, %c0_i32_1 : i32, i32, i32
  }
  func.func @transform_3(%arg0: i32) -> (i32, i32, i32) {
    %c0_i32 = arith.constant 0 : i32
    %c0_i32_0 = arith.constant 0 : i32
    %c0_i32_1 = arith.constant 0 : i32
    %c0_i32_2 = arith.constant 0 : i32
    return %c0_i32, %c0_i32_0, %c0_i32_1 : i32, i32, i32
  }
  func.func @transform_4(%arg0: i32) -> (i32, i32) {
    %c0_i32 = arith.constant 0 : i32
    %c0_i32_0 = arith.constant 0 : i32
    %c0_i32_1 = arith.constant 0 : i32
    return %c0_i32, %c0_i32_0 : i32, i32
  }
  func.func @transform_5(%arg0: i32) -> (i32, i32) {
    %c0_i32 = arith.constant 0 : i32
    %c0_i32_0 = arith.constant 0 : i32
    %c0_i32_1 = arith.constant 0 : i32
    return %c0_i32, %c0_i32_0 : i32, i32
  }
  func.func @transform_6(%arg0: i32) -> (i32, i32, i32) {
    %c0_i32 = arith.constant 0 : i32
    %c0_i32_0 = arith.constant 0 : i32
    %c0_i32_1 = arith.constant 0 : i32
    return %arg0, %c0_i32, %c0_i32_0 : i32, i32, i32
  }
}

</mosaic_0001>

<llo_original>
// kernel: tpu_custom_call.1
$region0: #{tpu_custom_call.1}
  #allocation0 [shape = 'u32[]', space=smem, size = 0x4, offset = 0x4, fixed_abs, tag = 'smem constant byte address 0x4 - core index']
  #allocation1 [shape = 'u32[144,128]{1,0:T(1,128)}', space=vmem, size = 0x12000, scoped, tag = 'internal scratch']
  %s0 = inlined_call_operand.hbm [shape: f32[8,8,64], index: 0, kind: input, shape index: {}]
  %s1 = inlined_call_operand.vmem [shape: bf16[2,64,384], index: 1, kind: input, shape index: {}]
  %s2 = inlined_call_operand.vmem [shape: bf16[2,128,64], index: 2, kind: input, shape index: {}]
  %s3 = inlined_call_operand.hbm [shape: f32[2,8,192], index: 3, kind: input, shape index: {}]
  %s4 = inlined_call_operand.hbm [shape: bf16[64,128], index: 4, kind: input, shape index: {}]
  %s5 = inlined_call_operand.vmem [shape: f32[1,128], index: 5, kind: input, shape index: {}]
  %s6 = inlined_call_operand.hbm [shape: f32[8,8,128], index: 6, kind: output, shape index: {}]
  %s7 = sld [smem:[#allocation0]]
  $region69: #{tpu_custom_call.1} parent=0
    _
  %s9 = ssub.s32 1, %s7
  %s10 = scalar_select 0, %s9, %s7
  $region1: #{tpu_custom_call.1} parent=0
    #allocation2 [shape = 'u8[8192]{0}', space=vmem, size = 0x2000, scoped, tag = 'input window, operand 0']
    #allocation3 [shape = 's32[2]{0}', space=sflag, size = 0x8, scoped, tag = 'scoped memory for tpu_custom_call.1']
    #allocation4 [shape = 's32[2]{0}', space=sflag, size = 0x8, scoped, tag = 'scoped memory for tpu_custom_call.1']
    #allocation5 [shape = 'u8[16384]{0}', space=vmem, size = 0x4000, scoped, tag = 'input window, operand 3, single buffered']
    #allocation6 [shape = 's32[1]{0}', space=sflag, size = 0x4, scoped, tag = 'scoped memory for tpu_custom_call.1']
    #allocation7 [shape = 'u8[16384]{0}', space=vmem, size = 0x4000, scoped, tag = 'input window, operand 4, single buffered']
    #allocation8 [shape = 'u8[8192]{0}', space=vmem, size = 0x2000, scoped, tag = 'output window, operand 0']
    %11 = vsyncpa [#allocation3], 0
    %s12 = scalar_lea.sflag [#allocation3], 1
    %13 = vsyncpa %s12, 0
    %14 = vsyncpa [#allocation6], 0
    %15 = vsyncpa [#allocation4], 0
    %s16 = scalar_lea.sflag [#allocation4], 1
    %17 = vsyncpa %s16, 0
    loop: start=0, step=1, limit=10
    $region2: #{tpu_custom_call.1} parent=1 // loop_pre_header
      _
    $region3: #{tpu_custom_call.1} parent=1 // loop_header
      %s19 = sphi 0, %s23
      %p20 = scmp.ge.s32.totalorder %s19, 10
      %s29 = sphi 0, %s31
      %s32 = sphi 0, %s29
      %s33 = sphi 0, %s32
      %s49 = sphi 0, %s33
      %s53 = sphi 0, %s53
      %s55 = sphi 0, %s53
      %s56 = sphi 0, %s55
      %s70 = sphi 0, %s56
      %s74 = sphi 0, %s74
      %s76 = sphi 0, %s74
      %s77 = sphi 0, %s76
      %s91 = sphi 0, %s77
      %s95 = sphi 0, %s95
      %s97 = sphi 0, %s95
      %s98 = sphi 0, %s97
      %s112 = sphi 0, %s98
      %s116 = sphi 0, %s116
      %s118 = sphi 0, %s116
      %s119 = sphi 0, %s118
      %s133 = sphi 0, %s119
      %s137 = sphi 0, %s137
      %s139 = sphi 0, %s137
      %s140 = sphi 0, %s139
      %s154 = sphi 0, %s140
      %s160 = sphi 0, %s162
      %s163 = sphi 0, %s160
      %s164 = sphi 0, %s163
      %s180 = sphi 0, %s164
    $region4: #{tpu_custom_call.1} parent=1 // loop_header_branch
      %22 = sbr.rel (%p20) target = $region8
    $region5: #{tpu_custom_call.1} parent=1 // loop_body
      %s24 = ssub.s32 %s19, 1
      %s25 = ssub.s32 %s19, 2
      %s26 = sadd.s32 %s19, 1
      %s27 = ssub.s32 %s19, %s26
      %p28 = scmp.eq.s32.totalorder %s27, 0
      %s30 = sadd.s32 %s29, 1
      %s31 = scalar_select %p28, %s29, %s30
      %p34 = pneg %p28
      %p35 = scmp.eq.s32.totalorder %s19, 7
      %p36 = por %p34, %p35
      %p37 = scmp.ne.s32.totalorder %s29, %s32
      %p38 = scmp.eq.s32.totalorder %s19, 0
      %p39 = por %p37, %p38
      %p40 = scmp.ne.s32.totalorder %s29, %s32
      %p41 = scmp.eq.s32.totalorder %s24, 7
      %p42 = por %p40, %p41
      %p43 = scmp.ne.s32.totalorder %s32, %s33
      %p44 = scmp.eq.s32.totalorder %s24, 0
      %p45 = por %p43, %p44
      %p46 = scmp.ne.s32.totalorder %s32, %s33
      %p47 = scmp.eq.s32.totalorder %s25, 7
      %p48 = por %p46, %p47
      %p50 = scmp.ne.s32.totalorder %s33, %s49
      %p51 = scmp.eq.s32.totalorder %s25, 0
      %p52 = por %p50, %p51
      %s54 = sadd.s32 %s53, 1
      %p57 = scmp.eq.s32.totalorder %s19, 7
      %p58 = scmp.ne.s32.totalorder %s53, %s55
      %p59 = scmp.eq.s32.totalorder %s19, 0
      %p60 = por %p58, %p59
      %p61 = scmp.ne.s32.totalorder %s53, %s55
      %p62 = scmp.eq.s32.totalorder %s24, 7
      %p63 = por %p61, %p62
      %p64 = scmp.ne.s32.totalorder %s55, %s56
      %p65 = scmp.eq.s32.totalorder %s24, 0
      %p66 = por %p64, %p65
      %p67 = scmp.ne.s32.totalorder %s55, %s56
      %p68 = scmp.eq.s32.totalorder %s25, 7
      %p69 = por %p67, %p68
      %p71 = scmp.ne.s32.totalorder %s56, %s70
      %p72 = scmp.eq.s32.totalorder %s25, 0
      %p73 = por %p71, %p72
      %s75 = sadd.s32 %s74, 1
      %p78 = scmp.eq.s32.totalorder %s19, 7
      %p79 = scmp.ne.s32.totalorder %s74, %s76
      %p80 = scmp.eq.s32.totalorder %s19, 0
      %p81 = por %p79, %p80
      %p82 = scmp.ne.s32.totalorder %s74, %s76
      %p83 = scmp.eq.s32.totalorder %s24, 7
      %p84 = por %p82, %p83
      %p85 = scmp.ne.s32.totalorder %s76, %s77
      %p86 = scmp.eq.s32.totalorder %s24, 0
      %p87 = por %p85, %p86
      %p88 = scmp.ne.s32.totalorder %s76, %s77
      %p89 = scmp.eq.s32.totalorder %s25, 7
      %p90 = por %p88, %p89
      %p92 = scmp.ne.s32.totalorder %s77, %s91
      %p93 = scmp.eq.s32.totalorder %s25, 0
      %p94 = por %p92, %p93
      %s96 = sadd.s32 %s95, 1
      %p99 = scmp.eq.s32.totalorder %s19, 7
      %p100 = scmp.ne.s32.totalorder %s95, %s97
      %p101 = scmp.eq.s32.totalorder %s19, 0
      %p102 = por %p100, %p101
      %p103 = scmp.ne.s32.totalorder %s95, %s97
      %p104 = scmp.eq.s32.totalorder %s24, 7
      %p105 = por %p103, %p104
      %p106 = scmp.ne.s32.totalorder %s97, %s98
      %p107 = scmp.eq.s32.totalorder %s24, 0
      %p108 = por %p106, %p107
      %p109 = scmp.ne.s32.totalorder %s97, %s98
      %p110 = scmp.eq.s32.totalorder %s25, 7
      %p111 = por %p109, %p110
      %p113 = scmp.ne.s32.totalorder %s98, %s112
      %p114 = scmp.eq.s32.totalorder %s25, 0
      %p115 = por %p113, %p114
      %s117 = sadd.s32 %s116, 1
      %p120 = scmp.eq.s32.totalorder %s19, 7
      %p121 = scmp.ne.s32.totalorder %s116, %s118
      %p122 = scmp.eq.s32.totalorder %s19, 0
      %p123 = por %p121, %p122
      %p124 = scmp.ne.s32.totalorder %s116, %s118
      %p125 = scmp.eq.s32.totalorder %s24, 7
      %p126 = por %p124, %p125
      %p127 = scmp.ne.s32.totalorder %s118, %s119
      %p128 = scmp.eq.s32.totalorder %s24, 0
      %p129 = por %p127, %p128
      %p130 = scmp.ne.s32.totalorder %s118, %s119
      %p131 = scmp.eq.s32.totalorder %s25, 7
      %p132 = por %p130, %p131
      %p134 = scmp.ne.s32.totalorder %s119, %s133
      %p135 = scmp.eq.s32.totalorder %s25, 0
      %p136 = por %p134, %p135
      %s138 = sadd.s32 %s137, 1
      %p141 = scmp.eq.s32.totalorder %s19, 7
      %p142 = scmp.ne.s32.totalorder %s137, %s139
      %p143 = scmp.eq.s32.totalorder %s19, 0
      %p144 = por %p142, %p143
      %p145 = scmp.ne.s32.totalorder %s137, %s139
      %p146 = scmp.eq.s32.totalorder %s24, 7
      %p147 = por %p145, %p146
      %p148 = scmp.ne.s32.totalorder %s139, %s140
      %p149 = scmp.eq.s32.totalorder %s24, 0
      %p150 = por %p148, %p149
      %p151 = scmp.ne.s32.totalorder %s139, %s140
      %p152 = scmp.eq.s32.totalorder %s25, 7
      %p153 = por %p151, %p152
      %p155 = scmp.ne.s32.totalorder %s140, %s154
      %p156 = scmp.eq.s32.totalorder %s25, 0
      %p157 = por %p155, %p156
      %s158 = ssub.s32 %s19, %s26
      %p159 = scmp.eq.s32.totalorder %s158, 0
      %s161 = sadd.s32 %s160, 1
      %s162 = scalar_select %p159, %s160, %s161
      %p165 = pneg %p159
      %p166 = scmp.eq.s32.totalorder %s19, 7
      %p167 = por %p165, %p166
      %p168 = scmp.ne.s32.totalorder %s160, %s163
      %p169 = scmp.eq.s32.totalorder %s19, 0
      %p170 = por %p168, %p169
      %p171 = scmp.ne.s32.totalorder %s160, %s163
      %p172 = scmp.eq.s32.totalorder %s24, 7
      %p173 = por %p171, %p172
      %p174 = scmp.ne.s32.totalorder %s163, %s164
      %p175 = scmp.eq.s32.totalorder %s24, 0
      %p176 = por %p174, %p175
      %p177 = scmp.ne.s32.totalorder %s163, %s164
      %p178 = scmp.eq.s32.totalorder %s25, 7
      %p179 = por %p177, %p178
      %p181 = scmp.ne.s32.totalorder %s164, %s180
      %p182 = scmp.eq.s32.totalorder %s25, 0
      %p183 = por %p181, %p182
      %p184 = scmp.le.s32.totalorder 1, %s19
      %p185 = scmp.lt.s32.totalorder %s19, 9
      %p186 = pnand %p184, %p185
      %p187 = pneg %p186
      // Predicated region
      $region9: #{tpu_custom_call.1} parent=5 // pred_check
        _
      $region10: #{tpu_custom_call.1} parent=5 // pred_check_branch
        %189 = sbr.rel (%p186) target = $region12
      $region11: #{tpu_custom_call.1} parent=5 // pred_region
        %s190 = ssub.s32 %s19, 1
        // Predicated region
        $region13: #{tpu_custom_call.1} parent=11 // pred_check
          %p191 = pneg %p66
        $region14: #{tpu_custom_call.1} parent=11 // pred_check_branch
          %193 = sbr.rel (%p191) target = $region16
        $region15: #{tpu_custom_call.1} parent=11 // pred_region
          _
        $region16: #{tpu_custom_call.1} parent=11 // pred_fallthru
          _
        // Predicated region
        $region17: #{tpu_custom_call.1} parent=11 // pred_check
          %p194 = pneg %p87
        $region18: #{tpu_custom_call.1} parent=11 // pred_check_branch
          %196 = sbr.rel (%p194) target = $region20
        $region19: #{tpu_custom_call.1} parent=11 // pred_region
          _
        $region20: #{tpu_custom_call.1} parent=11 // pred_fallthru
          _
        // Predicated region
        $region21: #{tpu_custom_call.1} parent=11 // pred_check
          %p197 = pneg %p108
        $region22: #{tpu_custom_call.1} parent=11 // pred_check_branch
          %199 = sbr.rel (%p197) target = $region24
        $region23: #{tpu_custom_call.1} parent=11 // pred_region
          %s201 = ssub.s32 512, 512
          %202 = vsyncadd [#allocation6], %s201
          %s203 = sshll.u32 [#allocation5], 4
          %s204 = int_to_ptr.vmem [resolvable:$true] %s203
          %209 = dma.hbm_to_vmem [thread:$0]  %s3, 512, %s204, [#allocation6], 256, 256, 16
        $region24: #{tpu_custom_call.1} parent=11 // pred_fallthru
          _
        // Predicated region
        $region25: #{tpu_custom_call.1} parent=11 // pred_check
          %p210 = pneg %p129
        $region26: #{tpu_custom_call.1} parent=11 // pred_check_branch
          %212 = sbr.rel (%p210) target = $region28
        $region27: #{tpu_custom_call.1} parent=11 // pred_region
          %s214 = ssub.s32 512, 512
          %215 = vsyncadd [#allocation6], %s214
          %s216 = sshll.u32 [#allocation7], 4
          %s217 = int_to_ptr.vmem [resolvable:$true] %s216
          %222 = dma.hbm_to_vmem [thread:$0]  %s4, 512, %s217, [#allocation6], 64, 64, 4
        $region28: #{tpu_custom_call.1} parent=11 // pred_fallthru
          _
        // Predicated region
        $region29: #{tpu_custom_call.1} parent=11 // pred_check
          %p223 = pneg %p150
        $region30: #{tpu_custom_call.1} parent=11 // pred_check_branch
          %225 = sbr.rel (%p223) target = $region32
        $region31: #{tpu_custom_call.1} parent=11 // pred_region
          _
        $region32: #{tpu_custom_call.1} parent=11 // pred_fallthru
          _
      $region12: #{tpu_custom_call.1} parent=5 // pred_fallthru
        _
      %p226 = scmp.lt.s32.totalorder %s19, 8
      // Predicated region
      $region33: #{tpu_custom_call.1} parent=5 // pred_check
        %p227 = pneg %p226
      $region34: #{tpu_custom_call.1} parent=5 // pred_check_branch
        %229 = sbr.rel (%p227) target = $region36
      $region35: #{tpu_custom_call.1} parent=5 // pred_region
        // Predicated region
        $region37: #{tpu_custom_call.1} parent=35 // pred_check
          %p230 = pneg %p39
        $region38: #{tpu_custom_call.1} parent=35 // pred_check_branch
          %232 = sbr.rel (%p230) target = $region40
        $region39: #{tpu_custom_call.1} parent=35 // pred_region
          %s233 = sand.u32 %s29, 1
          %s234 = scalar_lea.sflag [#allocation3], %s233
          %s235 = sand.u32 %s29, 1
          %s236 = smul.addr %s235, 8
          %s237 = scalar_lea.vmem [#allocation2], %s236
          %s239 = ssub.s32 128, 128
          %240 = vsyncadd %s234, %s239
          %s241 = smul.addr %s19, 128
          %s242 = scalar_lea.hbm %s0, %s241
          %s244 = sshll.u32 %s237, 4
          %s245 = int_to_ptr.vmem [resolvable:$true] %s244
          %247 = dma.hbm_to_vmem [thread:$0]  %s242, 128, %s245, %s234
        $region40: #{tpu_custom_call.1} parent=35 // pred_fallthru
          _
      $region36: #{tpu_custom_call.1} parent=5 // pred_fallthru
        _
      %p248 = scmp.le.s32.totalorder 1, %s19
      %p249 = scmp.lt.s32.totalorder %s19, 9
      %p250 = pnand %p248, %p249
      %p251 = pneg %p250
      // Predicated region
      $region41: #{tpu_custom_call.1} parent=5 // pred_check
        _
      $region42: #{tpu_custom_call.1} parent=5 // pred_check_branch
        %253 = sbr.rel (%p250) target = $region44
      $region43: #{tpu_custom_call.1} parent=5 // pred_region
        %s254 = ssub.s32 %s19, 1
        %s255 = sand.u32 %s32, 1
        %s256 = scalar_lea.sflag [#allocation3], %s255
        %s257 = sand.u32 %s32, 1
        %s258 = smul.addr %s257, 8
        %s259 = scalar_lea.vmem [#allocation2], %s258
        // Predicated region
        $region45: #{tpu_custom_call.1} parent=43 // pred_check
          %p260 = pneg %p45
        $region46: #{tpu_custom_call.1} parent=43 // pred_check_branch
          %262 = sbr.rel (%p260) target = $region48
        $region47: #{tpu_custom_call.1} parent=43 // pred_region
          %263 = dma.done %s256, 128
        $region48: #{tpu_custom_call.1} parent=43 // pred_fallthru
          _
        // Predicated region
        $region49: #{tpu_custom_call.1} parent=43 // pred_check
          %p264 = pneg %p108
        $region50: #{tpu_custom_call.1} parent=43 // pred_check_branch
          %266 = sbr.rel (%p264) target = $region52
        $region51: #{tpu_custom_call.1} parent=43 // pred_region
          %267 = dma.done [#allocation6], 512
        $region52: #{tpu_custom_call.1} parent=43 // pred_fallthru
          _
        // Predicated region
        $region53: #{tpu_custom_call.1} parent=43 // pred_check
          %p268 = pneg %p129
        $region54: #{tpu_custom_call.1} parent=43 // pred_check_branch
          %270 = sbr.rel (%p268) target = $region56
        $region55: #{tpu_custom_call.1} parent=43 // pred_region
          %271 = dma.done [#allocation6], 512
        $region56: #{tpu_custom_call.1} parent=43 // pred_fallthru
          _
        %s272 = sand.u32 %s32, 1
        %s273 = scalar_lea.sflag [#allocation3], %s272
        %s274 = sand.u32 %s32, 1
        %s275 = smul.addr %s274, 8
        %s276 = scalar_lea.vmem [#allocation2], %s275
        %p277 = pneg %p45
        %p278 = pneg %p42
        %p279 = pneg %p66
        %p280 = pneg %p63
        %p281 = pneg %p87
        %p282 = pneg %p84
        %p283 = pneg %p108
        %p284 = pneg %p105
        %p285 = pneg %p129
        %p286 = pneg %p126
        %p287 = pneg %p150
        %p288 = pneg %p147
        %p289 = pneg %p176
        %p290 = pneg %p173
        %s291 = sand.u32 %s163, 1
        %s292 = scalar_lea.sflag [#allocation4], %s291
        %s293 = sand.u32 %s163, 1
        %s294 = smul.addr %s293, 8
        %s295 = scalar_lea.vmem [#allocation8], %s294
        %v297 = vld [vmem:[%s259] sm:$0xff]
        %v298 = vld [vmem:[%s1] sm:$0xff]
        %v299 = vld [vmem:[%s1 + $0x8] sm:$0xf]
        %v300 = vld [vmem:[%s1 + $0xc] sm:$0xff]
        %v301 = vld [vmem:[%s1 + $0x14] sm:$0xf]
        %v302 = vld [vmem:[%s1 + $0x18] sm:$0xff]
        %v303 = vld [vmem:[%s1 + $0x20] sm:$0xf]
        %v304 = vld [vmem:[%s1 + $0x24] sm:$0xff]
        %v305 = vld [vmem:[%s1 + $0x2c] sm:$0xf]
        %v306 = vld [vmem:[%s1 + $0x30] sm:$0xff]
        %v307 = vld [vmem:[%s1 + $0x38] sm:$0xf]
        %v308 = vld [vmem:[%s1 + $0x3c] sm:$0xff]
        %v309 = vld [vmem:[%s1 + $0x44] sm:$0xf]
        %v310 = vld [vmem:[%s1 + $0x48] sm:$0xff]
        %v311 = vld [vmem:[%s1 + $0x50] sm:$0xf]
        %v312 = vld [vmem:[%s1 + $0x54] sm:$0xff]
        %v313 = vld [vmem:[%s1 + $0x5c] sm:$0xf]
        %v314 = vld [vmem:[%s2] sm:$0xf]
        %v315 = vld [vmem:[%s2 + $0x4] sm:$0xf]
        %v316 = vld [vmem:[%s2 + $0x8] sm:$0xf]
        %v317 = vld [vmem:[%s2 + $0xc] sm:$0xf]
        %v318 = vld [vmem:[%s2 + $0x10] sm:$0xf]
        %v319 = vld [vmem:[%s2 + $0x14] sm:$0xf]
        %v320 = vld [vmem:[%s2 + $0x18] sm:$0xf]
        %v321 = vld [vmem:[%s2 + $0x1c] sm:$0xf]
        %v322 = vld [vmem:[%s2 + $0x20] sm:$0xf]
        %v323 = vld [vmem:[%s2 + $0x24] sm:$0xf]
        %v324 = vld [vmem:[%s2 + $0x28] sm:$0xf]
        %v325 = vld [vmem:[%s2 + $0x2c] sm:$0xf]
        %v326 = vld [vmem:[%s2 + $0x30] sm:$0xf]
        %v327 = vld [vmem:[%s2 + $0x34] sm:$0xf]
        %v328 = vld [vmem:[%s2 + $0x38] sm:$0xf]
        %v329 = vld [vmem:[%s2 + $0x3c] sm:$0xf]
        %v330 = vld [vmem:[#allocation5] sm:$0xff]
        %v331 = vld [vmem:[#allocation5 + $0x8] sm:$0xff]
        %v332 = vpack.c.bf16 %v297, %v297
        %v333 = vlaneseq
        %v334 = vshrl.u32 %v333, 7
        %v335 = vsub.s32 0, %v334
        %v336 = vrot.slane %v330, %v335
        %v337 = vlaneseq
        %v338 = vshrl.u32 %v337, 7
        %v339 = vsub.s32 0, %v338
        %v340 = vrot.slane %v331, %v339
        %v349 = vunpack.c.l.b16 %v298
        %v350 = vunpack.c.h.b16 %v298
        %v351 = vunpack.c.l.b16 %v300
        %v352 = vunpack.c.h.b16 %v300
        %v353 = vunpack.c.l.b16 %v302
        %v354 = vunpack.c.h.b16 %v302
        %v355 = vunpack.c.l.b16 %v304
        %v356 = vunpack.c.h.b16 %v304
        %v357 = vunpack.c.l.b16 %v306
        %v358 = vunpack.c.h.b16 %v306
        %v359 = vunpack.c.l.b16 %v308
        %v360 = vunpack.c.h.b16 %v308
        %v361 = vunpack.c.l.b16 %v310
        %v362 = vunpack.c.h.b16 %v310
        %v363 = vunpack.c.l.b16 %v312
        %v364 = vunpack.c.h.b16 %v312
        %v365 = vpack.c.b16 %v351, %v349
        %v366 = vpack.c.b16 %v352, %v350
        %v367 = vpack.c.b16 %v355, %v353
        %v368 = vpack.c.b16 %v356, %v354
        %v369 = vpack.c.b16 %v359, %v357
        %v370 = vpack.c.b16 %v360, %v358
        %v371 = vpack.c.b16 %v363, %v361
        %v372 = vpack.c.b16 %v364, %v362
        %vm381 = vcmask 523264
        %v383 = vsel %vm381, %v332, 0
        %385 = vmatprep.subr.bf16.mxu0 %v366
        %386 = vmatpush1.bf16.msra.mxu0 %v365
        %387 = vmatprep.subr.bf16.mxu0 %v368
        %388 = vmatpush1.bf16.msra.mxu0 %v367
        %389 = vmatprep.subr.bf16.mxu0 %v370
        %390 = vmatpush1.bf16.msra.mxu0 %v369
        %391 = vmatprep.subr.bf16.mxu0 %v372
        %392 = vmatpush1.bf16.msra.mxu0 %v371
        %393 = vmatprep.subr.bf16.mxu0 0
        %394 = vmatpush1.bf16.msra.mxu0 0
        %395 = vmatprep.subr.bf16.mxu0 0
        %396 = vmatpush1.bf16.msra.mxu0 0
        %397 = vmatprep.subr.bf16.mxu0 0
        %398 = vmatpush1.bf16.msra.mxu0 0
        %399 = vmatprep.subr.bf16.mxu0 0
        %400 = vmatpush1.bf16.msra.mxu0 0
        %401 = vmatprep.subr.bf16.mxu0 0
        %402 = vmatpush1.bf16.msra.mxu0 0
        %403 = vmatprep.subr.bf16.mxu0 0
        %404 = vmatpush1.bf16.msra.mxu0 0
        %405 = vmatprep.subr.bf16.mxu0 0
        %406 = vmatpush1.bf16.msra.mxu0 0
        %407 = vmatprep.subr.bf16.mxu0 0
        %408 = vmatpush1.bf16.msra.mxu0 0
        %409 = vmatprep.subr.bf16.mxu0 0
        %410 = vmatpush1.bf16.msra.mxu0 0
        %411 = vmatprep.subr.bf16.mxu0 0
        %412 = vmatpush1.bf16.msra.mxu0 0
        %413 = vmatprep.subr.bf16.mxu0 0
        %414 = vmatpush1.bf16.msra.mxu0 0
        %415 = vmatprep.subr.bf16.mxu0 0
        %416 = vmatpush1.bf16.msra.mxu0 0
        %417 = vmatprep.mubr.bf16.mxu0 0
        %418 = vmatmul.mubr.bf16.gmra.mrb[0].mxu0 %v383
        %v419 = vpop.f32.mrb[0].mxu0
        %v420 = vadd.f32 %v336, %v419
        %v421 = vpop.f32.mrb[0].mxu0
        %v422 = vadd.f32 %v340, %v421
        %v423 = vpop.f32.mrb[0].mxu0
        %v424 = vpop.f32.mrb[0].mxu0
        %425 = vdwg.mxu0
        %427 = vrot.lane.b32.xlu0 %v420, 64
        %v428 = vpop.permute.xlu0 %427
        %vm429 = vcmask 130048
        %v430 = vsel %vm429, %v420, 0
        %v432 = vsel %vm429, %v428, 0
        %434 = vmatprep.subr.mxu0 0.0
        %435 = vmatpush1.xpose.msra.mxu0 %v432
        %436 = vmatprep.subr.mxu0 0.0
        %437 = vmatpush1.xpose.msra.mxu0 0.0
        %438 = vmatprep.subr.mxu0 0.0
        %439 = vmatpush1.xpose.msra.mxu0 0.0
        %440 = vmatprep.subr.mxu0 0.0
        %441 = vmatpush1.xpose.msra.mxu0 0.0
        %442 = vmatprep.subr.mxu0 0.0
        %443 = vmatpush1.xpose.msra.mxu0 0.0
        %444 = vmatprep.subr.mxu0 0.0
        %445 = vmatpush1.xpose.msra.mxu0 0.0
        %446 = vmatprep.subr.mxu0 0.0
        %447 = vmatpush1.xpose.msra.mxu0 0.0
        %448 = vmatprep.subr.mxu0 0.0
        %449 = vmatpush1.xpose.msra.mxu0 0.0
        %450 = vmatprep.subr.mxu0 0.0
        %451 = vmatpush1.xpose.msra.mxu0 0.0
        %452 = vmatprep.subr.mxu0 0.0
        %453 = vmatpush1.xpose.msra.mxu0 0.0
        %454 = vmatprep.subr.mxu0 0.0
        %455 = vmatpush1.xpose.msra.mxu0 0.0
        %456 = vmatprep.subr.mxu0 0.0
        %457 = vmatpush1.xpose.msra.mxu0 0.0
        %458 = vmatprep.subr.mxu0 0.0
        %459 = vmatpush1.xpose.msra.mxu0 0.0
        %460 = vmatprep.subr.mxu0 0.0
        %461 = vmatpush1.xpose.msra.mxu0 0.0
        %462 = vmatprep.subr.mxu0 0.0
        %463 = vmatpush1.xpose.msra.mxu0 0.0
        %464 = vmatprep.subr.mxu0 0.0
        %465 = vmatpush1.xpose.msra.mxu0 0.0
        %466 = vmatprep.subr.mxu0 0.0
        %467 = vmatpush1.xpose.msra.mxu0 0.0
        %468 = vmatprep.subr.mxu0 0.0
        %469 = vmatpush1.xpose.msra.mxu0 0.0
        %470 = vmatprep.subr.mxu0 0.0
        %471 = vmatpush1.xpose.msra.mxu0 0.0
        %472 = vmatprep.subr.mxu0 0.0
        %473 = vmatpush1.xpose.msra.mxu0 0.0
        %474 = vmatprep.subr.mxu0 0.0
        %475 = vmatpush1.xpose.msra.mxu0 0.0
        %476 = vmatprep.subr.mxu0 0.0
        %477 = vmatpush1.xpose.msra.mxu0 0.0
        %478 = vmatprep.subr.mxu0 0.0
        %479 = vmatpush1.xpose.msra.mxu0 0.0
        %480 = vmatprep.subr.mxu0 0.0
        %481 = vmatpush1.xpose.msra.mxu0 0.0
        %482 = vmatprep.subr.mxu0 0.0
        %483 = vmatpush1.xpose.msra.mxu0 0.0
        %484 = vmatprep.subr.mxu0 0.0
        %485 = vmatpush1.xpose.msra.mxu0 0.0
        %486 = vmatprep.subr.mxu0 0.0
        %487 = vmatpush1.xpose.msra.mxu0 0.0
        %488 = vmatprep.subr.mxu0 0.0
        %489 = vmatpush1.xpose.msra.mxu0 0.0
        %490 = vmatprep.subr.mxu0 0.0
        %491 = vmatpush1.xpose.msra.mxu0 0.0
        %492 = vmatprep.subr.mxu0 0.0
        %493 = vmatpush1.xpose.msra.mxu0 0.0
        %494 = vmatprep.subr.mxu0 0.0
        %495 = vmatpush1.xpose.msra.mxu0 0.0
        %496 = vmatprep.subr.mxu0 0.0
        %497 = vmatpush1.xpose.msra.mxu0 0.0
        %498 = vmatprep.mubr.f32.mxu0 0.0
        %499 = vmatmul.mubr.f32.gmra.mrb[0].mxu0 %v430
        %v500 = vpop.f32.mrb[0].mxu0
        %v501 = vadd.f32 0.0, %v500
        %v502 = vpop.f32.mrb[0].mxu0
        %503 = vdwg.mxu0
        %v504 = vmul.f32 %v501, 0.25
        %vm505 = vcmask 64512
        %v506 = vsel %vm505, %v504, -inf
        %507 = vmax.xlane.f32.xlu0 %v506
        %v508 = vpop.xlane.xlu0 %507
        %v509 = vsub.f32 %v504, %v508
        %v510 = vmul.f32 %v509, 1.442695
        %v511 = vpow.pop %v510
        %v512 = vsel %vm505, %v511, 0.0
        %513 = vadd.xlane.f32.xlu0 %v512
        %v514 = vpop.xlane.xlu0 %513
        %v515 = vrcp.pop %v514
        %v516 = vmul.f32 %v511, %v515
        %v518 = vsel %vm505, %v516, 0
        %520 = vmatprep.subr.mxu0 0.0
        %521 = vmatpush1.msra.mxu0 %v422
        %522 = vmatprep.subr.mxu0 0.0
        %523 = vmatpush1.msra.mxu0 0.0
        %524 = vmatprep.subr.mxu0 0.0
        %525 = vmatpush1.msra.mxu0 0.0
        %526 = vmatprep.subr.mxu0 0.0
        %527 = vmatpush1.msra.mxu0 0.0
        %528 = vmatprep.subr.mxu0 0.0
        %529 = vmatpush1.msra.mxu0 0.0
        %530 = vmatprep.subr.mxu0 0.0
        %531 = vmatpush1.msra.mxu0 0.0
        %532 = vmatprep.subr.mxu0 0.0
        %533 = vmatpush1.msra.mxu0 0.0
        %534 = vmatprep.subr.mxu0 0.0
        %535 = vmatpush1.msra.mxu0 0.0
        %536 = vmatprep.subr.mxu0 0.0
        %537 = vmatpush1.msra.mxu0 0.0
        %538 = vmatprep.subr.mxu0 0.0
        %539 = vmatpush1.msra.mxu0 0.0
        %540 = vmatprep.subr.mxu0 0.0
        %541 = vmatpush1.msra.mxu0 0.0
        %542 = vmatprep.subr.mxu0 0.0
        %543 = vmatpush1.msra.mxu0 0.0
        %544 = vmatprep.subr.mxu0 0.0
        %545 = vmatpush1.msra.mxu0 0.0
        %546 = vmatprep.subr.mxu0 0.0
        %547 = vmatpush1.msra.mxu0 0.0
        %548 = vmatprep.subr.mxu0 0.0
        %549 = vmatpush1.msra.mxu0 0.0
        %550 = vmatprep.subr.mxu0 0.0
        %551 = vmatpush1.msra.mxu0 0.0
        %552 = vmatprep.subr.mxu0 0.0
        %553 = vmatpush1.msra.mxu0 0.0
        %554 = vmatprep.subr.mxu0 0.0
        %555 = vmatpush1.msra.mxu0 0.0
        %556 = vmatprep.subr.mxu0 0.0
        %557 = vmatpush1.msra.mxu0 0.0
        %558 = vmatprep.subr.mxu0 0.0
        %559 = vmatpush1.msra.mxu0 0.0
        %560 = vmatprep.subr.mxu0 0.0
        %561 = vmatpush1.msra.mxu0 0.0
        %562 = vmatprep.subr.mxu0 0.0
        %563 = vmatpush1.msra.mxu0 0.0
        %564 = vmatprep.subr.mxu0 0.0
        %565 = vmatpush1.msra.mxu0 0.0
        %566 = vmatprep.subr.mxu0 0.0
        %567 = vmatpush1.msra.mxu0 0.0
        %568 = vmatprep.subr.mxu0 0.0
        %569 = vmatpush1.msra.mxu0 0.0
        %570 = vmatprep.subr.mxu0 0.0
        %571 = vmatpush1.msra.mxu0 0.0
        %572 = vmatprep.subr.mxu0 0.0
        %573 = vmatpush1.msra.mxu0 0.0
        %574 = vmatprep.subr.mxu0 0.0
        %575 = vmatpush1.msra.mxu0 0.0
        %576 = vmatprep.subr.mxu0 0.0
        %577 = vmatpush1.msra.mxu0 0.0
        %578 = vmatprep.subr.mxu0 0.0
        %579 = vmatpush1.msra.mxu0 0.0
        %580 = vmatprep.subr.mxu0 0.0
        %581 = vmatpush1.msra.mxu0 0.0
        %582 = vmatprep.subr.mxu0 0.0
        %583 = vmatpush1.msra.mxu0 0.0
        %584 = vmatprep.mubr.f32.mxu0 0.0
        %585 = vmatmul.mubr.f32.gmra.mrb[0].mxu0 %v518
        %v586 = vpop.f32.mrb[0].mxu0
        %v587 = vadd.f32 0.0, %v586
        %v588 = vpop.f32.mrb[0].mxu0
        %589 = vdwg.mxu0
        %590 = vrot.lane.b32.xlu0 %v420, 112
        %v591 = vpop.permute.xlu0 %590
        %592 = vrot.lane.b32.xlu0 %v420, 48
        %v593 = vpop.permute.xlu0 %592
        %v594 = vsel %vm429, %v591, 0
        %v596 = vsel %vm429, %v593, 0
        %598 = vmatprep.subr.mxu0 0.0
        %599 = vmatpush1.xpose.msra.mxu0 %v596
        %600 = vmatprep.subr.mxu0 0.0
        %601 = vmatpush1.xpose.msra.mxu0 0.0
        %602 = vmatprep.subr.mxu0 0.0
        %603 = vmatpush1.xpose.msra.mxu0 0.0
        %604 = vmatprep.subr.mxu0 0.0
        %605 = vmatpush1.xpose.msra.mxu0 0.0
        %606 = vmatprep.subr.mxu0 0.0
        %607 = vmatpush1.xpose.msra.mxu0 0.0
        %608 = vmatprep.subr.mxu0 0.0
        %609 = vmatpush1.xpose.msra.mxu0 0.0
        %610 = vmatprep.subr.mxu0 0.0
        %611 = vmatpush1.xpose.msra.mxu0 0.0
        %612 = vmatprep.subr.mxu0 0.0
        %613 = vmatpush1.xpose.msra.mxu0 0.0
        %614 = vmatprep.subr.mxu0 0.0
        %615 = vmatpush1.xpose.msra.mxu0 0.0
        %616 = vmatprep.subr.mxu0 0.0
        %617 = vmatpush1.xpose.msra.mxu0 0.0
        %618 = vmatprep.subr.mxu0 0.0
        %619 = vmatpush1.xpose.msra.mxu0 0.0
        %620 = vmatprep.subr.mxu0 0.0
        %621 = vmatpush1.xpose.msra.mxu0 0.0
        %622 = vmatprep.subr.mxu0 0.0
        %623 = vmatpush1.xpose.msra.mxu0 0.0
        %624 = vmatprep.subr.mxu0 0.0
        %625 = vmatpush1.xpose.msra.mxu0 0.0
        %626 = vmatprep.subr.mxu0 0.0
        %627 = vmatpush1.xpose.msra.mxu0 0.0
        %628 = vmatprep.subr.mxu0 0.0
        %629 = vmatpush1.xpose.msra.mxu0 0.0
        %630 = vmatprep.subr.mxu0 0.0
        %631 = vmatpush1.xpose.msra.mxu0 0.0
        %632 = vmatprep.subr.mxu0 0.0
        %633 = vmatpush1.xpose.msra.mxu0 0.0
        %634 = vmatprep.subr.mxu0 0.0
        %635 = vmatpush1.xpose.msra.mxu0 0.0
        %636 = vmatprep.subr.mxu0 0.0
        %637 = vmatpush1.xpose.msra.mxu0 0.0
        %638 = vmatprep.subr.mxu0 0.0
        %639 = vmatpush1.xpose.msra.mxu0 0.0
        %640 = vmatprep.subr.mxu0 0.0
        %641 = vmatpush1.xpose.msra.mxu0 0.0
        %642 = vmatprep.subr.mxu0 0.0
        %643 = vmatpush1.xpose.msra.mxu0 0.0
        %644 = vmatprep.subr.mxu0 0.0
        %645 = vmatpush1.xpose.msra.mxu0 0.0
        %646 = vmatprep.subr.mxu0 0.0
        %647 = vmatpush1.xpose.msra.mxu0 0.0
        %648 = vmatprep.subr.mxu0 0.0
        %649 = vmatpush1.xpose.msra.mxu0 0.0
        %650 = vmatprep.subr.mxu0 0.0
        %651 = vmatpush1.xpose.msra.mxu0 0.0
        %652 = vmatprep.subr.mxu0 0.0
        %653 = vmatpush1.xpose.msra.mxu0 0.0
        %654 = vmatprep.subr.mxu0 0.0
        %655 = vmatpush1.xpose.msra.mxu0 0.0
        %656 = vmatprep.subr.mxu0 0.0
        %657 = vmatpush1.xpose.msra.mxu0 0.0
        %658 = vmatprep.subr.mxu0 0.0
        %659 = vmatpush1.xpose.msra.mxu0 0.0
        %660 = vmatprep.subr.mxu0 0.0
        %661 = vmatpush1.xpose.msra.mxu0 0.0
        %662 = vmatprep.mubr.f32.mxu0 0.0
        %663 = vmatmul.mubr.f32.gmra.mrb[0].mxu0 %v594
        %v664 = vpop.f32.mrb[0].mxu0
        %v665 = vadd.f32 0.0, %v664
        %v666 = vpop.f32.mrb[0].mxu0
        %667 = vdwg.mxu0
        %v668 = vmul.f32 %v665, 0.25
        %v669 = vsel %vm505, %v668, -inf
        %670 = vmax.xlane.f32.xlu0 %v669
        %v671 = vpop.xlane.xlu0 %670
        %v672 = vsub.f32 %v668, %v671
        %v673 = vmul.f32 %v672, 1.442695
        %v674 = vpow.pop %v673
        %v675 = vsel %vm505, %v674, 0.0
        %676 = vadd.xlane.f32.xlu0 %v675
        %v677 = vpop.xlane.xlu0 %676
        %v678 = vrcp.pop %v677
        %v679 = vmul.f32 %v674, %v678
        %681 = vrot.lane.b32.xlu0 %v422, 112
        %v682 = vpop.permute.xlu0 %681
        %v685 = vsel %vm505, %v679, 0
        %687 = vmatprep.subr.mxu0 0.0
        %688 = vmatpush1.msra.mxu0 %v682
        %689 = vmatprep.subr.mxu0 0.0
        %690 = vmatpush1.msra.mxu0 0.0
        %691 = vmatprep.subr.mxu0 0.0
        %692 = vmatpush1.msra.mxu0 0.0
        %693 = vmatprep.subr.mxu0 0.0
        %694 = vmatpush1.msra.mxu0 0.0
        %695 = vmatprep.subr.mxu0 0.0
        %696 = vmatpush1.msra.mxu0 0.0
        %697 = vmatprep.subr.mxu0 0.0
        %698 = vmatpush1.msra.mxu0 0.0
        %699 = vmatprep.subr.mxu0 0.0
        %700 = vmatpush1.msra.mxu0 0.0
        %701 = vmatprep.subr.mxu0 0.0
        %702 = vmatpush1.msra.mxu0 0.0
        %703 = vmatprep.subr.mxu0 0.0
        %704 = vmatpush1.msra.mxu0 0.0
        %705 = vmatprep.subr.mxu0 0.0
        %706 = vmatpush1.msra.mxu0 0.0
        %707 = vmatprep.subr.mxu0 0.0
        %708 = vmatpush1.msra.mxu0 0.0
        %709 = vmatprep.subr.mxu0 0.0
        %710 = vmatpush1.msra.mxu0 0.0
        %711 = vmatprep.subr.mxu0 0.0
        %712 = vmatpush1.msra.mxu0 0.0
        %713 = vmatprep.subr.mxu0 0.0
        %714 = vmatpush1.msra.mxu0 0.0
        %715 = vmatprep.subr.mxu0 0.0
        %716 = vmatpush1.msra.mxu0 0.0
        %717 = vmatprep.subr.mxu0 0.0
        %718 = vmatpush1.msra.mxu0 0.0
        %719 = vmatprep.subr.mxu0 0.0
        %720 = vmatpush1.msra.mxu0 0.0
        %721 = vmatprep.subr.mxu0 0.0
        %722 = vmatpush1.msra.mxu0 0.0
        %723 = vmatprep.subr.mxu0 0.0
        %724 = vmatpush1.msra.mxu0 0.0
        %725 = vmatprep.subr.mxu0 0.0
        %726 = vmatpush1.msra.mxu0 0.0
        %727 = vmatprep.subr.mxu0 0.0
        %728 = vmatpush1.msra.mxu0 0.0
        %729 = vmatprep.subr.mxu0 0.0
        %730 = vmatpush1.msra.mxu0 0.0
        %731 = vmatprep.subr.mxu0 0.0
        %732 = vmatpush1.msra.mxu0 0.0
        %733 = vmatprep.subr.mxu0 0.0
        %734 = vmatpush1.msra.mxu0 0.0
        %735 = vmatprep.subr.mxu0 0.0
        %736 = vmatpush1.msra.mxu0 0.0
        %737 = vmatprep.subr.mxu0 0.0
        %738 = vmatpush1.msra.mxu0 0.0
        %739 = vmatprep.subr.mxu0 0.0
        %740 = vmatpush1.msra.mxu0 0.0
        %741 = vmatprep.subr.mxu0 0.0
        %742 = vmatpush1.msra.mxu0 0.0
        %743 = vmatprep.subr.mxu0 0.0
        %744 = vmatpush1.msra.mxu0 0.0
        %745 = vmatprep.subr.mxu0 0.0
        %746 = vmatpush1.msra.mxu0 0.0
        %747 = vmatprep.subr.mxu0 0.0
        %748 = vmatpush1.msra.mxu0 0.0
        %749 = vmatprep.subr.mxu0 0.0
        %750 = vmatpush1.msra.mxu0 0.0
        %751 = vmatprep.mubr.f32.mxu0 0.0
        %752 = vmatmul.mubr.f32.gmra.mrb[0].mxu0 %v685
        %v753 = vpop.f32.mrb[0].mxu0
        %v754 = vadd.f32 0.0, %v753
        %v755 = vpop.f32.mrb[0].mxu0
        %756 = vdwg.mxu0
        %757 = vrot.lane.b32.xlu0 %v420, 96
        %v758 = vpop.permute.xlu0 %757
        %759 = vrot.lane.b32.xlu0 %v420, 32
        %v760 = vpop.permute.xlu0 %759
        %v761 = vsel %vm429, %v758, 0
        %v763 = vsel %vm429, %v760, 0
        %765 = vmatprep.subr.mxu0 0.0
        %766 = vmatpush1.xpose.msra.mxu0 %v763
        %767 = vmatprep.subr.mxu0 0.0
        %768 = vmatpush1.xpose.msra.mxu0 0.0
        %769 = vmatprep.subr.mxu0 0.0
        %770 = vmatpush1.xpose.msra.mxu0 0.0
        %771 = vmatprep.subr.mxu0 0.0
        %772 = vmatpush1.xpose.msra.mxu0 0.0
        %773 = vmatprep.subr.mxu0 0.0
        %774 = vmatpush1.xpose.msra.mxu0 0.0
        %775 = vmatprep.subr.mxu0 0.0
        %776 = vmatpush1.xpose.msra.mxu0 0.0
        %777 = vmatprep.subr.mxu0 0.0
        %778 = vmatpush1.xpose.msra.mxu0 0.0
        %779 = vmatprep.subr.mxu0 0.0
        %780 = vmatpush1.xpose.msra.mxu0 0.0
        %781 = vmatprep.subr.mxu0 0.0
        %782 = vmatpush1.xpose.msra.mxu0 0.0
        %783 = vmatprep.subr.mxu0 0.0
        %784 = vmatpush1.xpose.msra.mxu0 0.0
        %785 = vmatprep.subr.mxu0 0.0
        %786 = vmatpush1.xpose.msra.mxu0 0.0
        %787 = vmatprep.subr.mxu0 0.0
        %788 = vmatpush1.xpose.msra.mxu0 0.0
        %789 = vmatprep.subr.mxu0 0.0
        %790 = vmatpush1.xpose.msra.mxu0 0.0
        %791 = vmatprep.subr.mxu0 0.0
        %792 = vmatpush1.xpose.msra.mxu0 0.0
        %793 = vmatprep.subr.mxu0 0.0
        %794 = vmatpush1.xpose.msra.mxu0 0.0
        %795 = vmatprep.subr.mxu0 0.0
        %796 = vmatpush1.xpose.msra.mxu0 0.0
        %797 = vmatprep.subr.mxu0 0.0
        %798 = vmatpush1.xpose.msra.mxu0 0.0
        %799 = vmatprep.subr.mxu0 0.0
        %800 = vmatpush1.xpose.msra.mxu0 0.0
        %801 = vmatprep.subr.mxu0 0.0
        %802 = vmatpush1.xpose.msra.mxu0 0.0
        %803 = vmatprep.subr.mxu0 0.0
        %804 = vmatpush1.xpose.msra.mxu0 0.0
        %805 = vmatprep.subr.mxu0 0.0
        %806 = vmatpush1.xpose.msra.mxu0 0.0
        %807 = vmatprep.subr.mxu0 0.0
        %808 = vmatpush1.xpose.msra.mxu0 0.0
        %809 = vmatprep.subr.mxu0 0.0
        %810 = vmatpush1.xpose.msra.mxu0 0.0
        %811 = vmatprep.subr.mxu0 0.0
        %812 = vmatpush1.xpose.msra.mxu0 0.0
        %813 = vmatprep.subr.mxu0 0.0
        %814 = vmatpush1.xpose.msra.mxu0 0.0
        %815 = vmatprep.subr.mxu0 0.0
        %816 = vmatpush1.xpose.msra.mxu0 0.0
        %817 = vmatprep.subr.mxu0 0.0
        %818 = vmatpush1.xpose.msra.mxu0 0.0
        %819 = vmatprep.subr.mxu0 0.0
        %820 = vmatpush1.xpose.msra.mxu0 0.0
        %821 = vmatprep.subr.mxu0 0.0
        %822 = vmatpush1.xpose.msra.mxu0 0.0
        %823 = vmatprep.subr.mxu0 0.0
        %824 = vmatpush1.xpose.msra.mxu0 0.0
        %825 = vmatprep.subr.mxu0 0.0
        %826 = vmatpush1.xpose.msra.mxu0 0.0
        %827 = vmatprep.subr.mxu0 0.0
        %828 = vmatpush1.xpose.msra.mxu0 0.0
        %829 = vmatprep.mubr.f32.mxu0 0.0
        %830 = vmatmul.mubr.f32.gmra.mrb[0].mxu0 %v761
        %v831 = vpop.f32.mrb[0].mxu0
        %v832 = vadd.f32 0.0, %v831
        %v833 = vpop.f32.mrb[0].mxu0
        %834 = vdwg.mxu0
        %v835 = vmul.f32 %v832, 0.25
        %v836 = vsel %vm505, %v835, -inf
        %837 = vmax.xlane.f32.xlu0 %v836
        %v838 = vpop.xlane.xlu0 %837
        %v839 = vsub.f32 %v835, %v838
        %v840 = vmul.f32 %v839, 1.442695
        %v841 = vpow.pop %v840
        %v842 = vsel %vm505, %v841, 0.0
        %843 = vadd.xlane.f32.xlu0 %v842
        %v844 = vpop.xlane.xlu0 %843
        %v845 = vrcp.pop %v844
        %v846 = vmul.f32 %v841, %v845
        %847 = vrot.lane.b32.xlu0 %v422, 96
        %v848 = vpop.permute.xlu0 %847
        %v851 = vsel %vm505, %v846, 0
        %853 = vmatprep.subr.mxu0 0.0
        %854 = vmatpush1.msra.mxu0 %v848
        %855 = vmatprep.subr.mxu0 0.0
        %856 = vmatpush1.msra.mxu0 0.0
        %857 = vmatprep.subr.mxu0 0.0
        %858 = vmatpush1.msra.mxu0 0.0
        %859 = vmatprep.subr.mxu0 0.0
        %860 = vmatpush1.msra.mxu0 0.0
        %861 = vmatprep.subr.mxu0 0.0
        %862 = vmatpush1.msra.mxu0 0.0
        %863 = vmatprep.subr.mxu0 0.0
        %864 = vmatpush1.msra.mxu0 0.0
        %865 = vmatprep.subr.mxu0 0.0
        %866 = vmatpush1.msra.mxu0 0.0
        %867 = vmatprep.subr.mxu0 0.0
        %868 = vmatpush1.msra.mxu0 0.0
        %869 = vmatprep.subr.mxu0 0.0
        %870 = vmatpush1.msra.mxu0 0.0
        %871 = vmatprep.subr.mxu0 0.0
        %872 = vmatpush1.msra.mxu0 0.0
        %873 = vmatprep.subr.mxu0 0.0
        %874 = vmatpush1.msra.mxu0 0.0
        %875 = vmatprep.subr.mxu0 0.0
        %876 = vmatpush1.msra.mxu0 0.0
        %877 = vmatprep.subr.mxu0 0.0
        %878 = vmatpush1.msra.mxu0 0.0
        %879 = vmatprep.subr.mxu0 0.0
        %880 = vmatpush1.msra.mxu0 0.0
        %881 = vmatprep.subr.mxu0 0.0
        %882 = vmatpush1.msra.mxu0 0.0
        %883 = vmatprep.subr.mxu0 0.0
        %884 = vmatpush1.msra.mxu0 0.0
        %885 = vmatprep.subr.mxu0 0.0
        %886 = vmatpush1.msra.mxu0 0.0
        %887 = vmatprep.subr.mxu0 0.0
        %888 = vmatpush1.msra.mxu0 0.0
        %889 = vmatprep.subr.mxu0 0.0
        %890 = vmatpush1.msra.mxu0 0.0
        %891 = vmatprep.subr.mxu0 0.0
        %892 = vmatpush1.msra.mxu0 0.0
        %893 = vmatprep.subr.mxu0 0.0
        %894 = vmatpush1.msra.mxu0 0.0
        %895 = vmatprep.subr.mxu0 0.0
        %896 = vmatpush1.msra.mxu0 0.0
        %897 = vmatprep.subr.mxu0 0.0
        %898 = vmatpush1.msra.mxu0 0.0
        %899 = vmatprep.subr.mxu0 0.0
        %900 = vmatpush1.msra.mxu0 0.0
        %901 = vmatprep.subr.mxu0 0.0
        %902 = vmatpush1.msra.mxu0 0.0
        %903 = vmatprep.subr.mxu0 0.0
        %904 = vmatpush1.msra.mxu0 0.0
        %905 = vmatprep.subr.mxu0 0.0
        %906 = vmatpush1.msra.mxu0 0.0
        %907 = vmatprep.subr.mxu0 0.0
        %908 = vmatpush1.msra.mxu0 0.0
        %909 = vmatprep.subr.mxu0 0.0
        %910 = vmatpush1.msra.mxu0 0.0
        %911 = vmatprep.subr.mxu0 0.0
        %912 = vmatpush1.msra.mxu0 0.0
        %913 = vmatprep.subr.mxu0 0.0
        %914 = vmatpush1.msra.mxu0 0.0
        %915 = vmatprep.subr.mxu0 0.0
        %916 = vmatpush1.msra.mxu0 0.0
        %917 = vmatprep.mubr.f32.mxu0 0.0
        %918 = vmatmul.mubr.f32.gmra.mrb[0].mxu0 %v851
        %v919 = vpop.f32.mrb[0].mxu0
        %v920 = vadd.f32 0.0, %v919
        %v921 = vpop.f32.mrb[0].mxu0
        %922 = vdwg.mxu0
        %923 = vrot.lane.b32.xlu0 %v420, 80
        %v924 = vpop.permute.xlu0 %923
        %925 = vrot.lane.b32.xlu0 %v420, 16
        %v926 = vpop.permute.xlu0 %925
        %v927 = vsel %vm429, %v924, 0
        %v929 = vsel %vm429, %v926, 0
        %931 = vmatprep.subr.mxu0 0.0
        %932 = vmatpush1.xpose.msra.mxu0 %v929
        %933 = vmatprep.subr.mxu0 0.0
        %934 = vmatpush1.xpose.msra.mxu0 0.0
        %935 = vmatprep.subr.mxu0 0.0
        %936 = vmatpush1.xpose.msra.mxu0 0.0
        %937 = vmatprep.subr.mxu0 0.0
        %938 = vmatpush1.xpose.msra.mxu0 0.0
        %939 = vmatprep.subr.mxu0 0.0
        %940 = vmatpush1.xpose.msra.mxu0 0.0
        %941 = vmatprep.subr.mxu0 0.0
        %942 = vmatpush1.xpose.msra.mxu0 0.0
        %943 = vmatprep.subr.mxu0 0.0
        %944 = vmatpush1.xpose.msra.mxu0 0.0
        %945 = vmatprep.subr.mxu0 0.0
        %946 = vmatpush1.xpose.msra.mxu0 0.0
        %947 = vmatprep.subr.mxu0 0.0
        %948 = vmatpush1.xpose.msra.mxu0 0.0
        %949 = vmatprep.subr.mxu0 0.0
        %950 = vmatpush1.xpose.msra.mxu0 0.0
        %951 = vmatprep.subr.mxu0 0.0
        %952 = vmatpush1.xpose.msra.mxu0 0.0
        %953 = vmatprep.subr.mxu0 0.0
        %954 = vmatpush1.xpose.msra.mxu0 0.0
        %955 = vmatprep.subr.mxu0 0.0
        %956 = vmatpush1.xpose.msra.mxu0 0.0
        %957 = vmatprep.subr.mxu0 0.0
        %958 = vmatpush1.xpose.msra.mxu0 0.0
        %959 = vmatprep.subr.mxu0 0.0
        %960 = vmatpush1.xpose.msra.mxu0 0.0
        %961 = vmatprep.subr.mxu0 0.0
        %962 = vmatpush1.xpose.msra.mxu0 0.0
        %963 = vmatprep.subr.mxu0 0.0
        %964 = vmatpush1.xpose.msra.mxu0 0.0
        %965 = vmatprep.subr.mxu0 0.0
        %966 = vmatpush1.xpose.msra.mxu0 0.0
        %967 = vmatprep.subr.mxu0 0.0
        %968 = vmatpush1.xpose.msra.mxu0 0.0
        %969 = vmatprep.subr.mxu0 0.0
        %970 = vmatpush1.xpose.msra.mxu0 0.0
        %971 = vmatprep.subr.mxu0 0.0
        %972 = vmatpush1.xpose.msra.mxu0 0.0
        %973 = vmatprep.subr.mxu0 0.0
        %974 = vmatpush1.xpose.msra.mxu0 0.0
        %975 = vmatprep.subr.mxu0 0.0
        %976 = vmatpush1.xpose.msra.mxu0 0.0
        %977 = vmatprep.subr.mxu0 0.0
        %978 = vmatpush1.xpose.msra.mxu0 0.0
        %979 = vmatprep.subr.mxu0 0.0
        %980 = vmatpush1.xpose.msra.mxu0 0.0
        %981 = vmatprep.subr.mxu0 0.0
        %982 = vmatpush1.xpose.msra.mxu0 0.0
        %983 = vmatprep.subr.mxu0 0.0
        %984 = vmatpush1.xpose.msra.mxu0 0.0
        %985 = vmatprep.subr.mxu0 0.0
        %986 = vmatpush1.xpose.msra.mxu0 0.0
        %987 = vmatprep.subr.mxu0 0.0
        %988 = vmatpush1.xpose.msra.mxu0 0.0
        %989 = vmatprep.subr.mxu0 0.0
        %990 = vmatpush1.xpose.msra.mxu0 0.0
        %991 = vmatprep.subr.mxu0 0.0
        %992 = vmatpush1.xpose.msra.mxu0 0.0
        %993 = vmatprep.subr.mxu0 0.0
        %994 = vmatpush1.xpose.msra.mxu0 0.0
        %995 = vmatprep.mubr.f32.mxu0 0.0
        %996 = vmatmul.mubr.f32.gmra.mrb[0].mxu0 %v927
        %v997 = vpop.f32.mrb[0].mxu0
        %v998 = vadd.f32 0.0, %v997
        %v999 = vpop.f32.mrb[0].mxu0
        %1000 = vdwg.mxu0
        %v1001 = vmul.f32 %v998, 0.25
        %v1002 = vsel %vm505, %v1001, -inf
        %1003 = vmax.xlane.f32.xlu0 %v1002
        %v1004 = vpop.xlane.xlu0 %1003
        %v1005 = vsub.f32 %v1001, %v1004
        %v1006 = vmul.f32 %v1005, 1.442695
        %v1007 = vpow.pop %v1006
        %v1008 = vsel %vm505, %v1007, 0.0
        %1009 = vadd.xlane.f32.xlu0 %v1008
        %v1010 = vpop.xlane.xlu0 %1009
        %v1011 = vrcp.pop %v1010
        %v1012 = vmul.f32 %v1007, %v1011
        %1013 = vrot.lane.b32.xlu0 %v422, 80
        %v1014 = vpop.permute.xlu0 %1013
        %v1017 = vsel %vm505, %v1012, 0
        %1019 = vmatprep.subr.mxu0 0.0
        %1020 = vmatpush1.msra.mxu0 %v1014
        %1021 = vmatprep.subr.mxu0 0.0
        %1022 = vmatpush1.msra.mxu0 0.0
        %1023 = vmatprep.subr.mxu0 0.0
        %1024 = vmatpush1.msra.mxu0 0.0
        %1025 = vmatprep.subr.mxu0 0.0
        %1026 = vmatpush1.msra.mxu0 0.0
        %1027 = vmatprep.subr.mxu0 0.0
        %1028 = vmatpush1.msra.mxu0 0.0
        %1029 = vmatprep.subr.mxu0 0.0
        %1030 = vmatpush1.msra.mxu0 0.0
        %1031 = vmatprep.subr.mxu0 0.0
        %1032 = vmatpush1.msra.mxu0 0.0
        %1033 = vmatprep.subr.mxu0 0.0
        %1034 = vmatpush1.msra.mxu0 0.0
        %1035 = vmatprep.subr.mxu0 0.0
        %1036 = vmatpush1.msra.mxu0 0.0
        %1037 = vmatprep.subr.mxu0 0.0
        %1038 = vmatpush1.msra.mxu0 0.0
        %1039 = vmatprep.subr.mxu0 0.0
        %1040 = vmatpush1.msra.mxu0 0.0
        %1041 = vmatprep.subr.mxu0 0.0
        %1042 = vmatpush1.msra.mxu0 0.0
        %1043 = vmatprep.subr.mxu0 0.0
        %1044 = vmatpush1.msra.mxu0 0.0
        %1045 = vmatprep.subr.mxu0 0.0
        %1046 = vmatpush1.msra.mxu0 0.0
        %1047 = vmatprep.subr.mxu0 0.0
        %1048 = vmatpush1.msra.mxu0 0.0
        %1049 = vmatprep.subr.mxu0 0.0
        %1050 = vmatpush1.msra.mxu0 0.0
        %1051 = vmatprep.subr.mxu0 0.0
        %1052 = vmatpush1.msra.mxu0 0.0
        %1053 = vmatprep.subr.mxu0 0.0
        %1054 = vmatpush1.msra.mxu0 0.0
        %1055 = vmatprep.subr.mxu0 0.0
        %1056 = vmatpush1.msra.mxu0 0.0
        %1057 = vmatprep.subr.mxu0 0.0
        %1058 = vmatpush1.msra.mxu0 0.0
        %1059 = vmatprep.subr.mxu0 0.0
        %1060 = vmatpush1.msra.mxu0 0.0
        %1061 = vmatprep.subr.mxu0 0.0
        %1062 = vmatpush1.msra.mxu0 0.0
        %1063 = vmatprep.subr.mxu0 0.0
        %1064 = vmatpush1.msra.mxu0 0.0
        %1065 = vmatprep.subr.mxu0 0.0
        %1066 = vmatpush1.msra.mxu0 0.0
        %1067 = vmatprep.subr.mxu0 0.0
        %1068 = vmatpush1.msra.mxu0 0.0
        %1069 = vmatprep.subr.mxu0 0.0
        %1070 = vmatpush1.msra.mxu0 0.0
        %1071 = vmatprep.subr.mxu0 0.0
        %1072 = vmatpush1.msra.mxu0 0.0
        %1073 = vmatprep.subr.mxu0 0.0
        %1074 = vmatpush1.msra.mxu0 0.0
        %1075 = vmatprep.subr.mxu0 0.0
        %1076 = vmatpush1.msra.mxu0 0.0
        %1077 = vmatprep.subr.mxu0 0.0
        %1078 = vmatpush1.msra.mxu0 0.0
        %1079 = vmatprep.subr.mxu0 0.0
        %1080 = vmatpush1.msra.mxu0 0.0
        %1081 = vmatprep.subr.mxu0 0.0
        %1082 = vmatpush1.msra.mxu0 0.0
        %1083 = vmatprep.mubr.f32.mxu0 0.0
        %1084 = vmatmul.mubr.f32.gmra.mrb[0].mxu0 %v1017
        %v1085 = vpop.f32.mrb[0].mxu0
        %v1086 = vadd.f32 0.0, %v1085
        %v1087 = vpop.f32.mrb[0].mxu0
        %1088 = vdwg.mxu0
        %1090 = vrot.lane.b32.xlu0 %v754, 16
        %v1091 = vpop.permute.xlu0 %1090
        %1094 = vrot.lane.b32.xlu0 %v920, 32
        %v1095 = vpop.permute.xlu0 %1094
        %1098 = vrot.lane.b32.xlu0 %v1086, 48
        %v1099 = vpop.permute.xlu0 %1098
        %v1101 = vsel %vm429, %v587, %v1091
        %vm1102 = vcmask 261120
        %v1103 = vsel %vm1102, %v1101, %v1095
        %vm1104 = vcmask 392192
        %v1105 = vsel %vm1104, %v1103, %v1099
        %v1106 = vpack.c.bf16 %v1105, %v1105
        %v1107 = vlaneseq
        %v1108 = vshrl.u32 %v1107, 7
        %v1109 = vsub.s32 1, %v1108
        %v1110 = vrot.slane %v330, %v1109
        %1111 = vrot.lane.b32.xlu0 %v366, 64
        %v1112 = vpop.permute.xlu0 %1111
        %1113 = vrot.lane.b32.xlu0 %v368, 64
        %v1114 = vpop.permute.xlu0 %1113
        %1115 = vrot.lane.b32.xlu0 %v370, 64
        %v1116 = vpop.permute.xlu0 %1115
        %1117 = vrot.lane.b32.xlu0 %v372, 64
        %v1118 = vpop.permute.xlu0 %1117
        %v1124 = vsel %vm381, %v1106, 0
        %1126 = vmatprep.subr.bf16.mxu0 0
        %1127 = vmatpush1.bf16.msra.mxu0 %v1112
        %1128 = vmatprep.subr.bf16.mxu0 0
        %1129 = vmatpush1.bf16.msra.mxu0 %v1114
        %1130 = vmatprep.subr.bf16.mxu0 0
        %1131 = vmatpush1.bf16.msra.mxu0 %v1116
        %1132 = vmatprep.subr.bf16.mxu0 0
        %1133 = vmatpush1.bf16.msra.mxu0 %v1118
        %1134 = vmatprep.subr.bf16.mxu0 0
        %1135 = vmatpush1.bf16.msra.mxu0 0
        %1136 = vmatprep.subr.bf16.mxu0 0
        %1137 = vmatpush1.bf16.msra.mxu0 0
        %1138 = vmatprep.subr.bf16.mxu0 0
        %1139 = vmatpush1.bf16.msra.mxu0 0
        %1140 = vmatprep.subr.bf16.mxu0 0
        %1141 = vmatpush1.bf16.msra.mxu0 0
        %1142 = vmatprep.subr.bf16.mxu0 0
        %1143 = vmatpush1.bf16.msra.mxu0 0
        %1144 = vmatprep.subr.bf16.mxu0 0
        %1145 = vmatpush1.bf16.msra.mxu0 0
        %1146 = vmatprep.subr.bf16.mxu0 0
        %1147 = vmatpush1.bf16.msra.mxu0 0
        %1148 = vmatprep.subr.bf16.mxu0 0
        %1149 = vmatpush1.bf16.msra.mxu0 0
        %1150 = vmatprep.subr.bf16.mxu0 0
        %1151 = vmatpush1.bf16.msra.mxu0 0
        %1152 = vmatprep.subr.bf16.mxu0 0
        %1153 = vmatpush1.bf16.msra.mxu0 0
        %1154 = vmatprep.subr.bf16.mxu0 0
        %1155 = vmatpush1.bf16.msra.mxu0 0
        %1156 = vmatprep.subr.bf16.mxu0 0
        %1157 = vmatpush1.bf16.msra.mxu0 0
        %1158 = vmatprep.mubr.bf16.mxu0 0
        %1159 = vmatmul.mubr.bf16.gmra.mrb[0].mxu0 %v1124
        %v1160 = vpop.f32.mrb[0].mxu0
        %v1161 = vadd.f32 %v1110, %v1160
        %v1162 = vpop.f32.mrb[0].mxu0
        %v1163 = vpop.f32.mrb[0].mxu0
        %v1164 = vpop.f32.mrb[0].mxu0
        %1165 = vdwg.mxu0
        %v1166 = vadd.f32 %v297, %v1161
        %v1167 = vsel %vm381, %v1166, 0.0
        %1168 = vadd.xlane.f32.xlu0 %v1167
        %v1169 = vpop.xlane.xlu0 %1168
        %v1170 = vrcp.pop 64.0
        %v1171 = vmul.f32 %v1169, %v1170
        %v1172 = vsub.f32 %v1166, %v1171
        %v1173 = vmul.f32 %v1172, %v1172
        %v1174 = vsel %vm381, %v1173, 0.0
        %1175 = vadd.xlane.f32.xlu0 %v1174
        %v1176 = vpop.xlane.xlu0 %1175
        %v1177 = vmul.f32 %v1176, %v1170
        %v1178 = vadd.f32 %v1177, 1e-05
        %v1179 = vrsqrt.pop %v1178
        %v1180 = vmul.f32 %v1172, %v1179
        %v1181 = vlaneseq
        %v1182 = vshrl.u32 %v1181, 7
        %v1183 = vsub.s32 4, %v1182
        %v1184 = vrot.slane %v330, %v1183
        %v1185 = vmul.f32 %v1180, %v1184
        %v1186 = vlaneseq
        %v1187 = vshrl.u32 %v1186, 7
        %v1188 = vsub.s32 5, %v1187
        %v1189 = vrot.slane %v330, %v1188
        %v1190 = vadd.f32 %v1185, %v1189
        %v1191 = vpack.c.bf16 %v1190, %v1190
        %v1192 = vlaneseq
        %v1193 = vshrl.u32 %v1192, 7
        %v1194 = vsub.s32 2, %v1193
        %v1195 = vrot.slane %v330, %v1194
        %v1204 = vunpack.c.l.b16 %v299
        %v1205 = vunpack.c.l.b16 %v301
        %v1206 = vunpack.c.l.b16 %v303
        %v1207 = vunpack.c.l.b16 %v305
        %v1208 = vunpack.c.l.b16 %v307
        %v1209 = vunpack.c.l.b16 %v309
        %v1210 = vunpack.c.l.b16 %v311
        %v1211 = vunpack.c.l.b16 %v313
        %v1212 = vpack.c.b16 %v1205, %v1204
        %v1213 = vpack.c.b16 %v1207, %v1206
        %v1214 = vpack.c.b16 %v1209, %v1208
        %v1215 = vpack.c.b16 %v1211, %v1210
        %v1221 = vsel %vm381, %v1191, 0
        %1223 = vmatprep.subr.bf16.mxu0 0
        %1224 = vmatpush1.bf16.msra.mxu0 %v1212
        %1225 = vmatprep.subr.bf16.mxu0 0
        %1226 = vmatpush1.bf16.msra.mxu0 %v1213
        %1227 = vmatprep.subr.bf16.mxu0 0
        %1228 = vmatpush1.bf16.msra.mxu0 %v1214
        %1229 = vmatprep.subr.bf16.mxu0 0
        %1230 = vmatpush1.bf16.msra.mxu0 %v1215
        %1231 = vmatprep.subr.bf16.mxu0 0
        %1232 = vmatpush1.bf16.msra.mxu0 0
        %1233 = vmatprep.subr.bf16.mxu0 0
        %1234 = vmatpush1.bf16.msra.mxu0 0
        %1235 = vmatprep.subr.bf16.mxu0 0
        %1236 = vmatpush1.bf16.msra.mxu0 0
        %1237 = vmatprep.subr.bf16.mxu0 0
        %1238 = vmatpush1.bf16.msra.mxu0 0
        %1239 = vmatprep.subr.bf16.mxu0 0
        %1240 = vmatpush1.bf16.msra.mxu0 0
        %1241 = vmatprep.subr.bf16.mxu0 0
        %1242 = vmatpush1.bf16.msra.mxu0 0
        %1243 = vmatprep.subr.bf16.mxu0 0
        %1244 = vmatpush1.bf16.msra.mxu0 0
        %1245 = vmatprep.subr.bf16.mxu0 0
        %1246 = vmatpush1.bf16.msra.mxu0 0
        %1247 = vmatprep.subr.bf16.mxu0 0
        %1248 = vmatpush1.bf16.msra.mxu0 0
        %1249 = vmatprep.subr.bf16.mxu0 0
        %1250 = vmatpush1.bf16.msra.mxu0 0
        %1251 = vmatprep.subr.bf16.mxu0 0
        %1252 = vmatpush1.bf16.msra.mxu0 0
        %1253 = vmatprep.subr.bf16.mxu0 0
        %1254 = vmatpush1.bf16.msra.mxu0 0
        %1255 = vmatprep.mubr.bf16.mxu0 0
        %1256 = vmatmul.mubr.bf16.gmra.mrb[0].mxu0 %v1221
        %v1257 = vpop.f32.mrb[0].mxu0
        %v1258 = vadd.f32 %v1195, %v1257
        %v1259 = vpop.f32.mrb[0].mxu0
        %v1260 = vpop.f32.mrb[0].mxu0
        %v1261 = vpop.f32.mrb[0].mxu0
        %1262 = vdwg.mxu0
        %v1263 = vmax.f32 %v1258, 0.0
        %v1264 = vpack.c.bf16 %v1263, %v1263
        %v1265 = vlaneseq
        %v1266 = vshrl.u32 %v1265, 7
        %v1267 = vsub.s32 3, %v1266
        %v1268 = vrot.slane %v330, %v1267
        %v1285 = vunpack.c.l.b16 %v314
        %v1286 = vunpack.c.l.b16 %v315
        %v1287 = vunpack.c.l.b16 %v316
        %v1288 = vunpack.c.l.b16 %v317
        %v1289 = vunpack.c.l.b16 %v318
        %v1290 = vunpack.c.l.b16 %v319
        %v1291 = vunpack.c.l.b16 %v320
        %v1292 = vunpack.c.l.b16 %v321
        %v1293 = vunpack.c.l.b16 %v322
        %v1294 = vunpack.c.l.b16 %v323
        %v1295 = vunpack.c.l.b16 %v324
        %v1296 = vunpack.c.l.b16 %v325
        %v1297 = vunpack.c.l.b16 %v326
        %v1298 = vunpack.c.l.b16 %v327
        %v1299 = vunpack.c.l.b16 %v328
        %v1300 = vunpack.c.l.b16 %v329
        %v1301 = vpack.c.b16 %v1286, %v1285
        %v1302 = vpack.c.b16 %v1288, %v1287
        %v1303 = vpack.c.b16 %v1290, %v1289
        %v1304 = vpack.c.b16 %v1292, %v1291
        %v1305 = vpack.c.b16 %v1294, %v1293
        %v1306 = vpack.c.b16 %v1296, %v1295
        %v1307 = vpack.c.b16 %v1298, %v1297
        %v1308 = vpack.c.b16 %v1300, %v1299
        %1317 = vmatprep.subr.bf16.mxu0 0
        %1318 = vmatpush1.bf16.msra.mxu0 %v1301
        %1319 = vmatprep.subr.bf16.mxu0 0
        %1320 = vmatpush1.bf16.msra.mxu0 %v1302
        %1321 = vmatprep.subr.bf16.mxu0 0
        %1322 = vmatpush1.bf16.msra.mxu0 %v1303
        %1323 = vmatprep.subr.bf16.mxu0 0
        %1324 = vmatpush1.bf16.msra.mxu0 %v1304
        %1325 = vmatprep.subr.bf16.mxu0 0
        %1326 = vmatpush1.bf16.msra.mxu0 %v1305
        %1327 = vmatprep.subr.bf16.mxu0 0
        %1328 = vmatpush1.bf16.msra.mxu0 %v1306
        %1329 = vmatprep.subr.bf16.mxu0 0
        %1330 = vmatpush1.bf16.msra.mxu0 %v1307
        %1331 = vmatprep.subr.bf16.mxu0 0
        %1332 = vmatpush1.bf16.msra.mxu0 %v1308
        %1333 = vmatprep.subr.bf16.mxu0 0
        %1334 = vmatpush1.bf16.msra.mxu0 0
        %1335 = vmatprep.subr.bf16.mxu0 0
        %1336 = vmatpush1.bf16.msra.mxu0 0
        %1337 = vmatprep.subr.bf16.mxu0 0
        %1338 = vmatpush1.bf16.msra.mxu0 0
        %1339 = vmatprep.subr.bf16.mxu0 0
        %1340 = vmatpush1.bf16.msra.mxu0 0
        %1341 = vmatprep.subr.bf16.mxu0 0
        %1342 = vmatpush1.bf16.msra.mxu0 0
        %1343 = vmatprep.subr.bf16.mxu0 0
        %1344 = vmatpush1.bf16.msra.mxu0 0
        %1345 = vmatprep.subr.bf16.mxu0 0
        %1346 = vmatpush1.bf16.msra.mxu0 0
        %1347 = vmatprep.subr.bf16.mxu0 0
        %1348 = vmatpush1.bf16.msra.mxu0 0
        %1349 = vmatprep.mubr.bf16.mxu0 0
        %1350 = vmatmul.mubr.bf16.gmra.mrb[0].mxu0 %v1264
        %v1351 = vpop.f32.mrb[0].mxu0
        %v1352 = vadd.f32 %v1268, %v1351
        %v1353 = vpop.f32.mrb[0].mxu0
        %v1354 = vpop.f32.mrb[0].mxu0
        %v1355 = vpop.f32.mrb[0].mxu0
        %1356 = vdwg.mxu0
        %v1357 = vadd.f32 %v1190, %v1352
        %v1358 = vsel %vm381, %v1357, 0.0
        %1359 = vadd.xlane.f32.xlu0 %v1358
        %v1360 = vpop.xlane.xlu0 %1359
        %v1361 = vmul.f32 %v1360, %v1170
        %v1362 = vsub.f32 %v1357, %v1361
        %v1363 = vmul.f32 %v1362, %v1362
        %v1364 = vsel %vm381, %v1363, 0.0
        %1365 = vadd.xlane.f32.xlu0 %v1364
        %v1366 = vpop.xlane.xlu0 %1365
        %v1367 = vmul.f32 %v1366, %v1170
        %v1368 = vadd.f32 %v1367, 1e-05
        %v1369 = vrsqrt.pop %v1368
        %v1370 = vmul.f32 %v1362, %v1369
        %v1371 = vlaneseq
        %v1372 = vshrl.u32 %v1371, 7
        %v1373 = vsub.s32 6, %v1372
        %v1374 = vrot.slane %v330, %v1373
        %v1375 = vmul.f32 %v1370, %v1374
        %v1376 = vlaneseq
        %v1377 = vshrl.u32 %v1376, 7
        %v1378 = vsub.s32 7, %v1377
        %v1379 = vrot.slane %v330, %v1378
        %v1380 = vadd.f32 %v1375, %v1379
        %s1381 = scalar_lea.vmem %s1, 96
        %v1382 = vld [vmem:[%s1381] sm:$0xff]
        %v1383 = vld [vmem:[%s1381 + $0x8] sm:$0xf]
        %v1384 = vld [vmem:[%s1381 + $0xc] sm:$0xff]
        %v1385 = vld [vmem:[%s1381 + $0x14] sm:$0xf]
        %v1386 = vld [vmem:[%s1381 + $0x18] sm:$0xff]
        %v1387 = vld [vmem:[%s1381 + $0x20] sm:$0xf]
        %v1388 = vld [vmem:[%s1381 + $0x24] sm:$0xff]
        %v1389 = vld [vmem:[%s1381 + $0x2c] sm:$0xf]
        %v1390 = vld [vmem:[%s1381 + $0x30] sm:$0xff]
        %v1391 = vld [vmem:[%s1381 + $0x38] sm:$0xf]
        %v1392 = vld [vmem:[%s1381 + $0x3c] sm:$0xff]
        %v1393 = vld [vmem:[%s1381 + $0x44] sm:$0xf]
        %v1394 = vld [vmem:[%s1381 + $0x48] sm:$0xff]
        %v1395 = vld [vmem:[%s1381 + $0x50] sm:$0xf]
        %v1396 = vld [vmem:[%s1381 + $0x54] sm:$0xff]
        %v1397 = vld [vmem:[%s1381 + $0x5c] sm:$0xf]
        %s1398 = scalar_lea.vmem %s2, 64
        %v1399 = vld [vmem:[%s1398] sm:$0xf]
        %v1400 = vld [vmem:[%s1398 + $0x4] sm:$0xf]
        %v1401 = vld [vmem:[%s1398 + $0x8] sm:$0xf]
        %v1402 = vld [vmem:[%s1398 + $0xc] sm:$0xf]
        %v1403 = vld [vmem:[%s1398 + $0x10] sm:$0xf]
        %v1404 = vld [vmem:[%s1398 + $0x14] sm:$0xf]
        %v1405 = vld [vmem:[%s1398 + $0x18] sm:$0xf]
        %v1406 = vld [vmem:[%s1398 + $0x1c] sm:$0xf]
        %v1407 = vld [vmem:[%s1398 + $0x20] sm:$0xf]
        %v1408 = vld [vmem:[%s1398 + $0x24] sm:$0xf]
        %v1409 = vld [vmem:[%s1398 + $0x28] sm:$0xf]
        %v1410 = vld [vmem:[%s1398 + $0x2c] sm:$0xf]
        %v1411 = vld [vmem:[%s1398 + $0x30] sm:$0xf]
        %v1412 = vld [vmem:[%s1398 + $0x34] sm:$0xf]
        %v1413 = vld [vmem:[%s1398 + $0x38] sm:$0xf]
        %v1414 = vld [vmem:[%s1398 + $0x3c] sm:$0xf]
        %s1415 = scalar_lea.vmem [#allocation5], 16
        %v1416 = vld [vmem:[%s1415] sm:$0xff]
        %v1417 = vld [vmem:[%s1415 + $0x8] sm:$0xff]
        %v1418 = vpack.c.bf16 %v1380, %v1380
        %v1419 = vlaneseq
        %v1420 = vshrl.u32 %v1419, 7
        %v1421 = vsub.s32 0, %v1420
        %v1422 = vrot.slane %v1416, %v1421
        %v1423 = vlaneseq
        %v1424 = vshrl.u32 %v1423, 7
        %v1425 = vsub.s32 0, %v1424
        %v1426 = vrot.slane %v1417, %v1425
        %v1435 = vunpack.c.l.b16 %v1382
        %v1436 = vunpack.c.h.b16 %v1382
        %v1437 = vunpack.c.l.b16 %v1384
        %v1438 = vunpack.c.h.b16 %v1384
        %v1439 = vunpack.c.l.b16 %v1386
        %v1440 = vunpack.c.h.b16 %v1386
        %v1441 = vunpack.c.l.b16 %v1388
        %v1442 = vunpack.c.h.b16 %v1388
        %v1443 = vunpack.c.l.b16 %v1390
        %v1444 = vunpack.c.h.b16 %v1390
        %v1445 = vunpack.c.l.b16 %v1392
        %v1446 = vunpack.c.h.b16 %v1392
        %v1447 = vunpack.c.l.b16 %v1394
        %v1448 = vunpack.c.h.b16 %v1394
        %v1449 = vunpack.c.l.b16 %v1396
        %v1450 = vunpack.c.h.b16 %v1396
        %v1451 = vpack.c.b16 %v1437, %v1435
        %v1452 = vpack.c.b16 %v1438, %v1436
        %v1453 = vpack.c.b16 %v1441, %v1439
        %v1454 = vpack.c.b16 %v1442, %v1440
        %v1455 = vpack.c.b16 %v1445, %v1443
        %v1456 = vpack.c.b16 %v1446, %v1444
        %v1457 = vpack.c.b16 %v1449, %v1447
        %v1458 = vpack.c.b16 %v1450, %v1448
        %v1468 = vsel %vm381, %v1418, 0
        %1470 = vmatprep.subr.bf16.mxu0 %v1452
        %1471 = vmatpush1.bf16.msra.mxu0 %v1451
        %1472 = vmatprep.subr.bf16.mxu0 %v1454
        %1473 = vmatpush1.bf16.msra.mxu0 %v1453
        %1474 = vmatprep.subr.bf16.mxu0 %v1456
        %1475 = vmatpush1.bf16.msra.mxu0 %v1455
        %1476 = vmatprep.subr.bf16.mxu0 %v1458
        %1477 = vmatpush1.bf16.msra.mxu0 %v1457
        %1478 = vmatprep.subr.bf16.mxu0 0
        %1479 = vmatpush1.bf16.msra.mxu0 0
        %1480 = vmatprep.subr.bf16.mxu0 0
        %1481 = vmatpush1.bf16.msra.mxu0 0
        %1482 = vmatprep.subr.bf16.mxu0 0
        %1483 = vmatpush1.bf16.msra.mxu0 0
        %1484 = vmatprep.subr.bf16.mxu0 0
        %1485 = vmatpush1.bf16.msra.mxu0 0
        %1486 = vmatprep.subr.bf16.mxu0 0
        %1487 = vmatpush1.bf16.msra.mxu0 0
        %1488 = vmatprep.subr.bf16.mxu0 0
        %1489 = vmatpush1.bf16.msra.mxu0 0
        %1490 = vmatprep.subr.bf16.mxu0 0
        %1491 = vmatpush1.bf16.msra.mxu0 0
        %1492 = vmatprep.subr.bf16.mxu0 0
        %1493 = vmatpush1.bf16.msra.mxu0 0
        %1494 = vmatprep.subr.bf16.mxu0 0
        %1495 = vmatpush1.bf16.msra.mxu0 0
        %1496 = vmatprep.subr.bf16.mxu0 0
        %1497 = vmatpush1.bf16.msra.mxu0 0
        %1498 = vmatprep.subr.bf16.mxu0 0
        %1499 = vmatpush1.bf16.msra.mxu0 0
        %1500 = vmatprep.subr.bf16.mxu0 0
        %1501 = vmatpush1.bf16.msra.mxu0 0
        %1502 = vmatprep.mubr.bf16.mxu0 0
        %1503 = vmatmul.mubr.bf16.gmra.mrb[0].mxu0 %v1468
        %v1504 = vpop.f32.mrb[0].mxu0
        %v1505 = vadd.f32 %v1422, %v1504
        %v1506 = vpop.f32.mrb[0].mxu0
        %v1507 = vadd.f32 %v1426, %v1506
        %v1508 = vpop.f32.mrb[0].mxu0
        %v1509 = vpop.f32.mrb[0].mxu0
        %1510 = vdwg.mxu0
        %1512 = vrot.lane.b32.xlu0 %v1505, 64
        %v1513 = vpop.permute.xlu0 %1512
        %v1514 = vsel %vm429, %v1505, 0
        %v1516 = vsel %vm429, %v1513, 0
        %1518 = vmatprep.subr.mxu0 0.0
        %1519 = vmatpush1.xpose.msra.mxu0 %v1516
        %1520 = vmatprep.subr.mxu0 0.0
        %1521 = vmatpush1.xpose.msra.mxu0 0.0
        %1522 = vmatprep.subr.mxu0 0.0
        %1523 = vmatpush1.xpose.msra.mxu0 0.0
        %1524 = vmatprep.subr.mxu0 0.0
        %1525 = vmatpush1.xpose.msra.mxu0 0.0
        %1526 = vmatprep.subr.mxu0 0.0
        %1527 = vmatpush1.xpose.msra.mxu0 0.0
        %1528 = vmatprep.subr.mxu0 0.0
        %1529 = vmatpush1.xpose.msra.mxu0 0.0
        %1530 = vmatprep.subr.mxu0 0.0
        %1531 = vmatpush1.xpose.msra.mxu0 0.0
        %1532 = vmatprep.subr.mxu0 0.0
        %1533 = vmatpush1.xpose.msra.mxu0 0.0
        %1534 = vmatprep.subr.mxu0 0.0
        %1535 = vmatpush1.xpose.msra.mxu0 0.0
        %1536 = vmatprep.subr.mxu0 0.0
        %1537 = vmatpush1.xpose.msra.mxu0 0.0
        %1538 = vmatprep.subr.mxu0 0.0
        %1539 = vmatpush1.xpose.msra.mxu0 0.0
        %1540 = vmatprep.subr.mxu0 0.0
        %1541 = vmatpush1.xpose.msra.mxu0 0.0
        %1542 = vmatprep.subr.mxu0 0.0
        %1543 = vmatpush1.xpose.msra.mxu0 0.0
        %1544 = vmatprep.subr.mxu0 0.0
        %1545 = vmatpush1.xpose.msra.mxu0 0.0
        %1546 = vmatprep.subr.mxu0 0.0
        %1547 = vmatpush1.xpose.msra.mxu0 0.0
        %1548 = vmatprep.subr.mxu0 0.0
        %1549 = vmatpush1.xpose.msra.mxu0 0.0
        %1550 = vmatprep.subr.mxu0 0.0
        %1551 = vmatpush1.xpose.msra.mxu0 0.0
        %1552 = vmatprep.subr.mxu0 0.0
        %1553 = vmatpush1.xpose.msra.mxu0 0.0
        %1554 = vmatprep.subr.mxu0 0.0
        %1555 = vmatpush1.xpose.msra.mxu0 0.0
        %1556 = vmatprep.subr.mxu0 0.0
        %1557 = vmatpush1.xpose.msra.mxu0 0.0
        %1558 = vmatprep.subr.mxu0 0.0
        %1559 = vmatpush1.xpose.msra.mxu0 0.0
        %1560 = vmatprep.subr.mxu0 0.0
        %1561 = vmatpush1.xpose.msra.mxu0 0.0
        %1562 = vmatprep.subr.mxu0 0.0
        %1563 = vmatpush1.xpose.msra.mxu0 0.0
        %1564 = vmatprep.subr.mxu0 0.0
        %1565 = vmatpush1.xpose.msra.mxu0 0.0
        %1566 = vmatprep.subr.mxu0 0.0
        %1567 = vmatpush1.xpose.msra.mxu0 0.0
        %1568 = vmatprep.subr.mxu0 0.0
        %1569 = vmatpush1.xpose.msra.mxu0 0.0
        %1570 = vmatprep.subr.mxu0 0.0
        %1571 = vmatpush1.xpose.msra.mxu0 0.0
        %1572 = vmatprep.subr.mxu0 0.0
        %1573 = vmatpush1.xpose.msra.mxu0 0.0
        %1574 = vmatprep.subr.mxu0 0.0
        %1575 = vmatpush1.xpose.msra.mxu0 0.0
        %1576 = vmatprep.subr.mxu0 0.0
        %1577 = vmatpush1.xpose.msra.mxu0 0.0
        %1578 = vmatprep.subr.mxu0 0.0
        %1579 = vmatpush1.xpose.msra.mxu0 0.0
        %1580 = vmatprep.subr.mxu0 0.0
        %1581 = vmatpush1.xpose.msra.mxu0 0.0
        %1582 = vmatprep.mubr.f32.mxu0 0.0
        %1583 = vmatmul.mubr.f32.gmra.mrb[0].mxu0 %v1514
        %v1584 = vpop.f32.mrb[0].mxu0
        %v1585 = vadd.f32 0.0, %v1584
        %v1586 = vpop.f32.mrb[0].mxu0
        %1587 = vdwg.mxu0
        %v1588 = vmul.f32 %v1585, 0.25
        %v1589 = vsel %vm505, %v1588, -inf
        %1590 = vmax.xlane.f32.xlu0 %v1589
        %v1591 = vpop.xlane.xlu0 %1590
        %v1592 = vsub.f32 %v1588, %v1591
        %v1593 = vmul.f32 %v1592, 1.442695
        %v1594 = vpow.pop %v1593
        %v1595 = vsel %vm505, %v1594, 0.0
        %1596 = vadd.xlane.f32.xlu0 %v1595
        %v1597 = vpop.xlane.xlu0 %1596
        %v1598 = vrcp.pop %v1597
        %v1599 = vmul.f32 %v1594, %v1598
        %v1601 = vsel %vm505, %v1599, 0
        %1603 = vmatprep.subr.mxu0 0.0
        %1604 = vmatpush1.msra.mxu0 %v1507
        %1605 = vmatprep.subr.mxu0 0.0
        %1606 = vmatpush1.msra.mxu0 0.0
        %1607 = vmatprep.subr.mxu0 0.0
        %1608 = vmatpush1.msra.mxu0 0.0
        %1609 = vmatprep.subr.mxu0 0.0
        %1610 = vmatpush1.msra.mxu0 0.0
        %1611 = vmatprep.subr.mxu0 0.0
        %1612 = vmatpush1.msra.mxu0 0.0
        %1613 = vmatprep.subr.mxu0 0.0
        %1614 = vmatpush1.msra.mxu0 0.0
        %1615 = vmatprep.subr.mxu0 0.0
        %1616 = vmatpush1.msra.mxu0 0.0
        %1617 = vmatprep.subr.mxu0 0.0
        %1618 = vmatpush1.msra.mxu0 0.0
        %1619 = vmatprep.subr.mxu0 0.0
        %1620 = vmatpush1.msra.mxu0 0.0
        %1621 = vmatprep.subr.mxu0 0.0
        %1622 = vmatpush1.msra.mxu0 0.0
        %1623 = vmatprep.subr.mxu0 0.0
        %1624 = vmatpush1.msra.mxu0 0.0
        %1625 = vmatprep.subr.mxu0 0.0
        %1626 = vmatpush1.msra.mxu0 0.0
        %1627 = vmatprep.subr.mxu0 0.0
        %1628 = vmatpush1.msra.mxu0 0.0
        %1629 = vmatprep.subr.mxu0 0.0
        %1630 = vmatpush1.msra.mxu0 0.0
        %1631 = vmatprep.subr.mxu0 0.0
        %1632 = vmatpush1.msra.mxu0 0.0
        %1633 = vmatprep.subr.mxu0 0.0
        %1634 = vmatpush1.msra.mxu0 0.0
        %1635 = vmatprep.subr.mxu0 0.0
        %1636 = vmatpush1.msra.mxu0 0.0
        %1637 = vmatprep.subr.mxu0 0.0
        %1638 = vmatpush1.msra.mxu0 0.0
        %1639 = vmatprep.subr.mxu0 0.0
        %1640 = vmatpush1.msra.mxu0 0.0
        %1641 = vmatprep.subr.mxu0 0.0
        %1642 = vmatpush1.msra.mxu0 0.0
        %1643 = vmatprep.subr.mxu0 0.0
        %1644 = vmatpush1.msra.mxu0 0.0
        %1645 = vmatprep.subr.mxu0 0.0
        %1646 = vmatpush1.msra.mxu0 0.0
        %1647 = vmatprep.subr.mxu0 0.0
        %1648 = vmatpush1.msra.mxu0 0.0
        %1649 = vmatprep.subr.mxu0 0.0
        %1650 = vmatpush1.msra.mxu0 0.0
        %1651 = vmatprep.subr.mxu0 0.0
        %1652 = vmatpush1.msra.mxu0 0.0
        %1653 = vmatprep.subr.mxu0 0.0
        %1654 = vmatpush1.msra.mxu0 0.0
        %1655 = vmatprep.subr.mxu0 0.0
        %1656 = vmatpush1.msra.mxu0 0.0
        %1657 = vmatprep.subr.mxu0 0.0
        %1658 = vmatpush1.msra.mxu0 0.0
        %1659 = vmatprep.subr.mxu0 0.0
        %1660 = vmatpush1.msra.mxu0 0.0
        %1661 = vmatprep.subr.mxu0 0.0
        %1662 = vmatpush1.msra.mxu0 0.0
        %1663 = vmatprep.subr.mxu0 0.0
        %1664 = vmatpush1.msra.mxu0 0.0
        %1665 = vmatprep.subr.mxu0 0.0
        %1666 = vmatpush1.msra.mxu0 0.0
        %1667 = vmatprep.mubr.f32.mxu0 0.0
        %1668 = vmatmul.mubr.f32.gmra.mrb[0].mxu0 %v1601
        %v1669 = vpop.f32.mrb[0].mxu0
        %v1670 = vadd.f32 0.0, %v1669
        %v1671 = vpop.f32.mrb[0].mxu0
        %1672 = vdwg.mxu0
        %1673 = vrot.lane.b32.xlu0 %v1505, 112
        %v1674 = vpop.permute.xlu0 %1673
        %1675 = vrot.lane.b32.xlu0 %v1505, 48
        %v1676 = vpop.permute.xlu0 %1675
        %v1677 = vsel %vm429, %v1674, 0
        %v1679 = vsel %vm429, %v1676, 0
        %1681 = vmatprep.subr.mxu0 0.0
        %1682 = vmatpush1.xpose.msra.mxu0 %v1679
        %1683 = vmatprep.subr.mxu0 0.0
        %1684 = vmatpush1.xpose.msra.mxu0 0.0
        %1685 = vmatprep.subr.mxu0 0.0
        %1686 = vmatpush1.xpose.msra.mxu0 0.0
        %1687 = vmatprep.subr.mxu0 0.0
        %1688 = vmatpush1.xpose.msra.mxu0 0.0
        %1689 = vmatprep.subr.mxu0 0.0
        %1690 = vmatpush1.xpose.msra.mxu0 0.0
        %1691 = vmatprep.subr.mxu0 0.0
        %1692 = vmatpush1.xpose.msra.mxu0 0.0
        %1693 = vmatprep.subr.mxu0 0.0
        %1694 = vmatpush1.xpose.msra.mxu0 0.0
        %1695 = vmatprep.subr.mxu0 0.0
        %1696 = vmatpush1.xpose.msra.mxu0 0.0
        %1697 = vmatprep.subr.mxu0 0.0
        %1698 = vmatpush1.xpose.msra.mxu0 0.0
        %1699 = vmatprep.subr.mxu0 0.0
        %1700 = vmatpush1.xpose.msra.mxu0 0.0
        %1701 = vmatprep.subr.mxu0 0.0
        %1702 = vmatpush1.xpose.msra.mxu0 0.0
        %1703 = vmatprep.subr.mxu0 0.0
        %1704 = vmatpush1.xpose.msra.mxu0 0.0
        %1705 = vmatprep.subr.mxu0 0.0
        %1706 = vmatpush1.xpose.msra.mxu0 0.0
        %1707 = vmatprep.subr.mxu0 0.0
        %1708 = vmatpush1.xpose.msra.mxu0 0.0
        %1709 = vmatprep.subr.mxu0 0.0
        %1710 = vmatpush1.xpose.msra.mxu0 0.0
        %1711 = vmatprep.subr.mxu0 0.0
        %1712 = vmatpush1.xpose.msra.mxu0 0.0
        %1713 = vmatprep.subr.mxu0 0.0
        %1714 = vmatpush1.xpose.msra.mxu0 0.0
        %1715 = vmatprep.subr.mxu0 0.0
        %1716 = vmatpush1.xpose.msra.mxu0 0.0
        %1717 = vmatprep.subr.mxu0 0.0
        %1718 = vmatpush1.xpose.msra.mxu0 0.0
        %1719 = vmatprep.subr.mxu0 0.0
        %1720 = vmatpush1.xpose.msra.mxu0 0.0
        %1721 = vmatprep.subr.mxu0 0.0
        %1722 = vmatpush1.xpose.msra.mxu0 0.0
        %1723 = vmatprep.subr.mxu0 0.0
        %1724 = vmatpush1.xpose.msra.mxu0 0.0
        %1725 = vmatprep.subr.mxu0 0.0
        %1726 = vmatpush1.xpose.msra.mxu0 0.0
        %1727 = vmatprep.subr.mxu0 0.0
        %1728 = vmatpush1.xpose.msra.mxu0 0.0
        %1729 = vmatprep.subr.mxu0 0.0
        %1730 = vmatpush1.xpose.msra.mxu0 0.0
        %1731 = vmatprep.subr.mxu0 0.0
        %1732 = vmatpush1.xpose.msra.mxu0 0.0
        %1733 = vmatprep.subr.mxu0 0.0
        %1734 = vmatpush1.xpose.msra.mxu0 0.0
        %1735 = vmatprep.subr.mxu0 0.0
        %1736 = vmatpush1.xpose.msra.mxu0 0.0
        %1737 = vmatprep.subr.mxu0 0.0
        %1738 = vmatpush1.xpose.msra.mxu0 0.0
        %1739 = vmatprep.subr.mxu0 0.0
        %1740 = vmatpush1.xpose.msra.mxu0 0.0
        %1741 = vmatprep.subr.mxu0 0.0
        %1742 = vmatpush1.xpose.msra.mxu0 0.0
        %1743 = vmatprep.subr.mxu0 0.0
        %1744 = vmatpush1.xpose.msra.mxu0 0.0
        %1745 = vmatprep.mubr.f32.mxu0 0.0
        %1746 = vmatmul.mubr.f32.gmra.mrb[0].mxu0 %v1677
        %v1747 = vpop.f32.mrb[0].mxu0
        %v1748 = vadd.f32 0.0, %v1747
        %v1749 = vpop.f32.mrb[0].mxu0
        %1750 = vdwg.mxu0
        %v1751 = vmul.f32 %v1748, 0.25
        %v1752 = vsel %vm505, %v1751, -inf
        %1753 = vmax.xlane.f32.xlu0 %v1752
        %v1754 = vpop.xlane.xlu0 %1753
        %v1755 = vsub.f32 %v1751, %v1754
        %v1756 = vmul.f32 %v1755, 1.442695
        %v1757 = vpow.pop %v1756
        %v1758 = vsel %vm505, %v1757, 0.0
        %1759 = vadd.xlane.f32.xlu0 %v1758
        %v1760 = vpop.xlane.xlu0 %1759
        %v1761 = vrcp.pop %v1760
        %v1762 = vmul.f32 %v1757, %v1761
        %1764 = vrot.lane.b32.xlu0 %v1507, 112
        %v1765 = vpop.permute.xlu0 %1764
        %v1768 = vsel %vm505, %v1762, 0
        %1770 = vmatprep.subr.mxu0 0.0
        %1771 = vmatpush1.msra.mxu0 %v1765
        %1772 = vmatprep.subr.mxu0 0.0
        %1773 = vmatpush1.msra.mxu0 0.0
        %1774 = vmatprep.subr.mxu0 0.0
        %1775 = vmatpush1.msra.mxu0 0.0
        %1776 = vmatprep.subr.mxu0 0.0
        %1777 = vmatpush1.msra.mxu0 0.0
        %1778 = vmatprep.subr.mxu0 0.0
        %1779 = vmatpush1.msra.mxu0 0.0
        %1780 = vmatprep.subr.mxu0 0.0
        %1781 = vmatpush1.msra.mxu0 0.0
        %1782 = vmatprep.subr.mxu0 0.0
        %1783 = vmatpush1.msra.mxu0 0.0
        %1784 = vmatprep.subr.mxu0 0.0
        %1785 = vmatpush1.msra.mxu0 0.0
        %1786 = vmatprep.subr.mxu0 0.0
        %1787 = vmatpush1.msra.mxu0 0.0
        %1788 = vmatprep.subr.mxu0 0.0
        %1789 = vmatpush1.msra.mxu0 0.0
        %1790 = vmatprep.subr.mxu0 0.0
        %1791 = vmatpush1.msra.mxu0 0.0
        %1792 = vmatprep.subr.mxu0 0.0
        %1793 = vmatpush1.msra.mxu0 0.0
        %1794 = vmatprep.subr.mxu0 0.0
        %1795 = vmatpush1.msra.mxu0 0.0
        %1796 = vmatprep.subr.mxu0 0.0
        %1797 = vmatpush1.msra.mxu0 0.0
        %1798 = vmatprep.subr.mxu0 0.0
        %1799 = vmatpush1.msra.mxu0 0.0
        %1800 = vmatprep.subr.mxu0 0.0
        %1801 = vmatpush1.msra.mxu0 0.0
        %1802 = vmatprep.subr.mxu0 0.0
        %1803 = vmatpush1.msra.mxu0 0.0
        %1804 = vmatprep.subr.mxu0 0.0
        %1805 = vmatpush1.msra.mxu0 0.0
        %1806 = vmatprep.subr.mxu0 0.0
        %1807 = vmatpush1.msra.mxu0 0.0
        %1808 = vmatprep.subr.mxu0 0.0
        %1809 = vmatpush1.msra.mxu0 0.0
        %1810 = vmatprep.subr.mxu0 0.0
        %1811 = vmatpush1.msra.mxu0 0.0
        %1812 = vmatprep.subr.mxu0 0.0
        %1813 = vmatpush1.msra.mxu0 0.0
        %1814 = vmatprep.subr.mxu0 0.0
        %1815 = vmatpush1.msra.mxu0 0.0
        %1816 = vmatprep.subr.mxu0 0.0
        %1817 = vmatpush1.msra.mxu0 0.0
        %1818 = vmatprep.subr.mxu0 0.0
        %1819 = vmatpush1.msra.mxu0 0.0
        %1820 = vmatprep.subr.mxu0 0.0
        %1821 = vmatpush1.msra.mxu0 0.0
        %1822 = vmatprep.subr.mxu0 0.0
        %1823 = vmatpush1.msra.mxu0 0.0
        %1824 = vmatprep.subr.mxu0 0.0
        %1825 = vmatpush1.msra.mxu0 0.0
        %1826 = vmatprep.subr.mxu0 0.0
        %1827 = vmatpush1.msra.mxu0 0.0
        %1828 = vmatprep.subr.mxu0 0.0
        %1829 = vmatpush1.msra.mxu0 0.0
        %1830 = vmatprep.subr.mxu0 0.0
        %1831 = vmatpush1.msra.mxu0 0.0
        %1832 = vmatprep.subr.mxu0 0.0
        %1833 = vmatpush1.msra.mxu0 0.0
        %1834 = vmatprep.mubr.f32.mxu0 0.0
        %1835 = vmatmul.mubr.f32.gmra.mrb[0].mxu0 %v1768
        %v1836 = vpop.f32.mrb[0].mxu0
        %v1837 = vadd.f32 0.0, %v1836
        %v1838 = vpop.f32.mrb[0].mxu0
        %1839 = vdwg.mxu0
        %1840 = vrot.lane.b32.xlu0 %v1505, 96
        %v1841 = vpop.permute.xlu0 %1840
        %1842 = vrot.lane.b32.xlu0 %v1505, 32
        %v1843 = vpop.permute.xlu0 %1842
        %v1844 = vsel %vm429, %v1841, 0
        %v1846 = vsel %vm429, %v1843, 0
        %1848 = vmatprep.subr.mxu0 0.0
        %1849 = vmatpush1.xpose.msra.mxu0 %v1846
        %1850 = vmatprep.subr.mxu0 0.0
        %1851 = vmatpush1.xpose.msra.mxu0 0.0
        %1852 = vmatprep.subr.mxu0 0.0
        %1853 = vmatpush1.xpose.msra.mxu0 0.0
        %1854 = vmatprep.subr.mxu0 0.0
        %1855 = vmatpush1.xpose.msra.mxu0 0.0
        %1856 = vmatprep.subr.mxu0 0.0
        %1857 = vmatpush1.xpose.msra.mxu0 0.0
        %1858 = vmatprep.subr.mxu0 0.0
        %1859 = vmatpush1.xpose.msra.mxu0 0.0
        %1860 = vmatprep.subr.mxu0 0.0
        %1861 = vmatpush1.xpose.msra.mxu0 0.0
        %1862 = vmatprep.subr.mxu0 0.0
        %1863 = vmatpush1.xpose.msra.mxu0 0.0
        %1864 = vmatprep.subr.mxu0 0.0
        %1865 = vmatpush1.xpose.msra.mxu0 0.0
        %1866 = vmatprep.subr.mxu0 0.0
        %1867 = vmatpush1.xpose.msra.mxu0 0.0
        %1868 = vmatprep.subr.mxu0 0.0
        %1869 = vmatpush1.xpose.msra.mxu0 0.0
        %1870 = vmatprep.subr.mxu0 0.0
        %1871 = vmatpush1.xpose.msra.mxu0 0.0
        %1872 = vmatprep.subr.mxu0 0.0
        %1873 = vmatpush1.xpose.msra.mxu0 0.0
        %1874 = vmatprep.subr.mxu0 0.0
        %1875 = vmatpush1.xpose.msra.mxu0 0.0
        %1876 = vmatprep.subr.mxu0 0.0
        %1877 = vmatpush1.xpose.msra.mxu0 0.0
        %1878 = vmatprep.subr.mxu0 0.0
        %1879 = vmatpush1.xpose.msra.mxu0 0.0
        %1880 = vmatprep.subr.mxu0 0.0
        %1881 = vmatpush1.xpose.msra.mxu0 0.0
        %1882 = vmatprep.subr.mxu0 0.0
        %1883 = vmatpush1.xpose.msra.mxu0 0.0
        %1884 = vmatprep.subr.mxu0 0.0
        %1885 = vmatpush1.xpose.msra.mxu0 0.0
        %1886 = vmatprep.subr.mxu0 0.0
        %1887 = vmatpush1.xpose.msra.mxu0 0.0
        %1888 = vmatprep.subr.mxu0 0.0
        %1889 = vmatpush1.xpose.msra.mxu0 0.0
        %1890 = vmatprep.subr.mxu0 0.0
        %1891 = vmatpush1.xpose.msra.mxu0 0.0
        %1892 = vmatprep.subr.mxu0 0.0
        %1893 = vmatpush1.xpose.msra.mxu0 0.0
        %1894 = vmatprep.subr.mxu0 0.0
        %1895 = vmatpush1.xpose.msra.mxu0 0.0
        %1896 = vmatprep.subr.mxu0 0.0
        %1897 = vmatpush1.xpose.msra.mxu0 0.0
        %1898 = vmatprep.subr.mxu0 0.0
        %1899 = vmatpush1.xpose.msra.mxu0 0.0
        %1900 = vmatprep.subr.mxu0 0.0
        %1901 = vmatpush1.xpose.msra.mxu0 0.0
        %1902 = vmatprep.subr.mxu0 0.0
        %1903 = vmatpush1.xpose.msra.mxu0 0.0
        %1904 = vmatprep.subr.mxu0 0.0
        %1905 = vmatpush1.xpose.msra.mxu0 0.0
        %1906 = vmatprep.subr.mxu0 0.0
        %1907 = vmatpush1.xpose.msra.mxu0 0.0
        %1908 = vmatprep.subr.mxu0 0.0
        %1909 = vmatpush1.xpose.msra.mxu0 0.0
        %1910 = vmatprep.subr.mxu0 0.0
        %1911 = vmatpush1.xpose.msra.mxu0 0.0
        %1912 = vmatprep.mubr.f32.mxu0 0.0
        %1913 = vmatmul.mubr.f32.gmra.mrb[0].mxu0 %v1844
        %v1914 = vpop.f32.mrb[0].mxu0
        %v1915 = vadd.f32 0.0, %v1914
        %v1916 = vpop.f32.mrb[0].mxu0
        %1917 = vdwg.mxu0
        %v1918 = vmul.f32 %v1915, 0.25
        %v1919 = vsel %vm505, %v1918, -inf
        %1920 = vmax.xlane.f32.xlu0 %v1919
        %v1921 = vpop.xlane.xlu0 %1920
        %v1922 = vsub.f32 %v1918, %v1921
        %v1923 = vmul.f32 %v1922, 1.442695
        %v1924 = vpow.pop %v1923
        %v1925 = vsel %vm505, %v1924, 0.0
        %1926 = vadd.xlane.f32.xlu0 %v1925
        %v1927 = vpop.xlane.xlu0 %1926
        %v1928 = vrcp.pop %v1927
        %v1929 = vmul.f32 %v1924, %v1928
        %1930 = vrot.lane.b32.xlu0 %v1507, 96
        %v1931 = vpop.permute.xlu0 %1930
        %v1934 = vsel %vm505, %v1929, 0
        %1936 = vmatprep.subr.mxu0 0.0
        %1937 = vmatpush1.msra.mxu0 %v1931
        %1938 = vmatprep.subr.mxu0 0.0
        %1939 = vmatpush1.msra.mxu0 0.0
        %1940 = vmatprep.subr.mxu0 0.0
        %1941 = vmatpush1.msra.mxu0 0.0
        %1942 = vmatprep.subr.mxu0 0.0
        %1943 = vmatpush1.msra.mxu0 0.0
        %1944 = vmatprep.subr.mxu0 0.0
        %1945 = vmatpush1.msra.mxu0 0.0
        %1946 = vmatprep.subr.mxu0 0.0
        %1947 = vmatpush1.msra.mxu0 0.0
        %1948 = vmatprep.subr.mxu0 0.0
        %1949 = vmatpush1.msra.mxu0 0.0
        %1950 = vmatprep.subr.mxu0 0.0
        %1951 = vmatpush1.msra.mxu0 0.0
        %1952 = vmatprep.subr.mxu0 0.0
        %1953 = vmatpush1.msra.mxu0 0.0
        %1954 = vmatprep.subr.mxu0 0.0
        %1955 = vmatpush1.msra.mxu0 0.0
        %1956 = vmatprep.subr.mxu0 0.0
        %1957 = vmatpush1.msra.mxu0 0.0
        %1958 = vmatprep.subr.mxu0 0.0
        %1959 = vmatpush1.msra.mxu0 0.0
        %1960 = vmatprep.subr.mxu0 0.0
        %1961 = vmatpush1.msra.mxu0 0.0
        %1962 = vmatprep.subr.mxu0 0.0
        %1963 = vmatpush1.msra.mxu0 0.0
        %1964 = vmatprep.subr.mxu0 0.0
        %1965 = vmatpush1.msra.mxu0 0.0
        %1966 = vmatprep.subr.mxu0 0.0
        %1967 = vmatpush1.msra.mxu0 0.0
        %1968 = vmatprep.subr.mxu0 0.0
        %1969 = vmatpush1.msra.mxu0 0.0
        %1970 = vmatprep.subr.mxu0 0.0
        %1971 = vmatpush1.msra.mxu0 0.0
        %1972 = vmatprep.subr.mxu0 0.0
        %1973 = vmatpush1.msra.mxu0 0.0
        %1974 = vmatprep.subr.mxu0 0.0
        %1975 = vmatpush1.msra.mxu0 0.0
        %1976 = vmatprep.subr.mxu0 0.0
        %1977 = vmatpush1.msra.mxu0 0.0
        %1978 = vmatprep.subr.mxu0 0.0
        %1979 = vmatpush1.msra.mxu0 0.0
        %1980 = vmatprep.subr.mxu0 0.0
        %1981 = vmatpush1.msra.mxu0 0.0
        %1982 = vmatprep.subr.mxu0 0.0
        %1983 = vmatpush1.msra.mxu0 0.0
        %1984 = vmatprep.subr.mxu0 0.0
        %1985 = vmatpush1.msra.mxu0 0.0
        %1986 = vmatprep.subr.mxu0 0.0
        %1987 = vmatpush1.msra.mxu0 0.0
        %1988 = vmatprep.subr.mxu0 0.0
        %1989 = vmatpush1.msra.mxu0 0.0
        %1990 = vmatprep.subr.mxu0 0.0
        %1991 = vmatpush1.msra.mxu0 0.0
        %1992 = vmatprep.subr.mxu0 0.0
        %1993 = vmatpush1.msra.mxu0 0.0
        %1994 = vmatprep.subr.mxu0 0.0
        %1995 = vmatpush1.msra.mxu0 0.0
        %1996 = vmatprep.subr.mxu0 0.0
        %1997 = vmatpush1.msra.mxu0 0.0
        %1998 = vmatprep.subr.mxu0 0.0
        %1999 = vmatpush1.msra.mxu0 0.0
        %2000 = vmatprep.mubr.f32.mxu0 0.0
        %2001 = vmatmul.mubr.f32.gmra.mrb[0].mxu0 %v1934
        %v2002 = vpop.f32.mrb[0].mxu0
        %v2003 = vadd.f32 0.0, %v2002
        %v2004 = vpop.f32.mrb[0].mxu0
        %2005 = vdwg.mxu0
        %2006 = vrot.lane.b32.xlu0 %v1505, 80
        %v2007 = vpop.permute.xlu0 %2006
        %2008 = vrot.lane.b32.xlu0 %v1505, 16
        %v2009 = vpop.permute.xlu0 %2008
        %v2010 = vsel %vm429, %v2007, 0
        %v2012 = vsel %vm429, %v2009, 0
        %2014 = vmatprep.subr.mxu0 0.0
        %2015 = vmatpush1.xpose.msra.mxu0 %v2012
        %2016 = vmatprep.subr.mxu0 0.0
        %2017 = vmatpush1.xpose.msra.mxu0 0.0
        %2018 = vmatprep.subr.mxu0 0.0
        %2019 = vmatpush1.xpose.msra.mxu0 0.0
        %2020 = vmatprep.subr.mxu0 0.0
        %2021 = vmatpush1.xpose.msra.mxu0 0.0
        %2022 = vmatprep.subr.mxu0 0.0
        %2023 = vmatpush1.xpose.msra.mxu0 0.0
        %2024 = vmatprep.subr.mxu0 0.0
        %2025 = vmatpush1.xpose.msra.mxu0 0.0
        %2026 = vmatprep.subr.mxu0 0.0
        %2027 = vmatpush1.xpose.msra.mxu0 0.0
        %2028 = vmatprep.subr.mxu0 0.0
        %2029 = vmatpush1.xpose.msra.mxu0 0.0
        %2030 = vmatprep.subr.mxu0 0.0
        %2031 = vmatpush1.xpose.msra.mxu0 0.0
        %2032 = vmatprep.subr.mxu0 0.0
        %2033 = vmatpush1.xpose.msra.mxu0 0.0
        %2034 = vmatprep.subr.mxu0 0.0
        %2035 = vmatpush1.xpose.msra.mxu0 0.0
        %2036 = vmatprep.subr.mxu0 0.0
        %2037 = vmatpush1.xpose.msra.mxu0 0.0
        %2038 = vmatprep.subr.mxu0 0.0
        %2039 = vmatpush1.xpose.msra.mxu0 0.0
        %2040 = vmatprep.subr.mxu0 0.0
        %2041 = vmatpush1.xpose.msra.mxu0 0.0
        %2042 = vmatprep.subr.mxu0 0.0
        %2043 = vmatpush1.xpose.msra.mxu0 0.0
        %2044 = vmatprep.subr.mxu0 0.0
        %2045 = vmatpush1.xpose.msra.mxu0 0.0
        %2046 = vmatprep.subr.mxu0 0.0
        %2047 = vmatpush1.xpose.msra.mxu0 0.0
        %2048 = vmatprep.subr.mxu0 0.0
        %2049 = vmatpush1.xpose.msra.mxu0 0.0
        %2050 = vmatprep.subr.mxu0 0.0
        %2051 = vmatpush1.xpose.msra.mxu0 0.0
        %2052 = vmatprep.subr.mxu0 0.0
        %2053 = vmatpush1.xpose.msra.mxu0 0.0
        %2054 = vmatprep.subr.mxu0 0.0
        %2055 = vmatpush1.xpose.msra.mxu0 0.0
        %2056 = vmatprep.subr.mxu0 0.0
        %2057 = vmatpush1.xpose.msra.mxu0 0.0
        %2058 = vmatprep.subr.mxu0 0.0
        %2059 = vmatpush1.xpose.msra.mxu0 0.0
        %2060 = vmatprep.subr.mxu0 0.0
        %2061 = vmatpush1.xpose.msra.mxu0 0.0
        %2062 = vmatprep.subr.mxu0 0.0
        %2063 = vmatpush1.xpose.msra.mxu0 0.0
        %2064 = vmatprep.subr.mxu0 0.0
        %2065 = vmatpush1.xpose.msra.mxu0 0.0
        %2066 = vmatprep.subr.mxu0 0.0
        %2067 = vmatpush1.xpose.msra.mxu0 0.0
        %2068 = vmatprep.subr.mxu0 0.0
        %2069 = vmatpush1.xpose.msra.mxu0 0.0
        %2070 = vmatprep.subr.mxu0 0.0
        %2071 = vmatpush1.xpose.msra.mxu0 0.0
        %2072 = vmatprep.subr.mxu0 0.0
        %2073 = vmatpush1.xpose.msra.mxu0 0.0
        %2074 = vmatprep.subr.mxu0 0.0
        %2075 = vmatpush1.xpose.msra.mxu0 0.0
        %2076 = vmatprep.subr.mxu0 0.0
        %2077 = vmatpush1.xpose.msra.mxu0 0.0
        %2078 = vmatprep.mubr.f32.mxu0 0.0
        %2079 = vmatmul.mubr.f32.gmra.mrb[0].mxu0 %v2010
        %v2080 = vpop.f32.mrb[0].mxu0
        %v2081 = vadd.f32 0.0, %v2080
        %v2082 = vpop.f32.mrb[0].mxu0
        %2083 = vdwg.mxu0
        %v2084 = vmul.f32 %v2081, 0.25
        %v2085 = vsel %vm505, %v2084, -inf
        %2086 = vmax.xlane.f32.xlu0 %v2085
        %v2087 = vpop.xlane.xlu0 %2086
        %v2088 = vsub.f32 %v2084, %v2087
        %v2089 = vmul.f32 %v2088, 1.442695
        %v2090 = vpow.pop %v2089
        %v2091 = vsel %vm505, %v2090, 0.0
        %2092 = vadd.xlane.f32.xlu0 %v2091
        %v2093 = vpop.xlane.xlu0 %2092
        %v2094 = vrcp.pop %v2093
        %v2095 = vmul.f32 %v2090, %v2094
        %2096 = vrot.lane.b32.xlu0 %v1507, 80
        %v2097 = vpop.permute.xlu0 %2096
        %v2100 = vsel %vm505, %v2095, 0
        %2102 = vmatprep.subr.mxu0 0.0
        %2103 = vmatpush1.msra.mxu0 %v2097
        %2104 = vmatprep.subr.mxu0 0.0
        %2105 = vmatpush1.msra.mxu0 0.0
        %2106 = vmatprep.subr.mxu0 0.0
        %2107 = vmatpush1.msra.mxu0 0.0
        %2108 = vmatprep.subr.mxu0 0.0
        %2109 = vmatpush1.msra.mxu0 0.0
        %2110 = vmatprep.subr.mxu0 0.0
        %2111 = vmatpush1.msra.mxu0 0.0
        %2112 = vmatprep.subr.mxu0 0.0
        %2113 = vmatpush1.msra.mxu0 0.0
        %2114 = vmatprep.subr.mxu0 0.0
        %2115 = vmatpush1.msra.mxu0 0.0
        %2116 = vmatprep.subr.mxu0 0.0
        %2117 = vmatpush1.msra.mxu0 0.0
        %2118 = vmatprep.subr.mxu0 0.0
        %2119 = vmatpush1.msra.mxu0 0.0
        %2120 = vmatprep.subr.mxu0 0.0
        %2121 = vmatpush1.msra.mxu0 0.0
        %2122 = vmatprep.subr.mxu0 0.0
        %2123 = vmatpush1.msra.mxu0 0.0
        %2124 = vmatprep.subr.mxu0 0.0
        %2125 = vmatpush1.msra.mxu0 0.0
        %2126 = vmatprep.subr.mxu0 0.0
        %2127 = vmatpush1.msra.mxu0 0.0
        %2128 = vmatprep.subr.mxu0 0.0
        %2129 = vmatpush1.msra.mxu0 0.0
        %2130 = vmatprep.subr.mxu0 0.0
        %2131 = vmatpush1.msra.mxu0 0.0
        %2132 = vmatprep.subr.mxu0 0.0
        %2133 = vmatpush1.msra.mxu0 0.0
        %2134 = vmatprep.subr.mxu0 0.0
        %2135 = vmatpush1.msra.mxu0 0.0
        %2136 = vmatprep.subr.mxu0 0.0
        %2137 = vmatpush1.msra.mxu0 0.0
        %2138 = vmatprep.subr.mxu0 0.0
        %2139 = vmatpush1.msra.mxu0 0.0
        %2140 = vmatprep.subr.mxu0 0.0
        %2141 = vmatpush1.msra.mxu0 0.0
        %2142 = vmatprep.subr.mxu0 0.0
        %2143 = vmatpush1.msra.mxu0 0.0
        %2144 = vmatprep.subr.mxu0 0.0
        %2145 = vmatpush1.msra.mxu0 0.0
        %2146 = vmatprep.subr.mxu0 0.0
        %2147 = vmatpush1.msra.mxu0 0.0
        %2148 = vmatprep.subr.mxu0 0.0
        %2149 = vmatpush1.msra.mxu0 0.0
        %2150 = vmatprep.subr.mxu0 0.0
        %2151 = vmatpush1.msra.mxu0 0.0
        %2152 = vmatprep.subr.mxu0 0.0
        %2153 = vmatpush1.msra.mxu0 0.0
        %2154 = vmatprep.subr.mxu0 0.0
        %2155 = vmatpush1.msra.mxu0 0.0
        %2156 = vmatprep.subr.mxu0 0.0
        %2157 = vmatpush1.msra.mxu0 0.0
        %2158 = vmatprep.subr.mxu0 0.0
        %2159 = vmatpush1.msra.mxu0 0.0
        %2160 = vmatprep.subr.mxu0 0.0
        %2161 = vmatpush1.msra.mxu0 0.0
        %2162 = vmatprep.subr.mxu0 0.0
        %2163 = vmatpush1.msra.mxu0 0.0
        %2164 = vmatprep.subr.mxu0 0.0
        %2165 = vmatpush1.msra.mxu0 0.0
        %2166 = vmatprep.mubr.f32.mxu0 0.0
        %2167 = vmatmul.mubr.f32.gmra.mrb[0].mxu0 %v2100
        %v2168 = vpop.f32.mrb[0].mxu0
        %v2169 = vadd.f32 0.0, %v2168
        %v2170 = vpop.f32.mrb[0].mxu0
        %2171 = vdwg.mxu0
        %2173 = vrot.lane.b32.xlu0 %v1837, 16
        %v2174 = vpop.permute.xlu0 %2173
        %2177 = vrot.lane.b32.xlu0 %v2003, 32
        %v2178 = vpop.permute.xlu0 %2177
        %2181 = vrot.lane.b32.xlu0 %v2169, 48
        %v2182 = vpop.permute.xlu0 %2181
        %v2184 = vsel %vm429, %v1670, %v2174
        %v2185 = vsel %vm1102, %v2184, %v2178
        %v2186 = vsel %vm1104, %v2185, %v2182
        %v2187 = vpack.c.bf16 %v2186, %v2186
        %v2188 = vlaneseq
        %v2189 = vshrl.u32 %v2188, 7
        %v2190 = vsub.s32 1, %v2189
        %v2191 = vrot.slane %v1416, %v2190
        %2192 = vrot.lane.b32.xlu0 %v1452, 64
        %v2193 = vpop.permute.xlu0 %2192
        %2194 = vrot.lane.b32.xlu0 %v1454, 64
        %v2195 = vpop.permute.xlu0 %2194
        %2196 = vrot.lane.b32.xlu0 %v1456, 64
        %v2197 = vpop.permute.xlu0 %2196
        %2198 = vrot.lane.b32.xlu0 %v1458, 64
        %v2199 = vpop.permute.xlu0 %2198
        %v2205 = vsel %vm381, %v2187, 0
        %2207 = vmatprep.subr.bf16.mxu0 0
        %2208 = vmatpush1.bf16.msra.mxu0 %v2193
        %2209 = vmatprep.subr.bf16.mxu0 0
        %2210 = vmatpush1.bf16.msra.mxu0 %v2195
        %2211 = vmatprep.subr.bf16.mxu0 0
        %2212 = vmatpush1.bf16.msra.mxu0 %v2197
        %2213 = vmatprep.subr.bf16.mxu0 0
        %2214 = vmatpush1.bf16.msra.mxu0 %v2199
        %2215 = vmatprep.subr.bf16.mxu0 0
        %2216 = vmatpush1.bf16.msra.mxu0 0
        %2217 = vmatprep.subr.bf16.mxu0 0
        %2218 = vmatpush1.bf16.msra.mxu0 0
        %2219 = vmatprep.subr.bf16.mxu0 0
        %2220 = vmatpush1.bf16.msra.mxu0 0
        %2221 = vmatprep.subr.bf16.mxu0 0
        %2222 = vmatpush1.bf16.msra.mxu0 0
        %2223 = vmatprep.subr.bf16.mxu0 0
        %2224 = vmatpush1.bf16.msra.mxu0 0
        %2225 = vmatprep.subr.bf16.mxu0 0
        %2226 = vmatpush1.bf16.msra.mxu0 0
        %2227 = vmatprep.subr.bf16.mxu0 0
        %2228 = vmatpush1.bf16.msra.mxu0 0
        %2229 = vmatprep.subr.bf16.mxu0 0
        %2230 = vmatpush1.bf16.msra.mxu0 0
        %2231 = vmatprep.subr.bf16.mxu0 0
        %2232 = vmatpush1.bf16.msra.mxu0 0
        %2233 = vmatprep.subr.bf16.mxu0 0
        %2234 = vmatpush1.bf16.msra.mxu0 0
        %2235 = vmatprep.subr.bf16.mxu0 0
        %2236 = vmatpush1.bf16.msra.mxu0 0
        %2237 = vmatprep.subr.bf16.mxu0 0
        %2238 = vmatpush1.bf16.msra.mxu0 0
        %2239 = vmatprep.mubr.bf16.mxu0 0
        %2240 = vmatmul.mubr.bf16.gmra.mrb[0].mxu0 %v2205
        %v2241 = vpop.f32.mrb[0].mxu0
        %v2242 = vadd.f32 %v2191, %v2241
        %v2243 = vpop.f32.mrb[0].mxu0
        %v2244 = vpop.f32.mrb[0].mxu0
        %v2245 = vpop.f32.mrb[0].mxu0
        %2246 = vdwg.mxu0
        %v2247 = vadd.f32 %v1380, %v2242
        %v2248 = vsel %vm381, %v2247, 0.0
        %2249 = vadd.xlane.f32.xlu0 %v2248
        %v2250 = vpop.xlane.xlu0 %2249
        %v2251 = vmul.f32 %v2250, %v1170
        %v2252 = vsub.f32 %v2247, %v2251
        %v2253 = vmul.f32 %v2252, %v2252
        %v2254 = vsel %vm381, %v2253, 0.0
        %2255 = vadd.xlane.f32.xlu0 %v2254
        %v2256 = vpop.xlane.xlu0 %2255
        %v2257 = vmul.f32 %v2256, %v1170
        %v2258 = vadd.f32 %v2257, 1e-05
        %v2259 = vrsqrt.pop %v2258
        %v2260 = vmul.f32 %v2252, %v2259
        %v2261 = vlaneseq
        %v2262 = vshrl.u32 %v2261, 7
        %v2263 = vsub.s32 4, %v2262
        %v2264 = vrot.slane %v1416, %v2263
        %v2265 = vmul.f32 %v2260, %v2264
        %v2266 = vlaneseq
        %v2267 = vshrl.u32 %v2266, 7
        %v2268 = vsub.s32 5, %v2267
        %v2269 = vrot.slane %v1416, %v2268
        %v2270 = vadd.f32 %v2265, %v2269
        %v2271 = vpack.c.bf16 %v2270, %v2270
        %v2272 = vlaneseq
        %v2273 = vshrl.u32 %v2272, 7
        %v2274 = vsub.s32 2, %v2273
        %v2275 = vrot.slane %v1416, %v2274
        %v2284 = vunpack.c.l.b16 %v1383
        %v2285 = vunpack.c.l.b16 %v1385
        %v2286 = vunpack.c.l.b16 %v1387
        %v2287 = vunpack.c.l.b16 %v1389
        %v2288 = vunpack.c.l.b16 %v1391
        %v2289 = vunpack.c.l.b16 %v1393
        %v2290 = vunpack.c.l.b16 %v1395
        %v2291 = vunpack.c.l.b16 %v1397
        %v2292 = vpack.c.b16 %v2285, %v2284
        %v2293 = vpack.c.b16 %v2287, %v2286
        %v2294 = vpack.c.b16 %v2289, %v2288
        %v2295 = vpack.c.b16 %v2291, %v2290
        %v2301 = vsel %vm381, %v2271, 0
        %2303 = vmatprep.subr.bf16.mxu0 0
        %2304 = vmatpush1.bf16.msra.mxu0 %v2292
        %2305 = vmatprep.subr.bf16.mxu0 0
        %2306 = vmatpush1.bf16.msra.mxu0 %v2293
        %2307 = vmatprep.subr.bf16.mxu0 0
        %2308 = vmatpush1.bf16.msra.mxu0 %v2294
        %2309 = vmatprep.subr.bf16.mxu0 0
        %2310 = vmatpush1.bf16.msra.mxu0 %v2295
        %2311 = vmatprep.subr.bf16.mxu0 0
        %2312 = vmatpush1.bf16.msra.mxu0 0
        %2313 = vmatprep.subr.bf16.mxu0 0
        %2314 = vmatpush1.bf16.msra.mxu0 0
        %2315 = vmatprep.subr.bf16.mxu0 0
        %2316 = vmatpush1.bf16.msra.mxu0 0
        %2317 = vmatprep.subr.bf16.mxu0 0
        %2318 = vmatpush1.bf16.msra.mxu0 0
        %2319 = vmatprep.subr.bf16.mxu0 0
        %2320 = vmatpush1.bf16.msra.mxu0 0
        %2321 = vmatprep.subr.bf16.mxu0 0
        %2322 = vmatpush1.bf16.msra.mxu0 0
        %2323 = vmatprep.subr.bf16.mxu0 0
        %2324 = vmatpush1.bf16.msra.mxu0 0
        %2325 = vmatprep.subr.bf16.mxu0 0
        %2326 = vmatpush1.bf16.msra.mxu0 0
        %2327 = vmatprep.subr.bf16.mxu0 0
        %2328 = vmatpush1.bf16.msra.mxu0 0
        %2329 = vmatprep.subr.bf16.mxu0 0
        %2330 = vmatpush1.bf16.msra.mxu0 0
        %2331 = vmatprep.subr.bf16.mxu0 0
        %2332 = vmatpush1.bf16.msra.mxu0 0
        %2333 = vmatprep.subr.bf16.mxu0 0
        %2334 = vmatpush1.bf16.msra.mxu0 0
        %2335 = vmatprep.mubr.bf16.mxu0 0
        %2336 = vmatmul.mubr.bf16.gmra.mrb[0].mxu0 %v2301
        %v2337 = vpop.f32.mrb[0].mxu0
        %v2338 = vadd.f32 %v2275, %v2337
        %v2339 = vpop.f32.mrb[0].mxu0
        %v2340 = vpop.f32.mrb[0].mxu0
        %v2341 = vpop.f32.mrb[0].mxu0
        %2342 = vdwg.mxu0
        %v2343 = vmax.f32 %v2338, 0.0
        %v2344 = vpack.c.bf16 %v2343, %v2343
        %v2345 = vlaneseq
        %v2346 = vshrl.u32 %v2345, 7
        %v2347 = vsub.s32 3, %v2346
        %v2348 = vrot.slane %v1416, %v2347
        %v2365 = vunpack.c.l.b16 %v1399
        %v2366 = vunpack.c.l.b16 %v1400
        %v2367 = vunpack.c.l.b16 %v1401
        %v2368 = vunpack.c.l.b16 %v1402
        %v2369 = vunpack.c.l.b16 %v1403
        %v2370 = vunpack.c.l.b16 %v1404
        %v2371 = vunpack.c.l.b16 %v1405
        %v2372 = vunpack.c.l.b16 %v1406
        %v2373 = vunpack.c.l.b16 %v1407
        %v2374 = vunpack.c.l.b16 %v1408
        %v2375 = vunpack.c.l.b16 %v1409
        %v2376 = vunpack.c.l.b16 %v1410
        %v2377 = vunpack.c.l.b16 %v1411
        %v2378 = vunpack.c.l.b16 %v1412
        %v2379 = vunpack.c.l.b16 %v1413
        %v2380 = vunpack.c.l.b16 %v1414
        %v2381 = vpack.c.b16 %v2366, %v2365
        %v2382 = vpack.c.b16 %v2368, %v2367
        %v2383 = vpack.c.b16 %v2370, %v2369
        %v2384 = vpack.c.b16 %v2372, %v2371
        %v2385 = vpack.c.b16 %v2374, %v2373
        %v2386 = vpack.c.b16 %v2376, %v2375
        %v2387 = vpack.c.b16 %v2378, %v2377
        %v2388 = vpack.c.b16 %v2380, %v2379
        %2397 = vmatprep.subr.bf16.mxu0 0
        %2398 = vmatpush1.bf16.msra.mxu0 %v2381
        %2399 = vmatprep.subr.bf16.mxu0 0
        %2400 = vmatpush1.bf16.msra.mxu0 %v2382
        %2401 = vmatprep.subr.bf16.mxu0 0
        %2402 = vmatpush1.bf16.msra.mxu0 %v2383
        %2403 = vmatprep.subr.bf16.mxu0 0
        %2404 = vmatpush1.bf16.msra.mxu0 %v2384
        %2405 = vmatprep.subr.bf16.mxu0 0
        %2406 = vmatpush1.bf16.msra.mxu0 %v2385
        %2407 = vmatprep.subr.bf16.mxu0 0
        %2408 = vmatpush1.bf16.msra.mxu0 %v2386
        %2409 = vmatprep.subr.bf16.mxu0 0
        %2410 = vmatpush1.bf16.msra.mxu0 %v2387
        %2411 = vmatprep.subr.bf16.mxu0 0
        %2412 = vmatpush1.bf16.msra.mxu0 %v2388
        %2413 = vmatprep.subr.bf16.mxu0 0
        %2414 = vmatpush1.bf16.msra.mxu0 0
        %2415 = vmatprep.subr.bf16.mxu0 0
        %2416 = vmatpush1.bf16.msra.mxu0 0
        %2417 = vmatprep.subr.bf16.mxu0 0
        %2418 = vmatpush1.bf16.msra.mxu0 0
        %2419 = vmatprep.subr.bf16.mxu0 0
        %2420 = vmatpush1.bf16.msra.mxu0 0
        %2421 = vmatprep.subr.bf16.mxu0 0
        %2422 = vmatpush1.bf16.msra.mxu0 0
        %2423 = vmatprep.subr.bf16.mxu0 0
        %2424 = vmatpush1.bf16.msra.mxu0 0
        %2425 = vmatprep.subr.bf16.mxu0 0
        %2426 = vmatpush1.bf16.msra.mxu0 0
        %2427 = vmatprep.subr.bf16.mxu0 0
        %2428 = vmatpush1.bf16.msra.mxu0 0
        %2429 = vmatprep.mubr.bf16.mxu0 0
        %2430 = vmatmul.mubr.bf16.gmra.mrb[0].mxu0 %v2344
        %v2431 = vpop.f32.mrb[0].mxu0
        %v2432 = vadd.f32 %v2348, %v2431
        %v2433 = vpop.f32.mrb[0].mxu0
        %v2434 = vpop.f32.mrb[0].mxu0
        %v2435 = vpop.f32.mrb[0].mxu0
        %2436 = vdwg.mxu0
        %v2437 = vadd.f32 %v2270, %v2432
        %v2438 = vsel %vm381, %v2437, 0.0
        %2439 = vadd.xlane.f32.xlu0 %v2438
        %v2440 = vpop.xlane.xlu0 %2439
        %v2441 = vmul.f32 %v2440, %v1170
        %v2442 = vsub.f32 %v2437, %v2441
        %v2443 = vmul.f32 %v2442, %v2442
        %v2444 = vsel %vm381, %v2443, 0.0
        %2445 = vadd.xlane.f32.xlu0 %v2444
        %v2446 = vpop.xlane.xlu0 %2445
        %v2447 = vmul.f32 %v2446, %v1170
        %v2448 = vadd.f32 %v2447, 1e-05
        %v2449 = vrsqrt.pop %v2448
        %v2450 = vmul.f32 %v2442, %v2449
        %v2451 = vlaneseq
        %v2452 = vshrl.u32 %v2451, 7
        %v2453 = vsub.s32 6, %v2452
        %v2454 = vrot.slane %v1416, %v2453
        %v2455 = vmul.f32 %v2450, %v2454
        %v2456 = vlaneseq
        %v2457 = vshrl.u32 %v2456, 7
        %v2458 = vsub.s32 7, %v2457
        %v2459 = vrot.slane %v1416, %v2458
        %v2460 = vadd.f32 %v2455, %v2459
        %v2461 = vpack.c.bf16 %v2460, %v2460
        %v2462 = vld [vmem:[#allocation7] sm:$0xf]
        %v2463 = vld [vmem:[#allocation7 + $0x4] sm:$0xf]
        %v2464 = vld [vmem:[#allocation7 + $0x8] sm:$0xf]
        %v2465 = vld [vmem:[#allocation7 + $0xc] sm:$0xf]
        %v2466 = vld [vmem:[#allocation7 + $0x10] sm:$0xf]
        %v2467 = vld [vmem:[#allocation7 + $0x14] sm:$0xf]
        %v2468 = vld [vmem:[#allocation7 + $0x18] sm:$0xf]
        %v2469 = vld [vmem:[#allocation7 + $0x1c] sm:$0xf]
        %v2470 = vld [vmem:[%s5] sm:$0x1]
        %v2472 = vlaneseq
        %v2473 = vshrl.u32 %v2472, 7
        %v2474 = vsub.s32 0, %v2473
        %v2475 = vrot.slane %v2470, %v2474
        %v2485 = vunpack.c.l.b16 %v2462
        %v2486 = vunpack.c.l.b16 %v2463
        %v2487 = vunpack.c.l.b16 %v2464
        %v2488 = vunpack.c.l.b16 %v2465
        %v2489 = vunpack.c.l.b16 %v2466
        %v2490 = vunpack.c.l.b16 %v2467
        %v2491 = vunpack.c.l.b16 %v2468
        %v2492 = vunpack.c.l.b16 %v2469
        %v2493 = vpack.c.b16 %v2486, %v2485
        %v2494 = vpack.c.b16 %v2488, %v2487
        %v2495 = vpack.c.b16 %v2490, %v2489
        %v2496 = vpack.c.b16 %v2492, %v2491
        %v2502 = vsel %vm381, %v2461, 0
        %2504 = vmatprep.subr.bf16.mxu0 0
        %2505 = vmatpush1.bf16.msra.mxu0 %v2493
        %2506 = vmatprep.subr.bf16.mxu0 0
        %2507 = vmatpush1.bf16.msra.mxu0 %v2494
        %2508 = vmatprep.subr.bf16.mxu0 0
        %2509 = vmatpush1.bf16.msra.mxu0 %v2495
        %2510 = vmatprep.subr.bf16.mxu0 0
        %2511 = vmatpush1.bf16.msra.mxu0 %v2496
        %2512 = vmatprep.subr.bf16.mxu0 0
        %2513 = vmatpush1.bf16.msra.mxu0 0
        %2514 = vmatprep.subr.bf16.mxu0 0
        %2515 = vmatpush1.bf16.msra.mxu0 0
        %2516 = vmatprep.subr.bf16.mxu0 0
        %2517 = vmatpush1.bf16.msra.mxu0 0
        %2518 = vmatprep.subr.bf16.mxu0 0
        %2519 = vmatpush1.bf16.msra.mxu0 0
        %2520 = vmatprep.subr.bf16.mxu0 0
        %2521 = vmatpush1.bf16.msra.mxu0 0
        %2522 = vmatprep.subr.bf16.mxu0 0
        %2523 = vmatpush1.bf16.msra.mxu0 0
        %2524 = vmatprep.subr.bf16.mxu0 0
        %2525 = vmatpush1.bf16.msra.mxu0 0
        %2526 = vmatprep.subr.bf16.mxu0 0
        %2527 = vmatpush1.bf16.msra.mxu0 0
        %2528 = vmatprep.subr.bf16.mxu0 0
        %2529 = vmatpush1.bf16.msra.mxu0 0
        %2530 = vmatprep.subr.bf16.mxu0 0
        %2531 = vmatpush1.bf16.msra.mxu0 0
        %2532 = vmatprep.subr.bf16.mxu0 0
        %2533 = vmatpush1.bf16.msra.mxu0 0
        %2534 = vmatprep.subr.bf16.mxu0 0
        %2535 = vmatpush1.bf16.msra.mxu0 0
        %2536 = vmatprep.mubr.bf16.mxu0 0
        %2537 = vmatmul.mubr.bf16.gmra.mrb[0].mxu0 %v2502
        %v2538 = vpop.f32.mrb[0].mxu0
        %v2539 = vadd.f32 %v2475, %v2538
        %v2540 = vpop.f32.mrb[0].mxu0
        %v2541 = vpop.f32.mrb[0].mxu0
        %v2542 = vpop.f32.mrb[0].mxu0
        %2543 = vdwg.mxu0
        %2544 = vst [vmem:[%s295] sm:$0xff] %v2539
        %s2545 = sand.u32 %s163, 1
        %s2546 = scalar_lea.sflag [#allocation4], %s2545
        %s2547 = sand.u32 %s163, 1
        %s2548 = smul.addr %s2547, 8
        %s2549 = scalar_lea.vmem [#allocation8], %s2548
        // Predicated region
        $region57: #{tpu_custom_call.1} parent=43 // pred_check
          %p2550 = pneg %p173
        $region58: #{tpu_custom_call.1} parent=43 // pred_check_branch
          %2552 = sbr.rel (%p2550) target = $region60
        $region59: #{tpu_custom_call.1} parent=43 // pred_region
          %s2554 = ssub.s32 128, 128
          %2555 = vsyncadd %s2546, %s2554
          %s2556 = smul.addr %s24, 128
          %s2557 = scalar_lea.hbm %s6, %s2556
          %s2559 = sshll.u32 %s2549, 4
          %s2560 = int_to_ptr.vmem [resolvable:$true] %s2559
          %2562 = dma.vmem_to_hbm [thread:$0]  %s2560, 128, %s2557, %s2546
        $region60: #{tpu_custom_call.1} parent=43 // pred_fallthru
          _
      $region44: #{tpu_custom_call.1} parent=5 // pred_fallthru
        _
      %p2563 = scmp.le.s32.totalorder 2, %s19
      // Predicated region
      $region61: #{tpu_custom_call.1} parent=5 // pred_check
        %p2564 = pneg %p2563
      $region62: #{tpu_custom_call.1} parent=5 // pred_check_branch
        %2566 = sbr.rel (%p2564) target = $region64
      $region63: #{tpu_custom_call.1} parent=5 // pred_region
        %s2567 = ssub.s32 %s19, 2
        // Predicated region
        $region65: #{tpu_custom_call.1} parent=63 // pred_check
          %p2568 = pneg %p179
        $region66: #{tpu_custom_call.1} parent=63 // pred_check_branch
          %2570 = sbr.rel (%p2568) target = $region68
        $region67: #{tpu_custom_call.1} parent=63 // pred_region
          %s2571 = sand.u32 %s164, 1
          %s2572 = scalar_lea.sflag [#allocation4], %s2571
          %s2573 = sand.u32 %s164, 1
          %s2574 = smul.addr %s2573, 8
          %s2575 = scalar_lea.vmem [#allocation8], %s2574
          %2576 = dma.done %s2572, 128
        $region68: #{tpu_custom_call.1} parent=63 // pred_fallthru
          _
      $region64: #{tpu_custom_call.1} parent=5 // pred_fallthru
        _
    $region6: #{tpu_custom_call.1} parent=1 // loop_footer
      %s23 = sadd.s32 1, %s19
    $region7: #{tpu_custom_call.1} parent=1 // loop_footer_branch
      %18 = sbr.rel target = $region3
    $region8: #{tpu_custom_call.1} parent=1 // loop_exit
      _
    %2577 = vsyncpa [#allocation3], 1
    %s2578 = scalar_lea.sflag [#allocation3], 1
    %2579 = vsyncpa %s2578, 1
    %2580 = vsyncpa [#allocation6], 1
    %2581 = vsyncpa [#allocation4], 1
    %s2582 = scalar_lea.sflag [#allocation4], 1
    %2583 = vsyncpa %s2582, 1

</llo_original>
